<compile_context>
chip_gen: v7x
topology: tpu7x:2x2x1
jax: 0.10.0
libtpu: 0.0.40
codegen_flags: <defaults>
</compile_context>

<pallas_src>
import functools
import math

import jax
import jax.numpy as jnp
from jax import lax
from jax.experimental import pallas as pl
from jax.experimental.pallas import tpu as pltpu

_MIB = 1024 * 1024


def encoder_layer_kernel(
    x_ref,                        # (BB, S, D) activation block
    ln1_g_ref, ln1_b_ref,         # (1, D) f32
    wqkv_ref, bqkv_ref,           # (D, 3D) cdt (pre-transposed, Q pre-scaled), (1, 3D) f32
    wo_ref, bo_ref,               # (D, D) cdt (pre-transposed), (1, D) f32
    ln2_g_ref, ln2_b_ref,         # (1, D) f32
    w1_ref, b1_ref,               # (D, F) cdt (pre-transposed), (1, F) f32
    w2_ref, b2_ref,               # (F, D) cdt (pre-transposed), (1, D) f32
    out_ref,                      # (BB, S, D)
    qkv_buf,                      # (BB, S, 3D) cdt VMEM scratch
    ffn_in_buf,                   # (BB, S, D) cdt VMEM scratch (LN2 output)
    *, n_head, ffn_chunk, approx_recip,
):
    BB, S, D = x_ref.shape
    H = n_head
    Dh = D // H
    R = BB * S
    F = w1_ref.shape[1]
    cdt = wqkv_ref.dtype          # matmul compute dtype (bf16 or f32)
    eps = 1e-5

    def layer_norm(z, g_ref, b_ref):
        mu = jnp.mean(z, axis=-1, keepdims=True)
        var = jnp.mean(jnp.square(z - mu), axis=-1, keepdims=True)
        return (z - mu) * lax.rsqrt(var + eps) * g_ref[...] + b_ref[...]

    # ---- LayerNorm 1 + fused QKV projection: one (R, D) x (D, 3D) matmul ----
    x = x_ref[...].reshape(R, D).astype(jnp.float32)
    src1 = layer_norm(x, ln1_g_ref, ln1_b_ref)
    qkv = jnp.dot(src1.astype(cdt), wqkv_ref[...],
                  preferred_element_type=jnp.float32) + bqkv_ref[...]
    # Park QKV in VMEM in the compute dtype; the head loop slices the *ref*.
    qkv_buf[...] = qkv.reshape(BB, S, 3 * D).astype(cdt)

    # ---- self-attention, output projection fused into the head loop ----
    # (1/sqrt(Dh) is already folded into the Q projection weights/bias.)
    def batch_body(b, carry):
        acc = jnp.zeros((S, D), jnp.float32)       # per-batch lane-dense accumulator
        for h in range(H):                          # small static unroll over heads
            c0 = h * Dh
            q_bh = qkv_buf[b, :, c0:c0 + Dh]
            k_bh = qkv_buf[b, :, D + c0:D + c0 + Dh]
            v_bh = qkv_buf[b, :, 2 * D + c0:2 * D + c0 + Dh]

            s = lax.dot_general(q_bh, k_bh, (((1,), (1,)), ((), ())),
                                preferred_element_type=jnp.float32)   # (S, S)
            s = s - jnp.max(s, axis=-1, keepdims=True)
            p = jnp.exp(s)
            denom = jnp.sum(p, axis=-1, keepdims=True)
            if approx_recip:
                p = p * pl.reciprocal(denom, approx=True)   # EUP slot, bf16 path only
            else:
                p = p / denom                               # exact divide on f32 path
            o_bh = jnp.dot(p.astype(cdt), v_bh,
                           preferred_element_type=jnp.float32)        # (S, Dh)
            # fused Wo: (S, Dh) x (Dh, D) contribution, lane-dense accumulate
            acc = acc + jnp.dot(o_bh.astype(cdt), wo_ref[c0:c0 + Dh, :],
                                preferred_element_type=jnp.float32)
        # residual: re-read x from VMEM here instead of keeping it live above.
        src2_b = acc + bo_ref[...] + x_ref[b].astype(jnp.float32)
        ffn_in_buf[b] = layer_norm(src2_b, ln2_g_ref, ln2_b_ref).astype(cdt)
        return carry

    lax.fori_loop(0, BB, batch_body, 0)

    # ---- feed-forward (relu), chunked over dim_feedforward ----
    src3 = ffn_in_buf[...].reshape(R, D)
    y = None
    for f0 in range(0, F, ffn_chunk):
        f1 = min(F, f0 + ffn_chunk)
        h1 = jnp.dot(src3, w1_ref[:, f0:f1],
                     preferred_element_type=jnp.float32) + b1_ref[:, f0:f1]
        h1 = jnp.maximum(h1, 0.0)
        part = jnp.dot(h1.astype(cdt), w2_ref[f0:f1, :],
                       preferred_element_type=jnp.float32)
        y = part if y is None else y + part
    y = y + b2_ref[...]

    # NOTE: no final residual add (the torch `src3 + src2` result is discarded).
    out_ref[...] = y.reshape(BB, S, D).astype(out_ref.dtype)


def _prep_weights(params, d_model, n_head, compute_dtype):
    """Pre-transpose weights to lane-dense (in, out) layout, fuse QKV, fold the
    1/sqrt(Dh) softmax scale into the Q projection, pre-cast matmul weights."""
    D = d_model
    scale = 1.0 / math.sqrt(D // n_head)
    wqkv = params["wqkv"]                        # (3D, D): rows [Wq; Wk; Wv]
    bqkv = params["bqkv"]                        # (1, 3D)
    wqkv_scaled = jnp.concatenate([wqkv[0:D] * scale, wqkv[D:]], axis=0)
    wqkv_t = jnp.transpose(wqkv_scaled).astype(compute_dtype)        # (D, 3D)
    bqkv_s = jnp.concatenate([bqkv[:, 0:D] * scale, bqkv[:, D:]], axis=1)
    return [
        params["ln1_g"], params["ln1_b"],
        wqkv_t, bqkv_s,
        jnp.transpose(params["wo"]).astype(compute_dtype), params["bo"],
        params["ln2_g"], params["ln2_b"],
        jnp.transpose(params["w1"]).astype(compute_dtype), params["b1"],
        jnp.transpose(params["w2"]).astype(compute_dtype), params["b2"],
    ]


def _vmem_capacity_bytes():
    try:
        return int(pltpu.get_tpu_info().vmem_capacity_bytes)
    except Exception:
        return None


def encoder_layer_pallas(x, params, *, n_head, compute_dtype=jnp.bfloat16,
                         batch_first=False, target_rows=None,
                         min_grid_steps=2, ffn_chunk=512, out_dtype=None):
    """x: (S, B, D) like the PyTorch module, or (B, S, D) if batch_first=True."""
    x_bsd = x if batch_first else jnp.transpose(x, (1, 0, 2))
    B, S, D = x_bsd.shape
    F = params["w1"].shape[0]
    assert D % n_head == 0, "d_model must be divisible by n_head"
    out_dtype = x_bsd.dtype if out_dtype is None else out_dtype

    # Generation-aware defaults: v7x has 64 MiB VMEM / 2 TCs, v5e/v6e 128 MiB.
    vmem_cap = _vmem_capacity_bytes()
    small_vmem = (vmem_cap is None) or (vmem_cap <= 64 * _MIB)
    if target_rows is None:
        target_rows = 128 if small_vmem else 384

    plist = _prep_weights(params, D, n_head, compute_dtype)

    # Batch-block selection: MXU-friendly M, but keep >= min_grid_steps grid
    # iterations so both v7x TensorCores get work and pipelining exists.
    max_bb = min(B, max(1, target_rows // S))
    if B >= min_grid_steps:
        max_bb = max(1, min(max_bb, B // min_grid_steps))
    bb = 1
    for cand in range(max_bb, 0, -1):
        if B % cand == 0:
            bb = cand
            break
    grid = (B // bb,)

    cdt_size = jnp.dtype(compute_dtype).itemsize
    est = (2 * 2 * bb * S * D * x_bsd.dtype.itemsize            # in/out blocks, 2x buffered
           + 2 * sum(int(p.size) * p.dtype.itemsize for p in plist)
           + bb * S * 4 * D * cdt_size)                         # qkv + ffn-in scratch
    budget = (48 * _MIB) if small_vmem else (100 * _MIB)
    vmem_limit = int(min(budget, max(32 * _MIB, 2 * est)))

    kernel = functools.partial(
        encoder_layer_kernel, n_head=n_head,
        ffn_chunk=int(min(ffn_chunk, F)),
        approx_recip=(jnp.dtype(compute_dtype) != jnp.dtype(jnp.float32)))

    x_spec = pl.BlockSpec((bb, S, D), lambda i: (i, 0, 0))
    out_spec = pl.BlockSpec((bb, S, D), lambda i: (i, 0, 0))
    scratch = [pltpu.VMEM((bb, S, 3 * D), compute_dtype),
               pltpu.VMEM((bb, S, D), compute_dtype)]

    def run(single_buffer_weights):
        def wspec(a):
            nd = a.ndim
            idx = lambda i, nd=nd: (0,) * nd
            if single_buffer_weights:
                # weights are grid-invariant: don't double-buffer them.
                return pl.BlockSpec(a.shape, idx, pipeline_mode=pl.Buffered(1))
            return pl.BlockSpec(a.shape, idx)

        return pl.pallas_call(
            kernel,
            out_shape=jax.ShapeDtypeStruct((B, S, D), out_dtype),
            grid=grid,
            in_specs=[x_spec] + [wspec(p) for p in plist],
            out_specs=out_spec,
            scratch_shapes=scratch,
            compiler_params=pltpu.CompilerParams(
                dimension_semantics=("parallel",),
                vmem_limit_bytes=vmem_limit),
        )(x_bsd, *plist)

    try:
        out_bsd = run(single_buffer_weights=True)
    except Exception:
        # pipeline_mode=Buffered(1) unsupported on this jax build: double-buffer.
        out_bsd = run(single_buffer_weights=False)

    return out_bsd if batch_first else jnp.transpose(out_bsd, (1, 0, 2))


def encoder_layer_ref(x_sbd, params, *, n_head):
    """Pure-JAX f32 reference mirroring the PyTorch forward (eval mode)."""
    S, B, D = x_sbd.shape
    H = n_head
    Dh = D // H
    eps = 1e-5

    def ln(z, g, w):
        mu = jnp.mean(z, axis=-1, keepdims=True)
        var = jnp.mean((z - mu) ** 2, axis=-1, keepdims=True)
        return (z - mu) * lax.rsqrt(var + eps) * g + w

    x = jnp.transpose(x_sbd, (1, 0, 2))  # (B, S, D)
    src1 = ln(x, params["ln1_g"], params["ln1_b"])

    wqkv, bqkv = params["wqkv"], params["bqkv"][0]
    q = src1 @ wqkv[0:D].T + bqkv[0:D]
    k = src1 @ wqkv[D:2 * D].T + bqkv[D:2 * D]
    v = src1 @ wqkv[2 * D:3 * D].T + bqkv[2 * D:3 * D]

    def split_heads(t):  # (B, S, D) -> (B, H, S, Dh)
        return jnp.transpose(t.reshape(B, S, H, Dh), (0, 2, 1, 3))

    qh, kh, vh = split_heads(q), split_heads(k), split_heads(v)
    s = jnp.einsum("bhqd,bhkd->bhqk", qh, kh) / math.sqrt(Dh)
    p = jax.nn.softmax(s, axis=-1)
    attn = jnp.einsum("bhqk,bhkd->bhqd", p, vh)
    attn = jnp.transpose(attn, (0, 2, 1, 3)).reshape(B, S, D)
    attn_out = attn @ params["wo"].T + params["bo"][0]

    src2 = attn_out + x
    src3 = ln(src2, params["ln2_g"], params["ln2_b"])
    h1 = jnp.maximum(src3 @ params["w1"].T + params["b1"][0], 0.0)
    y = h1 @ params["w2"].T + params["b2"][0]
    return jnp.transpose(y, (1, 0, 2))  # (S, B, D)


def init_params(key, d_model, n_head, dim_feedforward):
    D, F = d_model, dim_feedforward
    ks = jax.random.split(key, 8)
    scale_in = 1.0 / math.sqrt(D)
    scale_ff = 1.0 / math.sqrt(F)
    return {
        "ln1_g": jnp.ones((1, D), jnp.float32),
        "ln1_b": jnp.zeros((1, D), jnp.float32),
        "wqkv": jax.random.uniform(ks[0], (3 * D, D), jnp.float32, -scale_in, scale_in),
        "bqkv": jax.random.uniform(ks[1], (1, 3 * D), jnp.float32, -scale_in, scale_in),
        "wo": jax.random.uniform(ks[2], (D, D), jnp.float32, -scale_in, scale_in),
        "bo": jax.random.uniform(ks[3], (1, D), jnp.float32, -scale_in, scale_in),
        "ln2_g": jnp.ones((1, D), jnp.float32),
        "ln2_b": jnp.zeros((1, D), jnp.float32),
        "w1": jax.random.uniform(ks[4], (F, D), jnp.float32, -scale_in, scale_in),
        "b1": jax.random.uniform(ks[5], (1, F), jnp.float32, -scale_in, scale_in),
        "w2": jax.random.uniform(ks[6], (D, F), jnp.float32, -scale_ff, scale_ff),
        "b2": jax.random.uniform(ks[7], (1, D), jnp.float32, -scale_ff, scale_ff),
    }


if __name__ == "__main__":
    S, B, D = 16, 2, 128          # seq, batch, d_model (lane-aligned demo dims)
    n_head = 4
    dim_feedforward = 256

    key = jax.random.PRNGKey(0)
    k_x, k_p = jax.random.split(key)
    x = jax.random.normal(k_x, (S, B, D), jnp.float32)   # (seq, batch, d_model)
    params = init_params(k_p, D, n_head, dim_feedforward)

    ref = jax.block_until_ready(encoder_layer_ref(x, params, n_head=n_head))

    # f32 MXU path: tight check against the f32 reference (exact softmax divide).
    out_f32 = jax.block_until_ready(
        encoder_layer_pallas(x, params, n_head=n_head, compute_dtype=jnp.float32))
    assert out_f32.shape == (S, B, D)
    err32 = float(jnp.max(jnp.abs(out_f32 - ref)))
    assert err32 < 1e-2, f"f32 max abs err {err32}"

    # bf16 MXU path (recommended on v6e/v7x): looser check against the f32 ref.
    out_bf16 = jax.block_until_ready(
        encoder_layer_pallas(x, params, n_head=n_head, compute_dtype=jnp.bfloat16))
    err16 = float(jnp.max(jnp.abs(out_bf16 - ref)))
    assert err16 < 1e-1, f"bf16 max abs err {err16}"

    print("KERNEL_OK")
</pallas_src>

<mosaic_0001>
module attributes {stable_mosaic.version = 11 : i64} {
  func.func @encoder_layer_kernel(%arg0: i32, %arg1: memref<1x16x128xf32, #tpu.memory_space<vmem>>, %arg2: memref<1x128xf32, #tpu.memory_space<vmem>>, %arg3: memref<1x128xf32, #tpu.memory_space<vmem>>, %arg4: memref<128x384xf32, #tpu.memory_space<vmem>>, %arg5: memref<1x384xf32, #tpu.memory_space<vmem>>, %arg6: memref<128x128xf32, #tpu.memory_space<vmem>>, %arg7: memref<1x128xf32, #tpu.memory_space<vmem>>, %arg8: memref<1x128xf32, #tpu.memory_space<vmem>>, %arg9: memref<1x128xf32, #tpu.memory_space<vmem>>, %arg10: memref<128x256xf32, #tpu.memory_space<vmem>>, %arg11: memref<1x256xf32, #tpu.memory_space<vmem>>, %arg12: memref<256x128xf32, #tpu.memory_space<vmem>>, %arg13: memref<1x128xf32, #tpu.memory_space<vmem>>, %arg14: memref<1x16x128xf32, #tpu.memory_space<vmem>>, %arg15: memref<1x16x384xf32, #tpu.memory_space<vmem>>, %arg16: memref<1x16x128xf32, #tpu.memory_space<vmem>>) attributes {dimension_semantics = [#tpu.dimension_semantics<parallel>], iteration_bounds = array<i64: 2>, scalar_prefetch = 0 : i64, scratch_operands = 2 : i64, tpu.core_type = #tpu.core_type<tc>, window_params = [{transform_indices = @transform_0, window_bounds = array<i64: 1, 16, 128>}, {pipeline_mode = #tpu.pipeline_mode<synchronous>, transform_indices = @transform_1, window_bounds = array<i64: 1, 128>}, {pipeline_mode = #tpu.pipeline_mode<synchronous>, transform_indices = @transform_2, window_bounds = array<i64: 1, 128>}, {pipeline_mode = #tpu.pipeline_mode<synchronous>, transform_indices = @transform_3, window_bounds = array<i64: 128, 384>}, {pipeline_mode = #tpu.pipeline_mode<synchronous>, transform_indices = @transform_4, window_bounds = array<i64: 1, 384>}, {pipeline_mode = #tpu.pipeline_mode<synchronous>, transform_indices = @transform_5, window_bounds = array<i64: 128, 128>}, {pipeline_mode = #tpu.pipeline_mode<synchronous>, transform_indices = @transform_6, window_bounds = array<i64: 1, 128>}, {pipeline_mode = #tpu.pipeline_mode<synchronous>, transform_indices = @transform_7, window_bounds = array<i64: 1, 128>}, {pipeline_mode = #tpu.pipeline_mode<synchronous>, transform_indices = @transform_8, window_bounds = array<i64: 1, 128>}, {pipeline_mode = #tpu.pipeline_mode<synchronous>, transform_indices = @transform_9, window_bounds = array<i64: 128, 256>}, {pipeline_mode = #tpu.pipeline_mode<synchronous>, transform_indices = @transform_10, window_bounds = array<i64: 1, 256>}, {pipeline_mode = #tpu.pipeline_mode<synchronous>, transform_indices = @transform_11, window_bounds = array<i64: 256, 128>}, {pipeline_mode = #tpu.pipeline_mode<synchronous>, transform_indices = @transform_12, window_bounds = array<i64: 1, 128>}, {transform_indices = @transform_13, window_bounds = array<i64: 1, 16, 128>}]} {
    %c0 = arith.constant 0 : index
    %c0_0 = arith.constant 0 : index
    %c0_1 = arith.constant 0 : index
    %0 = vector.load %arg1[%c0, %c0_0, %c0_1] : memref<1x16x128xf32, #tpu.memory_space<vmem>>, vector<1x16x128xf32>
    %1 = vector.shape_cast %0 : vector<1x16x128xf32> to vector<16x128xf32>
    %cst = arith.constant dense<0.000000e+00> : vector<16xf32>
    %2 = vector.multi_reduction <add>, %1, %cst [1] : vector<16x128xf32> to vector<16xf32>
    %3 = vector.shape_cast %2 : vector<16xf32> to vector<16x1xf32>
    %cst_2 = arith.constant 1.280000e+02 : f32
    %4 = vector.broadcast %cst_2 : f32 to vector<16x1xf32>
    %5 = arith.divf %3, %4 : vector<16x1xf32>
    %6 = vector.broadcast %5 : vector<16x1xf32> to vector<16x128xf32>
    %7 = arith.subf %1, %6 : vector<16x128xf32>
    %8 = arith.mulf %7, %7 : vector<16x128xf32>
    %cst_3 = arith.constant dense<0.000000e+00> : vector<16xf32>
    %9 = vector.multi_reduction <add>, %8, %cst_3 [1] : vector<16x128xf32> to vector<16xf32>
    %10 = vector.shape_cast %9 : vector<16xf32> to vector<16x1xf32>
    %cst_4 = arith.constant 1.280000e+02 : f32
    %11 = vector.broadcast %cst_4 : f32 to vector<16x1xf32>
    %12 = arith.divf %10, %11 : vector<16x1xf32>
    %13 = vector.broadcast %5 : vector<16x1xf32> to vector<16x128xf32>
    %14 = arith.subf %1, %13 : vector<16x128xf32>
    %cst_5 = arith.constant 9.99999974E-6 : f32
    %15 = vector.broadcast %cst_5 : f32 to vector<16x1xf32>
    %16 = arith.addf %12, %15 : vector<16x1xf32>
    %17 = math.rsqrt %16 : vector<16x1xf32>
    %18 = vector.broadcast %17 : vector<16x1xf32> to vector<16x128xf32>
    %19 = arith.mulf %14, %18 : vector<16x128xf32>
    %c0_6 = arith.constant 0 : index
    %c0_7 = arith.constant 0 : index
    %20 = vector.load %arg2[%c0_6, %c0_7] : memref<1x128xf32, #tpu.memory_space<vmem>>, vector<1x128xf32>
    %21 = vector.broadcast %20 : vector<1x128xf32> to vector<16x128xf32>
    %22 = arith.mulf %19, %21 : vector<16x128xf32>
    %c0_8 = arith.constant 0 : index
    %c0_9 = arith.constant 0 : index
    %23 = vector.load %arg3[%c0_8, %c0_9] : memref<1x128xf32, #tpu.memory_space<vmem>>, vector<1x128xf32>
    %24 = vector.broadcast %23 : vector<1x128xf32> to vector<16x128xf32>
    %25 = arith.addf %22, %24 : vector<16x128xf32>
    %c0_10 = arith.constant 0 : index
    %c0_11 = arith.constant 0 : index
    %26 = vector.load %arg4[%c0_10, %c0_11] : memref<128x384xf32, #tpu.memory_space<vmem>>, vector<128x384xf32>
    %cst_12 = arith.constant dense<0.000000e+00> : vector<16x384xf32>
    %27 = tpu.matmul %25, %26, %cst_12 {dimension_numbers = #tpu.dot_dimension_numbers<[1], [0], [0], [1], [0, 0, 1, 1], [], []>} : vector<16x128xf32>, vector<128x384xf32>, vector<16x384xf32> -> vector<16x384xf32>
    %c0_13 = arith.constant 0 : index
    %c0_14 = arith.constant 0 : index
    %28 = vector.load %arg5[%c0_13, %c0_14] : memref<1x384xf32, #tpu.memory_space<vmem>>, vector<1x384xf32>
    %29 = vector.broadcast %28 : vector<1x384xf32> to vector<16x384xf32>
    %30 = arith.addf %27, %29 : vector<16x384xf32>
    %31 = vector.shape_cast %30 : vector<16x384xf32> to vector<1x16x384xf32>
    %c0_15 = arith.constant 0 : index
    %c0_16 = arith.constant 0 : index
    %c0_17 = arith.constant 0 : index
    %32 = vector.load %arg15[%c0_15, %c0_16, %c0_17] : memref<1x16x384xf32, #tpu.memory_space<vmem>>, vector<1x16x384xf32>
    tpu.vector_store %arg15[%c0_15, %c0_16, %c0_17], %31 {strides = array<i32>} : memref<1x16x384xf32, #tpu.memory_space<vmem>>, vector<1x16x384xf32>,
    %c0_i32 = arith.constant 0 : i32
    %cst_18 = arith.constant 0.000000e+00 : f32
    %33 = vector.broadcast %cst_18 : f32 to vector<16x128xf32>
    %34 = arith.index_cast %c0_i32 : i32 to index
    %c0_19 = arith.constant 0 : index
    %c0_20 = arith.constant 0 : index
    %35 = vector.load %arg15[%34, %c0_19, %c0_20] : memref<1x16x384xf32, #tpu.memory_space<vmem>>, vector<1x16x32xf32>
    %36 = vector.shape_cast %35 : vector<1x16x32xf32> to vector<16x32xf32>
    %37 = arith.index_cast %c0_i32 : i32 to index
    %c0_21 = arith.constant 0 : index
    %c128 = arith.constant 128 : index
    %38 = vector.load %arg15[%37, %c0_21, %c128] : memref<1x16x384xf32, #tpu.memory_space<vmem>>, vector<1x16x32xf32>
    %39 = vector.shape_cast %38 : vector<1x16x32xf32> to vector<16x32xf32>
    %40 = arith.index_cast %c0_i32 : i32 to index
    %c0_22 = arith.constant 0 : index
    %c256 = arith.constant 256 : index
    %41 = vector.load %arg15[%40, %c0_22, %c256] : memref<1x16x384xf32, #tpu.memory_space<vmem>>, vector<1x16x32xf32>
    %42 = vector.shape_cast %41 : vector<1x16x32xf32> to vector<16x32xf32>
    %cst_23 = arith.constant dense<0.000000e+00> : vector<16x16xf32>
    %43 = tpu.matmul %36, %39, %cst_23 {dimension_numbers = #tpu.dot_dimension_numbers<[1], [1], [0], [0], [0, 0, 1, 0], [], []>} : vector<16x32xf32>, vector<16x32xf32>, vector<16x16xf32> -> vector<16x16xf32>
    %cst_24 = arith.constant dense<0xFF800000> : vector<16xf32>
    %44 = vector.multi_reduction <maximumf>, %43, %cst_24 [1] : vector<16x16xf32> to vector<16xf32>
    %45 = vector.shape_cast %44 : vector<16xf32> to vector<16x1xf32>
    %46 = vector.broadcast %45 : vector<16x1xf32> to vector<16x16xf32>
    %47 = arith.subf %43, %46 : vector<16x16xf32>
    %48 = math.exp %47 : vector<16x16xf32>
    %cst_25 = arith.constant dense<0.000000e+00> : vector<16xf32>
    %49 = vector.multi_reduction <add>, %48, %cst_25 [1] : vector<16x16xf32> to vector<16xf32>
    %50 = vector.shape_cast %49 : vector<16xf32> to vector<16x1xf32>
    %51 = vector.broadcast %50 : vector<16x1xf32> to vector<16x16xf32>
    %52 = arith.divf %48, %51 : vector<16x16xf32>
    %cst_26 = arith.constant dense<0.000000e+00> : vector<16x32xf32>
    %53 = tpu.matmul %52, %42, %cst_26 {dimension_numbers = #tpu.dot_dimension_numbers<[1], [0], [0], [1], [0, 0, 1, 1], [], []>} : vector<16x16xf32>, vector<16x32xf32>, vector<16x32xf32> -> vector<16x32xf32>
    %c0_27 = arith.constant 0 : index
    %c0_28 = arith.constant 0 : index
    %54 = vector.load %arg6[%c0_27, %c0_28] : memref<128x128xf32, #tpu.memory_space<vmem>>, vector<32x128xf32>
    %cst_29 = arith.constant dense<0.000000e+00> : vector<16x128xf32>
    %55 = tpu.matmul %53, %54, %cst_29 {dimension_numbers = #tpu.dot_dimension_numbers<[1], [0], [0], [1], [0, 0, 1, 1], [], []>} : vector<16x32xf32>, vector<32x128xf32>, vector<16x128xf32> -> vector<16x128xf32>
    %56 = arith.addf %33, %55 : vector<16x128xf32>
    %57 = arith.index_cast %c0_i32 : i32 to index
    %c0_30 = arith.constant 0 : index
    %c32 = arith.constant 32 : index
    %58 = vector.load %arg15[%57, %c0_30, %c32] : memref<1x16x384xf32, #tpu.memory_space<vmem>>, vector<1x16x32xf32>
    %59 = vector.shape_cast %58 : vector<1x16x32xf32> to vector<16x32xf32>
    %60 = arith.index_cast %c0_i32 : i32 to index
    %c0_31 = arith.constant 0 : index
    %c160 = arith.constant 160 : index
    %61 = vector.load %arg15[%60, %c0_31, %c160] : memref<1x16x384xf32, #tpu.memory_space<vmem>>, vector<1x16x32xf32>
    %62 = vector.shape_cast %61 : vector<1x16x32xf32> to vector<16x32xf32>
    %63 = arith.index_cast %c0_i32 : i32 to index
    %c0_32 = arith.constant 0 : index
    %c288 = arith.constant 288 : index
    %64 = vector.load %arg15[%63, %c0_32, %c288] : memref<1x16x384xf32, #tpu.memory_space<vmem>>, vector<1x16x32xf32>
    %65 = vector.shape_cast %64 : vector<1x16x32xf32> to vector<16x32xf32>
    %cst_33 = arith.constant dense<0.000000e+00> : vector<16x16xf32>
    %66 = tpu.matmul %59, %62, %cst_33 {dimension_numbers = #tpu.dot_dimension_numbers<[1], [1], [0], [0], [0, 0, 1, 0], [], []>} : vector<16x32xf32>, vector<16x32xf32>, vector<16x16xf32> -> vector<16x16xf32>
    %cst_34 = arith.constant dense<0xFF800000> : vector<16xf32>
    %67 = vector.multi_reduction <maximumf>, %66, %cst_34 [1] : vector<16x16xf32> to vector<16xf32>
    %68 = vector.shape_cast %67 : vector<16xf32> to vector<16x1xf32>
    %69 = vector.broadcast %68 : vector<16x1xf32> to vector<16x16xf32>
    %70 = arith.subf %66, %69 : vector<16x16xf32>
    %71 = math.exp %70 : vector<16x16xf32>
    %cst_35 = arith.constant dense<0.000000e+00> : vector<16xf32>
    %72 = vector.multi_reduction <add>, %71, %cst_35 [1] : vector<16x16xf32> to vector<16xf32>
    %73 = vector.shape_cast %72 : vector<16xf32> to vector<16x1xf32>
    %74 = vector.broadcast %73 : vector<16x1xf32> to vector<16x16xf32>
    %75 = arith.divf %71, %74 : vector<16x16xf32>
    %cst_36 = arith.constant dense<0.000000e+00> : vector<16x32xf32>
    %76 = tpu.matmul %75, %65, %cst_36 {dimension_numbers = #tpu.dot_dimension_numbers<[1], [0], [0], [1], [0, 0, 1, 1], [], []>} : vector<16x16xf32>, vector<16x32xf32>, vector<16x32xf32> -> vector<16x32xf32>
    %c32_37 = arith.constant 32 : index
    %c0_38 = arith.constant 0 : index
    %77 = vector.load %arg6[%c32_37, %c0_38] : memref<128x128xf32, #tpu.memory_space<vmem>>, vector<32x128xf32>
    %cst_39 = arith.constant dense<0.000000e+00> : vector<16x128xf32>
    %78 = tpu.matmul %76, %77, %cst_39 {dimension_numbers = #tpu.dot_dimension_numbers<[1], [0], [0], [1], [0, 0, 1, 1], [], []>} : vector<16x32xf32>, vector<32x128xf32>, vector<16x128xf32> -> vector<16x128xf32>
    %79 = arith.addf %56, %78 : vector<16x128xf32>
    %80 = arith.index_cast %c0_i32 : i32 to index
    %c0_40 = arith.constant 0 : index
    %c64 = arith.constant 64 : index
    %81 = vector.load %arg15[%80, %c0_40, %c64] : memref<1x16x384xf32, #tpu.memory_space<vmem>>, vector<1x16x32xf32>
    %82 = vector.shape_cast %81 : vector<1x16x32xf32> to vector<16x32xf32>
    %83 = arith.index_cast %c0_i32 : i32 to index
    %c0_41 = arith.constant 0 : index
    %c192 = arith.constant 192 : index
    %84 = vector.load %arg15[%83, %c0_41, %c192] : memref<1x16x384xf32, #tpu.memory_space<vmem>>, vector<1x16x32xf32>
    %85 = vector.shape_cast %84 : vector<1x16x32xf32> to vector<16x32xf32>
    %86 = arith.index_cast %c0_i32 : i32 to index
    %c0_42 = arith.constant 0 : index
    %c320 = arith.constant 320 : index
    %87 = vector.load %arg15[%86, %c0_42, %c320] : memref<1x16x384xf32, #tpu.memory_space<vmem>>, vector<1x16x32xf32>
    %88 = vector.shape_cast %87 : vector<1x16x32xf32> to vector<16x32xf32>
    %cst_43 = arith.constant dense<0.000000e+00> : vector<16x16xf32>
    %89 = tpu.matmul %82, %85, %cst_43 {dimension_numbers = #tpu.dot_dimension_numbers<[1], [1], [0], [0], [0, 0, 1, 0], [], []>} : vector<16x32xf32>, vector<16x32xf32>, vector<16x16xf32> -> vector<16x16xf32>
    %cst_44 = arith.constant dense<0xFF800000> : vector<16xf32>
    %90 = vector.multi_reduction <maximumf>, %89, %cst_44 [1] : vector<16x16xf32> to vector<16xf32>
    %91 = vector.shape_cast %90 : vector<16xf32> to vector<16x1xf32>
    %92 = vector.broadcast %91 : vector<16x1xf32> to vector<16x16xf32>
    %93 = arith.subf %89, %92 : vector<16x16xf32>
    %94 = math.exp %93 : vector<16x16xf32>
    %cst_45 = arith.constant dense<0.000000e+00> : vector<16xf32>
    %95 = vector.multi_reduction <add>, %94, %cst_45 [1] : vector<16x16xf32> to vector<16xf32>
    %96 = vector.shape_cast %95 : vector<16xf32> to vector<16x1xf32>
    %97 = vector.broadcast %96 : vector<16x1xf32> to vector<16x16xf32>
    %98 = arith.divf %94, %97 : vector<16x16xf32>
    %cst_46 = arith.constant dense<0.000000e+00> : vector<16x32xf32>
    %99 = tpu.matmul %98, %88, %cst_46 {dimension_numbers = #tpu.dot_dimension_numbers<[1], [0], [0], [1], [0, 0, 1, 1], [], []>} : vector<16x16xf32>, vector<16x32xf32>, vector<16x32xf32> -> vector<16x32xf32>
    %c64_47 = arith.constant 64 : index
    %c0_48 = arith.constant 0 : index
    %100 = vector.load %arg6[%c64_47, %c0_48] : memref<128x128xf32, #tpu.memory_space<vmem>>, vector<32x128xf32>
    %cst_49 = arith.constant dense<0.000000e+00> : vector<16x128xf32>
    %101 = tpu.matmul %99, %100, %cst_49 {dimension_numbers = #tpu.dot_dimension_numbers<[1], [0], [0], [1], [0, 0, 1, 1], [], []>} : vector<16x32xf32>, vector<32x128xf32>, vector<16x128xf32> -> vector<16x128xf32>
    %102 = arith.addf %79, %101 : vector<16x128xf32>
    %103 = arith.index_cast %c0_i32 : i32 to index
    %c0_50 = arith.constant 0 : index
    %c96 = arith.constant 96 : index
    %104 = vector.load %arg15[%103, %c0_50, %c96] : memref<1x16x384xf32, #tpu.memory_space<vmem>>, vector<1x16x32xf32>
    %105 = vector.shape_cast %104 : vector<1x16x32xf32> to vector<16x32xf32>
    %106 = arith.index_cast %c0_i32 : i32 to index
    %c0_51 = arith.constant 0 : index
    %c224 = arith.constant 224 : index
    %107 = vector.load %arg15[%106, %c0_51, %c224] : memref<1x16x384xf32, #tpu.memory_space<vmem>>, vector<1x16x32xf32>
    %108 = vector.shape_cast %107 : vector<1x16x32xf32> to vector<16x32xf32>
    %109 = arith.index_cast %c0_i32 : i32 to index
    %c0_52 = arith.constant 0 : index
    %c352 = arith.constant 352 : index
    %110 = vector.load %arg15[%109, %c0_52, %c352] : memref<1x16x384xf32, #tpu.memory_space<vmem>>, vector<1x16x32xf32>
    %111 = vector.shape_cast %110 : vector<1x16x32xf32> to vector<16x32xf32>
    %cst_53 = arith.constant dense<0.000000e+00> : vector<16x16xf32>
    %112 = tpu.matmul %105, %108, %cst_53 {dimension_numbers = #tpu.dot_dimension_numbers<[1], [1], [0], [0], [0, 0, 1, 0], [], []>} : vector<16x32xf32>, vector<16x32xf32>, vector<16x16xf32> -> vector<16x16xf32>
    %cst_54 = arith.constant dense<0xFF800000> : vector<16xf32>
    %113 = vector.multi_reduction <maximumf>, %112, %cst_54 [1] : vector<16x16xf32> to vector<16xf32>
    %114 = vector.shape_cast %113 : vector<16xf32> to vector<16x1xf32>
    %115 = vector.broadcast %114 : vector<16x1xf32> to vector<16x16xf32>
    %116 = arith.subf %112, %115 : vector<16x16xf32>
    %117 = math.exp %116 : vector<16x16xf32>
    %cst_55 = arith.constant dense<0.000000e+00> : vector<16xf32>
    %118 = vector.multi_reduction <add>, %117, %cst_55 [1] : vector<16x16xf32> to vector<16xf32>
    %119 = vector.shape_cast %118 : vector<16xf32> to vector<16x1xf32>
    %120 = vector.broadcast %119 : vector<16x1xf32> to vector<16x16xf32>
    %121 = arith.divf %117, %120 : vector<16x16xf32>
    %cst_56 = arith.constant dense<0.000000e+00> : vector<16x32xf32>
    %122 = tpu.matmul %121, %111, %cst_56 {dimension_numbers = #tpu.dot_dimension_numbers<[1], [0], [0], [1], [0, 0, 1, 1], [], []>} : vector<16x16xf32>, vector<16x32xf32>, vector<16x32xf32> -> vector<16x32xf32>
    %c96_57 = arith.constant 96 : index
    %c0_58 = arith.constant 0 : index
    %123 = vector.load %arg6[%c96_57, %c0_58] : memref<128x128xf32, #tpu.memory_space<vmem>>, vector<32x128xf32>
    %cst_59 = arith.constant dense<0.000000e+00> : vector<16x128xf32>
    %124 = tpu.matmul %122, %123, %cst_59 {dimension_numbers = #tpu.dot_dimension_numbers<[1], [0], [0], [1], [0, 0, 1, 1], [], []>} : vector<16x32xf32>, vector<32x128xf32>, vector<16x128xf32> -> vector<16x128xf32>
    %125 = arith.addf %102, %124 : vector<16x128xf32>
    %c0_60 = arith.constant 0 : index
    %c0_61 = arith.constant 0 : index
    %126 = vector.load %arg7[%c0_60, %c0_61] : memref<1x128xf32, #tpu.memory_space<vmem>>, vector<1x128xf32>
    %127 = vector.broadcast %126 : vector<1x128xf32> to vector<16x128xf32>
    %128 = arith.addf %125, %127 : vector<16x128xf32>
    %129 = arith.index_cast %c0_i32 : i32 to index
    %c0_62 = arith.constant 0 : index
    %c0_63 = arith.constant 0 : index
    %130 = vector.load %arg1[%129, %c0_62, %c0_63] : memref<1x16x128xf32, #tpu.memory_space<vmem>>, vector<1x16x128xf32>
    %131 = vector.shape_cast %130 : vector<1x16x128xf32> to vector<16x128xf32>
    %132 = arith.addf %128, %131 : vector<16x128xf32>
    %cst_64 = arith.constant dense<0.000000e+00> : vector<16xf32>
    %133 = vector.multi_reduction <add>, %132, %cst_64 [1] : vector<16x128xf32> to vector<16xf32>
    %134 = vector.shape_cast %133 : vector<16xf32> to vector<16x1xf32>
    %cst_65 = arith.constant 1.280000e+02 : f32
    %135 = vector.broadcast %cst_65 : f32 to vector<16x1xf32>
    %136 = arith.divf %134, %135 : vector<16x1xf32>
    %137 = vector.broadcast %136 : vector<16x1xf32> to vector<16x128xf32>
    %138 = arith.subf %132, %137 : vector<16x128xf32>
    %139 = arith.mulf %138, %138 : vector<16x128xf32>
    %cst_66 = arith.constant dense<0.000000e+00> : vector<16xf32>
    %140 = vector.multi_reduction <add>, %139, %cst_66 [1] : vector<16x128xf32> to vector<16xf32>
    %141 = vector.shape_cast %140 : vector<16xf32> to vector<16x1xf32>
    %cst_67 = arith.constant 1.280000e+02 : f32
    %142 = vector.broadcast %cst_67 : f32 to vector<16x1xf32>
    %143 = arith.divf %141, %142 : vector<16x1xf32>
    %144 = vector.broadcast %136 : vector<16x1xf32> to vector<16x128xf32>
    %145 = arith.subf %132, %144 : vector<16x128xf32>
    %cst_68 = arith.constant 9.99999974E-6 : f32
    %146 = vector.broadcast %cst_68 : f32 to vector<16x1xf32>
    %147 = arith.addf %143, %146 : vector<16x1xf32>
    %148 = math.rsqrt %147 : vector<16x1xf32>
    %149 = vector.broadcast %148 : vector<16x1xf32> to vector<16x128xf32>
    %150 = arith.mulf %145, %149 : vector<16x128xf32>
    %c0_69 = arith.constant 0 : index
    %c0_70 = arith.constant 0 : index
    %151 = vector.load %arg8[%c0_69, %c0_70] : memref<1x128xf32, #tpu.memory_space<vmem>>, vector<1x128xf32>
    %152 = vector.broadcast %151 : vector<1x128xf32> to vector<16x128xf32>
    %153 = arith.mulf %150, %152 : vector<16x128xf32>
    %c0_71 = arith.constant 0 : index
    %c0_72 = arith.constant 0 : index
    %154 = vector.load %arg9[%c0_71, %c0_72] : memref<1x128xf32, #tpu.memory_space<vmem>>, vector<1x128xf32>
    %155 = vector.broadcast %154 : vector<1x128xf32> to vector<16x128xf32>
    %156 = arith.addf %153, %155 : vector<16x128xf32>
    %157 = arith.index_cast %c0_i32 : i32 to index
    %c0_73 = arith.constant 0 : index
    %c0_74 = arith.constant 0 : index
    %158 = vector.load %arg16[%157, %c0_73, %c0_74] : memref<1x16x128xf32, #tpu.memory_space<vmem>>, vector<1x16x128xf32>
    %159 = vector.shape_cast %158 : vector<1x16x128xf32> to vector<16x128xf32>
    %160 = vector.shape_cast %156 : vector<16x128xf32> to vector<1x16x128xf32>
    tpu.vector_store %arg16[%157, %c0_73, %c0_74], %160 {strides = array<i32>} : memref<1x16x128xf32, #tpu.memory_space<vmem>>, vector<1x16x128xf32>,
    %c1_i32 = arith.constant 1 : i32
    %c0_75 = arith.constant 0 : index
    %c0_76 = arith.constant 0 : index
    %c0_77 = arith.constant 0 : index
    %161 = vector.load %arg16[%c0_75, %c0_76, %c0_77] : memref<1x16x128xf32, #tpu.memory_space<vmem>>, vector<1x16x128xf32>
    %162 = vector.shape_cast %161 : vector<1x16x128xf32> to vector<16x128xf32>
    %c0_78 = arith.constant 0 : index
    %c0_79 = arith.constant 0 : index
    %163 = vector.load %arg10[%c0_78, %c0_79] : memref<128x256xf32, #tpu.memory_space<vmem>>, vector<128x256xf32>
    %cst_80 = arith.constant dense<0.000000e+00> : vector<16x256xf32>
    %164 = tpu.matmul %162, %163, %cst_80 {dimension_numbers = #tpu.dot_dimension_numbers<[1], [0], [0], [1], [0, 0, 1, 1], [], []>} : vector<16x128xf32>, vector<128x256xf32>, vector<16x256xf32> -> vector<16x256xf32>
    %c0_81 = arith.constant 0 : index
    %c0_82 = arith.constant 0 : index
    %165 = vector.load %arg11[%c0_81, %c0_82] : memref<1x256xf32, #tpu.memory_space<vmem>>, vector<1x256xf32>
    %166 = vector.broadcast %165 : vector<1x256xf32> to vector<16x256xf32>
    %167 = arith.addf %164, %166 : vector<16x256xf32>
    %cst_83 = arith.constant 0.000000e+00 : f32
    %168 = vector.broadcast %cst_83 : f32 to vector<16x256xf32>
    %169 = arith.maximumf %167, %168 : vector<16x256xf32>
    %c0_84 = arith.constant 0 : index
    %c0_85 = arith.constant 0 : index
    %170 = vector.load %arg12[%c0_84, %c0_85] : memref<256x128xf32, #tpu.memory_space<vmem>>, vector<256x128xf32>
    %cst_86 = arith.constant dense<0.000000e+00> : vector<16x128xf32>
    %171 = tpu.matmul %169, %170, %cst_86 {dimension_numbers = #tpu.dot_dimension_numbers<[1], [0], [0], [1], [0, 0, 1, 1], [], []>} : vector<16x256xf32>, vector<256x128xf32>, vector<16x128xf32> -> vector<16x128xf32>
    %c0_87 = arith.constant 0 : index
    %c0_88 = arith.constant 0 : index
    %172 = vector.load %arg13[%c0_87, %c0_88] : memref<1x128xf32, #tpu.memory_space<vmem>>, vector<1x128xf32>
    %173 = vector.broadcast %172 : vector<1x128xf32> to vector<16x128xf32>
    %174 = arith.addf %171, %173 : vector<16x128xf32>
    %175 = vector.shape_cast %174 : vector<16x128xf32> to vector<1x16x128xf32>
    %c0_89 = arith.constant 0 : index
    %c0_90 = arith.constant 0 : index
    %c0_91 = arith.constant 0 : index
    %176 = vector.load %arg14[%c0_89, %c0_90, %c0_91] : memref<1x16x128xf32, #tpu.memory_space<vmem>>, vector<1x16x128xf32>
    tpu.vector_store %arg14[%c0_89, %c0_90, %c0_91], %175 {strides = array<i32>} : memref<1x16x128xf32, #tpu.memory_space<vmem>>, vector<1x16x128xf32>,
    return
  }
  func.func @transform_0(%arg0: i32) -> (i32, i32, i32) {
    %c0_i32 = arith.constant 0 : i32
    %c0_i32_0 = arith.constant 0 : i32
    %c0_i32_1 = arith.constant 0 : i32
    return %arg0, %c0_i32, %c0_i32_0 : i32, i32, i32
  }
  func.func @transform_1(%arg0: i32) -> (i32, i32) {
    %c0_i32 = arith.constant 0 : i32
    %c0_i32_0 = arith.constant 0 : i32
    %c0_i32_1 = arith.constant 0 : i32
    return %c0_i32, %c0_i32_0 : i32, i32
  }
  func.func @transform_2(%arg0: i32) -> (i32, i32) {
    %c0_i32 = arith.constant 0 : i32
    %c0_i32_0 = arith.constant 0 : i32
    %c0_i32_1 = arith.constant 0 : i32
    return %c0_i32, %c0_i32_0 : i32, i32
  }
  func.func @transform_3(%arg0: i32) -> (i32, i32) {
    %c0_i32 = arith.constant 0 : i32
    %c0_i32_0 = arith.constant 0 : i32
    %c0_i32_1 = arith.constant 0 : i32
    return %c0_i32, %c0_i32_0 : i32, i32
  }
  func.func @transform_4(%arg0: i32) -> (i32, i32) {
    %c0_i32 = arith.constant 0 : i32
    %c0_i32_0 = arith.constant 0 : i32
    %c0_i32_1 = arith.constant 0 : i32
    return %c0_i32, %c0_i32_0 : i32, i32
  }
  func.func @transform_5(%arg0: i32) -> (i32, i32) {
    %c0_i32 = arith.constant 0 : i32
    %c0_i32_0 = arith.constant 0 : i32
    %c0_i32_1 = arith.constant 0 : i32
    return %c0_i32, %c0_i32_0 : i32, i32
  }
  func.func @transform_6(%arg0: i32) -> (i32, i32) {
    %c0_i32 = arith.constant 0 : i32
    %c0_i32_0 = arith.constant 0 : i32
    %c0_i32_1 = arith.constant 0 : i32
    return %c0_i32, %c0_i32_0 : i32, i32
  }
  func.func @transform_7(%arg0: i32) -> (i32, i32) {
    %c0_i32 = arith.constant 0 : i32
    %c0_i32_0 = arith.constant 0 : i32
    %c0_i32_1 = arith.constant 0 : i32
    return %c0_i32, %c0_i32_0 : i32, i32
  }
  func.func @transform_8(%arg0: i32) -> (i32, i32) {
    %c0_i32 = arith.constant 0 : i32
    %c0_i32_0 = arith.constant 0 : i32
    %c0_i32_1 = arith.constant 0 : i32
    return %c0_i32, %c0_i32_0 : i32, i32
  }
  func.func @transform_9(%arg0: i32) -> (i32, i32) {
    %c0_i32 = arith.constant 0 : i32
    %c0_i32_0 = arith.constant 0 : i32
    %c0_i32_1 = arith.constant 0 : i32
    return %c0_i32, %c0_i32_0 : i32, i32
  }
  func.func @transform_10(%arg0: i32) -> (i32, i32) {
    %c0_i32 = arith.constant 0 : i32
    %c0_i32_0 = arith.constant 0 : i32
    %c0_i32_1 = arith.constant 0 : i32
    return %c0_i32, %c0_i32_0 : i32, i32
  }
  func.func @transform_11(%arg0: i32) -> (i32, i32) {
    %c0_i32 = arith.constant 0 : i32
    %c0_i32_0 = arith.constant 0 : i32
    %c0_i32_1 = arith.constant 0 : i32
    return %c0_i32, %c0_i32_0 : i32, i32
  }
  func.func @transform_12(%arg0: i32) -> (i32, i32) {
    %c0_i32 = arith.constant 0 : i32
    %c0_i32_0 = arith.constant 0 : i32
    %c0_i32_1 = arith.constant 0 : i32
    return %c0_i32, %c0_i32_0 : i32, i32
  }
  func.func @transform_13(%arg0: i32) -> (i32, i32, i32) {
    %c0_i32 = arith.constant 0 : i32
    %c0_i32_0 = arith.constant 0 : i32
    %c0_i32_1 = arith.constant 0 : i32
    return %arg0, %c0_i32, %c0_i32_0 : i32, i32, i32
  }
}

module attributes {stable_mosaic.version = 11 : i64} {
  func.func @encoder_layer_kernel(%arg0: i32, %arg1: memref<1x16x128xf32, #tpu.memory_space<vmem>>, %arg2: memref<1x128xf32, #tpu.memory_space<vmem>>, %arg3: memref<1x128xf32, #tpu.memory_space<vmem>>, %arg4: memref<128x384xf32, #tpu.memory_space<vmem>>, %arg5: memref<1x384xf32, #tpu.memory_space<vmem>>, %arg6: memref<128x128xf32, #tpu.memory_space<vmem>>, %arg7: memref<1x128xf32, #tpu.memory_space<vmem>>, %arg8: memref<1x128xf32, #tpu.memory_space<vmem>>, %arg9: memref<1x128xf32, #tpu.memory_space<vmem>>, %arg10: memref<128x256xf32, #tpu.memory_space<vmem>>, %arg11: memref<1x256xf32, #tpu.memory_space<vmem>>, %arg12: memref<256x128xf32, #tpu.memory_space<vmem>>, %arg13: memref<1x128xf32, #tpu.memory_space<vmem>>, %arg14: memref<1x16x128xf32, #tpu.memory_space<vmem>>, %arg15: memref<1x16x384xf32, #tpu.memory_space<vmem>>, %arg16: memref<1x16x128xf32, #tpu.memory_space<vmem>>) attributes {dimension_semantics = [#tpu.dimension_semantics<parallel>], iteration_bounds = array<i64: 2>, scalar_prefetch = 0 : i64, scratch_operands = 2 : i64, tpu.core_type = #tpu.core_type<tc>, window_params = [{transform_indices = @transform_0, window_bounds = array<i64: 1, 16, 128>}, {pipeline_mode = #tpu.pipeline_mode<synchronous>, transform_indices = @transform_1, window_bounds = array<i64: 1, 128>}, {pipeline_mode = #tpu.pipeline_mode<synchronous>, transform_indices = @transform_2, window_bounds = array<i64: 1, 128>}, {pipeline_mode = #tpu.pipeline_mode<synchronous>, transform_indices = @transform_3, window_bounds = array<i64: 128, 384>}, {pipeline_mode = #tpu.pipeline_mode<synchronous>, transform_indices = @transform_4, window_bounds = array<i64: 1, 384>}, {pipeline_mode = #tpu.pipeline_mode<synchronous>, transform_indices = @transform_5, window_bounds = array<i64: 128, 128>}, {pipeline_mode = #tpu.pipeline_mode<synchronous>, transform_indices = @transform_6, window_bounds = array<i64: 1, 128>}, {pipeline_mode = #tpu.pipeline_mode<synchronous>, transform_indices = @transform_7, window_bounds = array<i64: 1, 128>}, {pipeline_mode = #tpu.pipeline_mode<synchronous>, transform_indices = @transform_8, window_bounds = array<i64: 1, 128>}, {pipeline_mode = #tpu.pipeline_mode<synchronous>, transform_indices = @transform_9, window_bounds = array<i64: 128, 256>}, {pipeline_mode = #tpu.pipeline_mode<synchronous>, transform_indices = @transform_10, window_bounds = array<i64: 1, 256>}, {pipeline_mode = #tpu.pipeline_mode<synchronous>, transform_indices = @transform_11, window_bounds = array<i64: 256, 128>}, {pipeline_mode = #tpu.pipeline_mode<synchronous>, transform_indices = @transform_12, window_bounds = array<i64: 1, 128>}, {transform_indices = @transform_13, window_bounds = array<i64: 1, 16, 128>}]} {
    %c0 = arith.constant 0 : index
    %c0_0 = arith.constant 0 : index
    %c0_1 = arith.constant 0 : index
    %0 = vector.load %arg1[%c0, %c0_0, %c0_1] : memref<1x16x128xf32, #tpu.memory_space<vmem>>, vector<1x16x128xf32>
    %1 = vector.shape_cast %0 : vector<1x16x128xf32> to vector<16x128xf32>
    %cst = arith.constant dense<0.000000e+00> : vector<16xf32>
    %2 = vector.multi_reduction <add>, %1, %cst [1] : vector<16x128xf32> to vector<16xf32>
    %3 = vector.shape_cast %2 : vector<16xf32> to vector<16x1xf32>
    %cst_2 = arith.constant 1.280000e+02 : f32
    %4 = vector.broadcast %cst_2 : f32 to vector<16x1xf32>
    %5 = arith.divf %3, %4 : vector<16x1xf32>
    %6 = vector.broadcast %5 : vector<16x1xf32> to vector<16x128xf32>
    %7 = arith.subf %1, %6 : vector<16x128xf32>
    %8 = arith.mulf %7, %7 : vector<16x128xf32>
    %cst_3 = arith.constant dense<0.000000e+00> : vector<16xf32>
    %9 = vector.multi_reduction <add>, %8, %cst_3 [1] : vector<16x128xf32> to vector<16xf32>
    %10 = vector.shape_cast %9 : vector<16xf32> to vector<16x1xf32>
    %cst_4 = arith.constant 1.280000e+02 : f32
    %11 = vector.broadcast %cst_4 : f32 to vector<16x1xf32>
    %12 = arith.divf %10, %11 : vector<16x1xf32>
    %13 = vector.broadcast %5 : vector<16x1xf32> to vector<16x128xf32>
    %14 = arith.subf %1, %13 : vector<16x128xf32>
    %cst_5 = arith.constant 9.99999974E-6 : f32
    %15 = vector.broadcast %cst_5 : f32 to vector<16x1xf32>
    %16 = arith.addf %12, %15 : vector<16x1xf32>
    %17 = math.rsqrt %16 : vector<16x1xf32>
    %18 = vector.broadcast %17 : vector<16x1xf32> to vector<16x128xf32>
    %19 = arith.mulf %14, %18 : vector<16x128xf32>
    %c0_6 = arith.constant 0 : index
    %c0_7 = arith.constant 0 : index
    %20 = vector.load %arg2[%c0_6, %c0_7] : memref<1x128xf32, #tpu.memory_space<vmem>>, vector<1x128xf32>
    %21 = vector.broadcast %20 : vector<1x128xf32> to vector<16x128xf32>
    %22 = arith.mulf %19, %21 : vector<16x128xf32>
    %c0_8 = arith.constant 0 : index
    %c0_9 = arith.constant 0 : index
    %23 = vector.load %arg3[%c0_8, %c0_9] : memref<1x128xf32, #tpu.memory_space<vmem>>, vector<1x128xf32>
    %24 = vector.broadcast %23 : vector<1x128xf32> to vector<16x128xf32>
    %25 = arith.addf %22, %24 : vector<16x128xf32>
    %c0_10 = arith.constant 0 : index
    %c0_11 = arith.constant 0 : index
    %26 = vector.load %arg4[%c0_10, %c0_11] : memref<128x384xf32, #tpu.memory_space<vmem>>, vector<128x384xf32>
    %cst_12 = arith.constant dense<0.000000e+00> : vector<16x384xf32>
    %27 = tpu.matmul %25, %26, %cst_12 {dimension_numbers = #tpu.dot_dimension_numbers<[1], [0], [0], [1], [0, 0, 1, 1], [], []>} : vector<16x128xf32>, vector<128x384xf32>, vector<16x384xf32> -> vector<16x384xf32>
    %c0_13 = arith.constant 0 : index
    %c0_14 = arith.constant 0 : index
    %28 = vector.load %arg5[%c0_13, %c0_14] : memref<1x384xf32, #tpu.memory_space<vmem>>, vector<1x384xf32>
    %29 = vector.broadcast %28 : vector<1x384xf32> to vector<16x384xf32>
    %30 = arith.addf %27, %29 : vector<16x384xf32>
    %31 = vector.shape_cast %30 : vector<16x384xf32> to vector<1x16x384xf32>
    %c0_15 = arith.constant 0 : index
    %c0_16 = arith.constant 0 : index
    %c0_17 = arith.constant 0 : index
    %32 = vector.load %arg15[%c0_15, %c0_16, %c0_17] : memref<1x16x384xf32, #tpu.memory_space<vmem>>, vector<1x16x384xf32>
    tpu.vector_store %arg15[%c0_15, %c0_16, %c0_17], %31 {strides = array<i32>} : memref<1x16x384xf32, #tpu.memory_space<vmem>>, vector<1x16x384xf32>,
    %c0_i32 = arith.constant 0 : i32
    %cst_18 = arith.constant 0.000000e+00 : f32
    %33 = vector.broadcast %cst_18 : f32 to vector<16x128xf32>
    %34 = arith.index_cast %c0_i32 : i32 to index
    %c0_19 = arith.constant 0 : index
    %c0_20 = arith.constant 0 : index
    %35 = vector.load %arg15[%34, %c0_19, %c0_20] : memref<1x16x384xf32, #tpu.memory_space<vmem>>, vector<1x16x32xf32>
    %36 = vector.shape_cast %35 : vector<1x16x32xf32> to vector<16x32xf32>
    %37 = arith.index_cast %c0_i32 : i32 to index
    %c0_21 = arith.constant 0 : index
    %c128 = arith.constant 128 : index
    %38 = vector.load %arg15[%37, %c0_21, %c128] : memref<1x16x384xf32, #tpu.memory_space<vmem>>, vector<1x16x32xf32>
    %39 = vector.shape_cast %38 : vector<1x16x32xf32> to vector<16x32xf32>
    %40 = arith.index_cast %c0_i32 : i32 to index
    %c0_22 = arith.constant 0 : index
    %c256 = arith.constant 256 : index
    %41 = vector.load %arg15[%40, %c0_22, %c256] : memref<1x16x384xf32, #tpu.memory_space<vmem>>, vector<1x16x32xf32>
    %42 = vector.shape_cast %41 : vector<1x16x32xf32> to vector<16x32xf32>
    %cst_23 = arith.constant dense<0.000000e+00> : vector<16x16xf32>
    %43 = tpu.matmul %36, %39, %cst_23 {dimension_numbers = #tpu.dot_dimension_numbers<[1], [1], [0], [0], [0, 0, 1, 0], [], []>} : vector<16x32xf32>, vector<16x32xf32>, vector<16x16xf32> -> vector<16x16xf32>
    %cst_24 = arith.constant dense<0xFF800000> : vector<16xf32>
    %44 = vector.multi_reduction <maximumf>, %43, %cst_24 [1] : vector<16x16xf32> to vector<16xf32>
    %45 = vector.shape_cast %44 : vector<16xf32> to vector<16x1xf32>
    %46 = vector.broadcast %45 : vector<16x1xf32> to vector<16x16xf32>
    %47 = arith.subf %43, %46 : vector<16x16xf32>
    %48 = math.exp %47 : vector<16x16xf32>
    %cst_25 = arith.constant dense<0.000000e+00> : vector<16xf32>
    %49 = vector.multi_reduction <add>, %48, %cst_25 [1] : vector<16x16xf32> to vector<16xf32>
    %50 = vector.shape_cast %49 : vector<16xf32> to vector<16x1xf32>
    %51 = vector.broadcast %50 : vector<16x1xf32> to vector<16x16xf32>
    %52 = arith.divf %48, %51 : vector<16x16xf32>
    %cst_26 = arith.constant dense<0.000000e+00> : vector<16x32xf32>
    %53 = tpu.matmul %52, %42, %cst_26 {dimension_numbers = #tpu.dot_dimension_numbers<[1], [0], [0], [1], [0, 0, 1, 1], [], []>} : vector<16x16xf32>, vector<16x32xf32>, vector<16x32xf32> -> vector<16x32xf32>
    %c0_27 = arith.constant 0 : index
    %c0_28 = arith.constant 0 : index
    %54 = vector.load %arg6[%c0_27, %c0_28] : memref<128x128xf32, #tpu.memory_space<vmem>>, vector<32x128xf32>
    %cst_29 = arith.constant dense<0.000000e+00> : vector<16x128xf32>
    %55 = tpu.matmul %53, %54, %cst_29 {dimension_numbers = #tpu.dot_dimension_numbers<[1], [0], [0], [1], [0, 0, 1, 1], [], []>} : vector<16x32xf32>, vector<32x128xf32>, vector<16x128xf32> -> vector<16x128xf32>
    %56 = arith.addf %33, %55 : vector<16x128xf32>
    %57 = arith.index_cast %c0_i32 : i32 to index
    %c0_30 = arith.constant 0 : index
    %c32 = arith.constant 32 : index
    %58 = vector.load %arg15[%57, %c0_30, %c32] : memref<1x16x384xf32, #tpu.memory_space<vmem>>, vector<1x16x32xf32>
    %59 = vector.shape_cast %58 : vector<1x16x32xf32> to vector<16x32xf32>
    %60 = arith.index_cast %c0_i32 : i32 to index
    %c0_31 = arith.constant 0 : index
    %c160 = arith.constant 160 : index
    %61 = vector.load %arg15[%60, %c0_31, %c160] : memref<1x16x384xf32, #tpu.memory_space<vmem>>, vector<1x16x32xf32>
    %62 = vector.shape_cast %61 : vector<1x16x32xf32> to vector<16x32xf32>
    %63 = arith.index_cast %c0_i32 : i32 to index
    %c0_32 = arith.constant 0 : index
    %c288 = arith.constant 288 : index
    %64 = vector.load %arg15[%63, %c0_32, %c288] : memref<1x16x384xf32, #tpu.memory_space<vmem>>, vector<1x16x32xf32>
    %65 = vector.shape_cast %64 : vector<1x16x32xf32> to vector<16x32xf32>
    %cst_33 = arith.constant dense<0.000000e+00> : vector<16x16xf32>
    %66 = tpu.matmul %59, %62, %cst_33 {dimension_numbers = #tpu.dot_dimension_numbers<[1], [1], [0], [0], [0, 0, 1, 0], [], []>} : vector<16x32xf32>, vector<16x32xf32>, vector<16x16xf32> -> vector<16x16xf32>
    %cst_34 = arith.constant dense<0xFF800000> : vector<16xf32>
    %67 = vector.multi_reduction <maximumf>, %66, %cst_34 [1] : vector<16x16xf32> to vector<16xf32>
    %68 = vector.shape_cast %67 : vector<16xf32> to vector<16x1xf32>
    %69 = vector.broadcast %68 : vector<16x1xf32> to vector<16x16xf32>
    %70 = arith.subf %66, %69 : vector<16x16xf32>
    %71 = math.exp %70 : vector<16x16xf32>
    %cst_35 = arith.constant dense<0.000000e+00> : vector<16xf32>
    %72 = vector.multi_reduction <add>, %71, %cst_35 [1] : vector<16x16xf32> to vector<16xf32>
    %73 = vector.shape_cast %72 : vector<16xf32> to vector<16x1xf32>
    %74 = vector.broadcast %73 : vector<16x1xf32> to vector<16x16xf32>
    %75 = arith.divf %71, %74 : vector<16x16xf32>
    %cst_36 = arith.constant dense<0.000000e+00> : vector<16x32xf32>
    %76 = tpu.matmul %75, %65, %cst_36 {dimension_numbers = #tpu.dot_dimension_numbers<[1], [0], [0], [1], [0, 0, 1, 1], [], []>} : vector<16x16xf32>, vector<16x32xf32>, vector<16x32xf32> -> vector<16x32xf32>
    %c32_37 = arith.constant 32 : index
    %c0_38 = arith.constant 0 : index
    %77 = vector.load %arg6[%c32_37, %c0_38] : memref<128x128xf32, #tpu.memory_space<vmem>>, vector<32x128xf32>
    %cst_39 = arith.constant dense<0.000000e+00> : vector<16x128xf32>
    %78 = tpu.matmul %76, %77, %cst_39 {dimension_numbers = #tpu.dot_dimension_numbers<[1], [0], [0], [1], [0, 0, 1, 1], [], []>} : vector<16x32xf32>, vector<32x128xf32>, vector<16x128xf32> -> vector<16x128xf32>
    %79 = arith.addf %56, %78 : vector<16x128xf32>
    %80 = arith.index_cast %c0_i32 : i32 to index
    %c0_40 = arith.constant 0 : index
    %c64 = arith.constant 64 : index
    %81 = vector.load %arg15[%80, %c0_40, %c64] : memref<1x16x384xf32, #tpu.memory_space<vmem>>, vector<1x16x32xf32>
    %82 = vector.shape_cast %81 : vector<1x16x32xf32> to vector<16x32xf32>
    %83 = arith.index_cast %c0_i32 : i32 to index
    %c0_41 = arith.constant 0 : index
    %c192 = arith.constant 192 : index
    %84 = vector.load %arg15[%83, %c0_41, %c192] : memref<1x16x384xf32, #tpu.memory_space<vmem>>, vector<1x16x32xf32>
    %85 = vector.shape_cast %84 : vector<1x16x32xf32> to vector<16x32xf32>
    %86 = arith.index_cast %c0_i32 : i32 to index
    %c0_42 = arith.constant 0 : index
    %c320 = arith.constant 320 : index
    %87 = vector.load %arg15[%86, %c0_42, %c320] : memref<1x16x384xf32, #tpu.memory_space<vmem>>, vector<1x16x32xf32>
    %88 = vector.shape_cast %87 : vector<1x16x32xf32> to vector<16x32xf32>
    %cst_43 = arith.constant dense<0.000000e+00> : vector<16x16xf32>
    %89 = tpu.matmul %82, %85, %cst_43 {dimension_numbers = #tpu.dot_dimension_numbers<[1], [1], [0], [0], [0, 0, 1, 0], [], []>} : vector<16x32xf32>, vector<16x32xf32>, vector<16x16xf32> -> vector<16x16xf32>
    %cst_44 = arith.constant dense<0xFF800000> : vector<16xf32>
    %90 = vector.multi_reduction <maximumf>, %89, %cst_44 [1] : vector<16x16xf32> to vector<16xf32>
    %91 = vector.shape_cast %90 : vector<16xf32> to vector<16x1xf32>
    %92 = vector.broadcast %91 : vector<16x1xf32> to vector<16x16xf32>
    %93 = arith.subf %89, %92 : vector<16x16xf32>
    %94 = math.exp %93 : vector<16x16xf32>
    %cst_45 = arith.constant dense<0.000000e+00> : vector<16xf32>
    %95 = vector.multi_reduction <add>, %94, %cst_45 [1] : vector<16x16xf32> to vector<16xf32>
    %96 = vector.shape_cast %95 : vector<16xf32> to vector<16x1xf32>
    %97 = vector.broadcast %96 : vector<16x1xf32> to vector<16x16xf32>
    %98 = arith.divf %94, %97 : vector<16x16xf32>
    %cst_46 = arith.constant dense<0.000000e+00> : vector<16x32xf32>
    %99 = tpu.matmul %98, %88, %cst_46 {dimension_numbers = #tpu.dot_dimension_numbers<[1], [0], [0], [1], [0, 0, 1, 1], [], []>} : vector<16x16xf32>, vector<16x32xf32>, vector<16x32xf32> -> vector<16x32xf32>
    %c64_47 = arith.constant 64 : index
    %c0_48 = arith.constant 0 : index
    %100 = vector.load %arg6[%c64_47, %c0_48] : memref<128x128xf32, #tpu.memory_space<vmem>>, vector<32x128xf32>
    %cst_49 = arith.constant dense<0.000000e+00> : vector<16x128xf32>
    %101 = tpu.matmul %99, %100, %cst_49 {dimension_numbers = #tpu.dot_dimension_numbers<[1], [0], [0], [1], [0, 0, 1, 1], [], []>} : vector<16x32xf32>, vector<32x128xf32>, vector<16x128xf32> -> vector<16x128xf32>
    %102 = arith.addf %79, %101 : vector<16x128xf32>
    %103 = arith.index_cast %c0_i32 : i32 to index
    %c0_50 = arith.constant 0 : index
    %c96 = arith.constant 96 : index
    %104 = vector.load %arg15[%103, %c0_50, %c96] : memref<1x16x384xf32, #tpu.memory_space<vmem>>, vector<1x16x32xf32>
    %105 = vector.shape_cast %104 : vector<1x16x32xf32> to vector<16x32xf32>
    %106 = arith.index_cast %c0_i32 : i32 to index
    %c0_51 = arith.constant 0 : index
    %c224 = arith.constant 224 : index
    %107 = vector.load %arg15[%106, %c0_51, %c224] : memref<1x16x384xf32, #tpu.memory_space<vmem>>, vector<1x16x32xf32>
    %108 = vector.shape_cast %107 : vector<1x16x32xf32> to vector<16x32xf32>
    %109 = arith.index_cast %c0_i32 : i32 to index
    %c0_52 = arith.constant 0 : index
    %c352 = arith.constant 352 : index
    %110 = vector.load %arg15[%109, %c0_52, %c352] : memref<1x16x384xf32, #tpu.memory_space<vmem>>, vector<1x16x32xf32>
    %111 = vector.shape_cast %110 : vector<1x16x32xf32> to vector<16x32xf32>
    %cst_53 = arith.constant dense<0.000000e+00> : vector<16x16xf32>
    %112 = tpu.matmul %105, %108, %cst_53 {dimension_numbers = #tpu.dot_dimension_numbers<[1], [1], [0], [0], [0, 0, 1, 0], [], []>} : vector<16x32xf32>, vector<16x32xf32>, vector<16x16xf32> -> vector<16x16xf32>
    %cst_54 = arith.constant dense<0xFF800000> : vector<16xf32>
    %113 = vector.multi_reduction <maximumf>, %112, %cst_54 [1] : vector<16x16xf32> to vector<16xf32>
    %114 = vector.shape_cast %113 : vector<16xf32> to vector<16x1xf32>
    %115 = vector.broadcast %114 : vector<16x1xf32> to vector<16x16xf32>
    %116 = arith.subf %112, %115 : vector<16x16xf32>
    %117 = math.exp %116 : vector<16x16xf32>
    %cst_55 = arith.constant dense<0.000000e+00> : vector<16xf32>
    %118 = vector.multi_reduction <add>, %117, %cst_55 [1] : vector<16x16xf32> to vector<16xf32>
    %119 = vector.shape_cast %118 : vector<16xf32> to vector<16x1xf32>
    %120 = vector.broadcast %119 : vector<16x1xf32> to vector<16x16xf32>
    %121 = arith.divf %117, %120 : vector<16x16xf32>
    %cst_56 = arith.constant dense<0.000000e+00> : vector<16x32xf32>
    %122 = tpu.matmul %121, %111, %cst_56 {dimension_numbers = #tpu.dot_dimension_numbers<[1], [0], [0], [1], [0, 0, 1, 1], [], []>} : vector<16x16xf32>, vector<16x32xf32>, vector<16x32xf32> -> vector<16x32xf32>
    %c96_57 = arith.constant 96 : index
    %c0_58 = arith.constant 0 : index
    %123 = vector.load %arg6[%c96_57, %c0_58] : memref<128x128xf32, #tpu.memory_space<vmem>>, vector<32x128xf32>
    %cst_59 = arith.constant dense<0.000000e+00> : vector<16x128xf32>
    %124 = tpu.matmul %122, %123, %cst_59 {dimension_numbers = #tpu.dot_dimension_numbers<[1], [0], [0], [1], [0, 0, 1, 1], [], []>} : vector<16x32xf32>, vector<32x128xf32>, vector<16x128xf32> -> vector<16x128xf32>
    %125 = arith.addf %102, %124 : vector<16x128xf32>
    %c0_60 = arith.constant 0 : index
    %c0_61 = arith.constant 0 : index
    %126 = vector.load %arg7[%c0_60, %c0_61] : memref<1x128xf32, #tpu.memory_space<vmem>>, vector<1x128xf32>
    %127 = vector.broadcast %126 : vector<1x128xf32> to vector<16x128xf32>
    %128 = arith.addf %125, %127 : vector<16x128xf32>
    %129 = arith.index_cast %c0_i32 : i32 to index
    %c0_62 = arith.constant 0 : index
    %c0_63 = arith.constant 0 : index
    %130 = vector.load %arg1[%129, %c0_62, %c0_63] : memref<1x16x128xf32, #tpu.memory_space<vmem>>, vector<1x16x128xf32>
    %131 = vector.shape_cast %130 : vector<1x16x128xf32> to vector<16x128xf32>
    %132 = arith.addf %128, %131 : vector<16x128xf32>
    %cst_64 = arith.constant dense<0.000000e+00> : vector<16xf32>
    %133 = vector.multi_reduction <add>, %132, %cst_64 [1] : vector<16x128xf32> to vector<16xf32>
    %134 = vector.shape_cast %133 : vector<16xf32> to vector<16x1xf32>
    %cst_65 = arith.constant 1.280000e+02 : f32
    %135 = vector.broadcast %cst_65 : f32 to vector<16x1xf32>
    %136 = arith.divf %134, %135 : vector<16x1xf32>
    %137 = vector.broadcast %136 : vector<16x1xf32> to vector<16x128xf32>
    %138 = arith.subf %132, %137 : vector<16x128xf32>
    %139 = arith.mulf %138, %138 : vector<16x128xf32>
    %cst_66 = arith.constant dense<0.000000e+00> : vector<16xf32>
    %140 = vector.multi_reduction <add>, %139, %cst_66 [1] : vector<16x128xf32> to vector<16xf32>
    %141 = vector.shape_cast %140 : vector<16xf32> to vector<16x1xf32>
    %cst_67 = arith.constant 1.280000e+02 : f32
    %142 = vector.broadcast %cst_67 : f32 to vector<16x1xf32>
    %143 = arith.divf %141, %142 : vector<16x1xf32>
    %144 = vector.broadcast %136 : vector<16x1xf32> to vector<16x128xf32>
    %145 = arith.subf %132, %144 : vector<16x128xf32>
    %cst_68 = arith.constant 9.99999974E-6 : f32
    %146 = vector.broadcast %cst_68 : f32 to vector<16x1xf32>
    %147 = arith.addf %143, %146 : vector<16x1xf32>
    %148 = math.rsqrt %147 : vector<16x1xf32>
    %149 = vector.broadcast %148 : vector<16x1xf32> to vector<16x128xf32>
    %150 = arith.mulf %145, %149 : vector<16x128xf32>
    %c0_69 = arith.constant 0 : index
    %c0_70 = arith.constant 0 : index
    %151 = vector.load %arg8[%c0_69, %c0_70] : memref<1x128xf32, #tpu.memory_space<vmem>>, vector<1x128xf32>
    %152 = vector.broadcast %151 : vector<1x128xf32> to vector<16x128xf32>
    %153 = arith.mulf %150, %152 : vector<16x128xf32>
    %c0_71 = arith.constant 0 : index
    %c0_72 = arith.constant 0 : index
    %154 = vector.load %arg9[%c0_71, %c0_72] : memref<1x128xf32, #tpu.memory_space<vmem>>, vector<1x128xf32>
    %155 = vector.broadcast %154 : vector<1x128xf32> to vector<16x128xf32>
    %156 = arith.addf %153, %155 : vector<16x128xf32>
    %157 = arith.index_cast %c0_i32 : i32 to index
    %c0_73 = arith.constant 0 : index
    %c0_74 = arith.constant 0 : index
    %158 = vector.load %arg16[%157, %c0_73, %c0_74] : memref<1x16x128xf32, #tpu.memory_space<vmem>>, vector<1x16x128xf32>
    %159 = vector.shape_cast %158 : vector<1x16x128xf32> to vector<16x128xf32>
    %160 = vector.shape_cast %156 : vector<16x128xf32> to vector<1x16x128xf32>
    tpu.vector_store %arg16[%157, %c0_73, %c0_74], %160 {strides = array<i32>} : memref<1x16x128xf32, #tpu.memory_space<vmem>>, vector<1x16x128xf32>,
    %c1_i32 = arith.constant 1 : i32
    %c0_75 = arith.constant 0 : index
    %c0_76 = arith.constant 0 : index
    %c0_77 = arith.constant 0 : index
    %161 = vector.load %arg16[%c0_75, %c0_76, %c0_77] : memref<1x16x128xf32, #tpu.memory_space<vmem>>, vector<1x16x128xf32>
    %162 = vector.shape_cast %161 : vector<1x16x128xf32> to vector<16x128xf32>
    %c0_78 = arith.constant 0 : index
    %c0_79 = arith.constant 0 : index
    %163 = vector.load %arg10[%c0_78, %c0_79] : memref<128x256xf32, #tpu.memory_space<vmem>>, vector<128x256xf32>
    %cst_80 = arith.constant dense<0.000000e+00> : vector<16x256xf32>
    %164 = tpu.matmul %162, %163, %cst_80 {dimension_numbers = #tpu.dot_dimension_numbers<[1], [0], [0], [1], [0, 0, 1, 1], [], []>} : vector<16x128xf32>, vector<128x256xf32>, vector<16x256xf32> -> vector<16x256xf32>
    %c0_81 = arith.constant 0 : index
    %c0_82 = arith.constant 0 : index
    %165 = vector.load %arg11[%c0_81, %c0_82] : memref<1x256xf32, #tpu.memory_space<vmem>>, vector<1x256xf32>
    %166 = vector.broadcast %165 : vector<1x256xf32> to vector<16x256xf32>
    %167 = arith.addf %164, %166 : vector<16x256xf32>
    %cst_83 = arith.constant 0.000000e+00 : f32
    %168 = vector.broadcast %cst_83 : f32 to vector<16x256xf32>
    %169 = arith.maximumf %167, %168 : vector<16x256xf32>
    %c0_84 = arith.constant 0 : index
    %c0_85 = arith.constant 0 : index
    %170 = vector.load %arg12[%c0_84, %c0_85] : memref<256x128xf32, #tpu.memory_space<vmem>>, vector<256x128xf32>
    %cst_86 = arith.constant dense<0.000000e+00> : vector<16x128xf32>
    %171 = tpu.matmul %169, %170, %cst_86 {dimension_numbers = #tpu.dot_dimension_numbers<[1], [0], [0], [1], [0, 0, 1, 1], [], []>} : vector<16x256xf32>, vector<256x128xf32>, vector<16x128xf32> -> vector<16x128xf32>
    %c0_87 = arith.constant 0 : index
    %c0_88 = arith.constant 0 : index
    %172 = vector.load %arg13[%c0_87, %c0_88] : memref<1x128xf32, #tpu.memory_space<vmem>>, vector<1x128xf32>
    %173 = vector.broadcast %172 : vector<1x128xf32> to vector<16x128xf32>
    %174 = arith.addf %171, %173 : vector<16x128xf32>
    %175 = vector.shape_cast %174 : vector<16x128xf32> to vector<1x16x128xf32>
    %c0_89 = arith.constant 0 : index
    %c0_90 = arith.constant 0 : index
    %c0_91 = arith.constant 0 : index
    %176 = vector.load %arg14[%c0_89, %c0_90, %c0_91] : memref<1x16x128xf32, #tpu.memory_space<vmem>>, vector<1x16x128xf32>
    tpu.vector_store %arg14[%c0_89, %c0_90, %c0_91], %175 {strides = array<i32>} : memref<1x16x128xf32, #tpu.memory_space<vmem>>, vector<1x16x128xf32>,
    return
  }
  func.func @transform_0(%arg0: i32) -> (i32, i32, i32) {
    %c0_i32 = arith.constant 0 : i32
    %c0_i32_0 = arith.constant 0 : i32
    %c0_i32_1 = arith.constant 0 : i32
    return %arg0, %c0_i32, %c0_i32_0 : i32, i32, i32
  }
  func.func @transform_1(%arg0: i32) -> (i32, i32) {
    %c0_i32 = arith.constant 0 : i32
    %c0_i32_0 = arith.constant 0 : i32
    %c0_i32_1 = arith.constant 0 : i32
    return %c0_i32, %c0_i32_0 : i32, i32
  }
  func.func @transform_2(%arg0: i32) -> (i32, i32) {
    %c0_i32 = arith.constant 0 : i32
    %c0_i32_0 = arith.constant 0 : i32
    %c0_i32_1 = arith.constant 0 : i32
    return %c0_i32, %c0_i32_0 : i32, i32
  }
  func.func @transform_3(%arg0: i32) -> (i32, i32) {
    %c0_i32 = arith.constant 0 : i32
    %c0_i32_0 = arith.constant 0 : i32
    %c0_i32_1 = arith.constant 0 : i32
    return %c0_i32, %c0_i32_0 : i32, i32
  }
  func.func @transform_4(%arg0: i32) -> (i32, i32) {
    %c0_i32 = arith.constant 0 : i32
    %c0_i32_0 = arith.constant 0 : i32
    %c0_i32_1 = arith.constant 0 : i32
    return %c0_i32, %c0_i32_0 : i32, i32
  }
  func.func @transform_5(%arg0: i32) -> (i32, i32) {
    %c0_i32 = arith.constant 0 : i32
    %c0_i32_0 = arith.constant 0 : i32
    %c0_i32_1 = arith.constant 0 : i32
    return %c0_i32, %c0_i32_0 : i32, i32
  }
  func.func @transform_6(%arg0: i32) -> (i32, i32) {
    %c0_i32 = arith.constant 0 : i32
    %c0_i32_0 = arith.constant 0 : i32
    %c0_i32_1 = arith.constant 0 : i32
    return %c0_i32, %c0_i32_0 : i32, i32
  }
  func.func @transform_7(%arg0: i32) -> (i32, i32) {
    %c0_i32 = arith.constant 0 : i32
    %c0_i32_0 = arith.constant 0 : i32
    %c0_i32_1 = arith.constant 0 : i32
    return %c0_i32, %c0_i32_0 : i32, i32
  }
  func.func @transform_8(%arg0: i32) -> (i32, i32) {
    %c0_i32 = arith.constant 0 : i32
    %c0_i32_0 = arith.constant 0 : i32
    %c0_i32_1 = arith.constant 0 : i32
    return %c0_i32, %c0_i32_0 : i32, i32
  }
  func.func @transform_9(%arg0: i32) -> (i32, i32) {
    %c0_i32 = arith.constant 0 : i32
    %c0_i32_0 = arith.constant 0 : i32
    %c0_i32_1 = arith.constant 0 : i32
    return %c0_i32, %c0_i32_0 : i32, i32
  }
  func.func @transform_10(%arg0: i32) -> (i32, i32) {
    %c0_i32 = arith.constant 0 : i32
    %c0_i32_0 = arith.constant 0 : i32
    %c0_i32_1 = arith.constant 0 : i32
    return %c0_i32, %c0_i32_0 : i32, i32
  }
  func.func @transform_11(%arg0: i32) -> (i32, i32) {
    %c0_i32 = arith.constant 0 : i32
    %c0_i32_0 = arith.constant 0 : i32
    %c0_i32_1 = arith.constant 0 : i32
    return %c0_i32, %c0_i32_0 : i32, i32
  }
  func.func @transform_12(%arg0: i32) -> (i32, i32) {
    %c0_i32 = arith.constant 0 : i32
    %c0_i32_0 = arith.constant 0 : i32
    %c0_i32_1 = arith.constant 0 : i32
    return %c0_i32, %c0_i32_0 : i32, i32
  }
  func.func @transform_13(%arg0: i32) -> (i32, i32, i32) {
    %c0_i32 = arith.constant 0 : i32
    %c0_i32_0 = arith.constant 0 : i32
    %c0_i32_1 = arith.constant 0 : i32
    return %arg0, %c0_i32, %c0_i32_0 : i32, i32, i32
  }
}

</mosaic_0001>

<llo_original>
// kernel: tpu_custom_call.1
$region0: #{tpu_custom_call.1}
  #allocation0 [shape = 'u32[]', space=smem, size = 0x4, offset = 0x4, fixed_abs, tag = 'smem constant byte address 0x4 - core index']
  #allocation1 [shape = 'u32[144,128]{1,0:T(1,128)}', space=vmem, size = 0x12000, scoped, tag = 'internal scratch']
  #allocation2 [shape = 'f32[1,16,384]{2,1,0:T(8,128)}', space=vmem, size = 0x6000, scoped, tag = 'scratch operand']
  #allocation3 [shape = 'f32[1,16,128]{2,1,0:T(8,128)}', space=vmem, size = 0x2000, scoped, tag = 'scratch operand']
  %s0 = inlined_call_operand.hbm [shape: f32[2,16,128], index: 0, kind: input, shape index: {}]
  %s1 = inlined_call_operand.vmem [shape: f32[1,128], index: 1, kind: input, shape index: {}]
  %s2 = inlined_call_operand.vmem [shape: f32[1,128], index: 2, kind: input, shape index: {}]
  %s3 = inlined_call_operand.hbm [shape: f32[128,384], index: 3, kind: input, shape index: {}]
  %s4 = inlined_call_operand.vmem [shape: f32[1,384], index: 4, kind: input, shape index: {}]
  %s5 = inlined_call_operand.hbm [shape: f32[128,128], index: 5, kind: input, shape index: {}]
  %s6 = inlined_call_operand.vmem [shape: f32[1,128], index: 6, kind: input, shape index: {}]
  %s7 = inlined_call_operand.vmem [shape: f32[1,128], index: 7, kind: input, shape index: {}]
  %s8 = inlined_call_operand.vmem [shape: f32[1,128], index: 8, kind: input, shape index: {}]
  %s9 = inlined_call_operand.hbm [shape: f32[128,256], index: 9, kind: input, shape index: {}]
  %s10 = inlined_call_operand.vmem [shape: f32[1,256], index: 10, kind: input, shape index: {}]
  %s11 = inlined_call_operand.hbm [shape: f32[256,128], index: 11, kind: input, shape index: {}]
  %s12 = inlined_call_operand.vmem [shape: f32[1,128], index: 12, kind: input, shape index: {}]
  %s13 = inlined_call_operand.hbm [shape: f32[2,16,128], index: 13, kind: output, shape index: {}]
  %s14 = sld [smem:[#allocation0]]
  $region105: #{tpu_custom_call.1} parent=0
    _
  %s16 = ssub.s32 1, %s14
  %s17 = scalar_select 0, %s16, %s14
  $region1: #{tpu_custom_call.1} parent=0
    #allocation4 [shape = 'u8[16384]{0}', space=vmem, size = 0x4000, scoped, tag = 'input window, operand 0']
    #allocation5 [shape = 's32[2]{0}', space=sflag, size = 0x8, scoped, tag = 'scoped memory for tpu_custom_call.1']
    #allocation6 [shape = 's32[2]{0}', space=sflag, size = 0x8, scoped, tag = 'scoped memory for tpu_custom_call.1']
    #allocation7 [shape = 'u8[196608]{0}', space=vmem, size = 0x30000, scoped, tag = 'input window, operand 3, single buffered']
    #allocation8 [shape = 's32[1]{0}', space=sflag, size = 0x4, scoped, tag = 'scoped memory for tpu_custom_call.1']
    #allocation9 [shape = 'u8[65536]{0}', space=vmem, size = 0x10000, scoped, tag = 'input window, operand 5, single buffered']
    #allocation10 [shape = 'u8[131072]{0}', space=vmem, size = 0x20000, scoped, tag = 'input window, operand 9, single buffered']
    #allocation11 [shape = 's32[1]{0}', space=sflag, size = 0x4, scoped, tag = 'scoped memory for tpu_custom_call.1']
    #allocation12 [shape = 'u8[131072]{0}', space=vmem, size = 0x20000, scoped, tag = 'input window, operand 11, single buffered']
    #allocation13 [shape = 'u8[16384]{0}', space=vmem, size = 0x4000, scoped, tag = 'output window, operand 0']
    %18 = vsyncpa [#allocation5], 0
    %s19 = scalar_lea.sflag [#allocation5], 1
    %20 = vsyncpa %s19, 0
    %21 = vsyncpa [#allocation8], 0
    %22 = vsyncpa [#allocation11], 0
    %23 = vsyncpa [#allocation6], 0
    %s24 = scalar_lea.sflag [#allocation6], 1
    %25 = vsyncpa %s24, 0
    loop: start=0, step=1, limit=4
    $region2: #{tpu_custom_call.1} parent=1 // loop_pre_header
      _
    $region3: #{tpu_custom_call.1} parent=1 // loop_header
      %s27 = sphi 0, %s31
      %p28 = scmp.ge.s32.totalorder %s27, 4
      %s37 = sphi 0, %s39
      %s40 = sphi 0, %s37
      %s41 = sphi 0, %s40
      %s57 = sphi 0, %s41
      %s61 = sphi 0, %s61
      %s63 = sphi 0, %s61
      %s64 = sphi 0, %s63
      %s78 = sphi 0, %s64
      %s82 = sphi 0, %s82
      %s84 = sphi 0, %s82
      %s85 = sphi 0, %s84
      %s99 = sphi 0, %s85
      %s103 = sphi 0, %s103
      %s105 = sphi 0, %s103
      %s106 = sphi 0, %s105
      %s120 = sphi 0, %s106
      %s124 = sphi 0, %s124
      %s126 = sphi 0, %s124
      %s127 = sphi 0, %s126
      %s141 = sphi 0, %s127
      %s145 = sphi 0, %s145
      %s147 = sphi 0, %s145
      %s148 = sphi 0, %s147
      %s162 = sphi 0, %s148
      %s166 = sphi 0, %s166
      %s168 = sphi 0, %s166
      %s169 = sphi 0, %s168
      %s183 = sphi 0, %s169
      %s187 = sphi 0, %s187
      %s189 = sphi 0, %s187
      %s190 = sphi 0, %s189
      %s204 = sphi 0, %s190
      %s208 = sphi 0, %s208
      %s210 = sphi 0, %s208
      %s211 = sphi 0, %s210
      %s225 = sphi 0, %s211
      %s229 = sphi 0, %s229
      %s231 = sphi 0, %s229
      %s232 = sphi 0, %s231
      %s246 = sphi 0, %s232
      %s250 = sphi 0, %s250
      %s252 = sphi 0, %s250
      %s253 = sphi 0, %s252
      %s267 = sphi 0, %s253
      %s271 = sphi 0, %s271
      %s273 = sphi 0, %s271
      %s274 = sphi 0, %s273
      %s288 = sphi 0, %s274
      %s292 = sphi 0, %s292
      %s294 = sphi 0, %s292
      %s295 = sphi 0, %s294
      %s309 = sphi 0, %s295
      %s315 = sphi 0, %s317
      %s318 = sphi 0, %s315
      %s319 = sphi 0, %s318
      %s335 = sphi 0, %s319
    $region4: #{tpu_custom_call.1} parent=1 // loop_header_branch
      %30 = sbr.rel (%p28) target = $region8
    $region5: #{tpu_custom_call.1} parent=1 // loop_body
      %s32 = ssub.s32 %s27, 1
      %s33 = ssub.s32 %s27, 2
      %s34 = sadd.s32 %s27, 1
      %s35 = ssub.s32 %s27, %s34
      %p36 = scmp.eq.s32.totalorder %s35, 0
      %s38 = sadd.s32 %s37, 1
      %s39 = scalar_select %p36, %s37, %s38
      %p42 = pneg %p36
      %p43 = scmp.eq.s32.totalorder %s27, 1
      %p44 = por %p42, %p43
      %p45 = scmp.ne.s32.totalorder %s37, %s40
      %p46 = scmp.eq.s32.totalorder %s27, 0
      %p47 = por %p45, %p46
      %p48 = scmp.ne.s32.totalorder %s37, %s40
      %p49 = scmp.eq.s32.totalorder %s32, 1
      %p50 = por %p48, %p49
      %p51 = scmp.ne.s32.totalorder %s40, %s41
      %p52 = scmp.eq.s32.totalorder %s32, 0
      %p53 = por %p51, %p52
      %p54 = scmp.ne.s32.totalorder %s40, %s41
      %p55 = scmp.eq.s32.totalorder %s33, 1
      %p56 = por %p54, %p55
      %p58 = scmp.ne.s32.totalorder %s41, %s57
      %p59 = scmp.eq.s32.totalorder %s33, 0
      %p60 = por %p58, %p59
      %s62 = sadd.s32 %s61, 1
      %p65 = scmp.eq.s32.totalorder %s27, 1
      %p66 = scmp.ne.s32.totalorder %s61, %s63
      %p67 = scmp.eq.s32.totalorder %s27, 0
      %p68 = por %p66, %p67
      %p69 = scmp.ne.s32.totalorder %s61, %s63
      %p70 = scmp.eq.s32.totalorder %s32, 1
      %p71 = por %p69, %p70
      %p72 = scmp.ne.s32.totalorder %s63, %s64
      %p73 = scmp.eq.s32.totalorder %s32, 0
      %p74 = por %p72, %p73
      %p75 = scmp.ne.s32.totalorder %s63, %s64
      %p76 = scmp.eq.s32.totalorder %s33, 1
      %p77 = por %p75, %p76
      %p79 = scmp.ne.s32.totalorder %s64, %s78
      %p80 = scmp.eq.s32.totalorder %s33, 0
      %p81 = por %p79, %p80
      %s83 = sadd.s32 %s82, 1
      %p86 = scmp.eq.s32.totalorder %s27, 1
      %p87 = scmp.ne.s32.totalorder %s82, %s84
      %p88 = scmp.eq.s32.totalorder %s27, 0
      %p89 = por %p87, %p88
      %p90 = scmp.ne.s32.totalorder %s82, %s84
      %p91 = scmp.eq.s32.totalorder %s32, 1
      %p92 = por %p90, %p91
      %p93 = scmp.ne.s32.totalorder %s84, %s85
      %p94 = scmp.eq.s32.totalorder %s32, 0
      %p95 = por %p93, %p94
      %p96 = scmp.ne.s32.totalorder %s84, %s85
      %p97 = scmp.eq.s32.totalorder %s33, 1
      %p98 = por %p96, %p97
      %p100 = scmp.ne.s32.totalorder %s85, %s99
      %p101 = scmp.eq.s32.totalorder %s33, 0
      %p102 = por %p100, %p101
      %s104 = sadd.s32 %s103, 1
      %p107 = scmp.eq.s32.totalorder %s27, 1
      %p108 = scmp.ne.s32.totalorder %s103, %s105
      %p109 = scmp.eq.s32.totalorder %s27, 0
      %p110 = por %p108, %p109
      %p111 = scmp.ne.s32.totalorder %s103, %s105
      %p112 = scmp.eq.s32.totalorder %s32, 1
      %p113 = por %p111, %p112
      %p114 = scmp.ne.s32.totalorder %s105, %s106
      %p115 = scmp.eq.s32.totalorder %s32, 0
      %p116 = por %p114, %p115
      %p117 = scmp.ne.s32.totalorder %s105, %s106
      %p118 = scmp.eq.s32.totalorder %s33, 1
      %p119 = por %p117, %p118
      %p121 = scmp.ne.s32.totalorder %s106, %s120
      %p122 = scmp.eq.s32.totalorder %s33, 0
      %p123 = por %p121, %p122
      %s125 = sadd.s32 %s124, 1
      %p128 = scmp.eq.s32.totalorder %s27, 1
      %p129 = scmp.ne.s32.totalorder %s124, %s126
      %p130 = scmp.eq.s32.totalorder %s27, 0
      %p131 = por %p129, %p130
      %p132 = scmp.ne.s32.totalorder %s124, %s126
      %p133 = scmp.eq.s32.totalorder %s32, 1
      %p134 = por %p132, %p133
      %p135 = scmp.ne.s32.totalorder %s126, %s127
      %p136 = scmp.eq.s32.totalorder %s32, 0
      %p137 = por %p135, %p136
      %p138 = scmp.ne.s32.totalorder %s126, %s127
      %p139 = scmp.eq.s32.totalorder %s33, 1
      %p140 = por %p138, %p139
      %p142 = scmp.ne.s32.totalorder %s127, %s141
      %p143 = scmp.eq.s32.totalorder %s33, 0
      %p144 = por %p142, %p143
      %s146 = sadd.s32 %s145, 1
      %p149 = scmp.eq.s32.totalorder %s27, 1
      %p150 = scmp.ne.s32.totalorder %s145, %s147
      %p151 = scmp.eq.s32.totalorder %s27, 0
      %p152 = por %p150, %p151
      %p153 = scmp.ne.s32.totalorder %s145, %s147
      %p154 = scmp.eq.s32.totalorder %s32, 1
      %p155 = por %p153, %p154
      %p156 = scmp.ne.s32.totalorder %s147, %s148
      %p157 = scmp.eq.s32.totalorder %s32, 0
      %p158 = por %p156, %p157
      %p159 = scmp.ne.s32.totalorder %s147, %s148
      %p160 = scmp.eq.s32.totalorder %s33, 1
      %p161 = por %p159, %p160
      %p163 = scmp.ne.s32.totalorder %s148, %s162
      %p164 = scmp.eq.s32.totalorder %s33, 0
      %p165 = por %p163, %p164
      %s167 = sadd.s32 %s166, 1
      %p170 = scmp.eq.s32.totalorder %s27, 1
      %p171 = scmp.ne.s32.totalorder %s166, %s168
      %p172 = scmp.eq.s32.totalorder %s27, 0
      %p173 = por %p171, %p172
      %p174 = scmp.ne.s32.totalorder %s166, %s168
      %p175 = scmp.eq.s32.totalorder %s32, 1
      %p176 = por %p174, %p175
      %p177 = scmp.ne.s32.totalorder %s168, %s169
      %p178 = scmp.eq.s32.totalorder %s32, 0
      %p179 = por %p177, %p178
      %p180 = scmp.ne.s32.totalorder %s168, %s169
      %p181 = scmp.eq.s32.totalorder %s33, 1
      %p182 = por %p180, %p181
      %p184 = scmp.ne.s32.totalorder %s169, %s183
      %p185 = scmp.eq.s32.totalorder %s33, 0
      %p186 = por %p184, %p185
      %s188 = sadd.s32 %s187, 1
      %p191 = scmp.eq.s32.totalorder %s27, 1
      %p192 = scmp.ne.s32.totalorder %s187, %s189
      %p193 = scmp.eq.s32.totalorder %s27, 0
      %p194 = por %p192, %p193
      %p195 = scmp.ne.s32.totalorder %s187, %s189
      %p196 = scmp.eq.s32.totalorder %s32, 1
      %p197 = por %p195, %p196
      %p198 = scmp.ne.s32.totalorder %s189, %s190
      %p199 = scmp.eq.s32.totalorder %s32, 0
      %p200 = por %p198, %p199
      %p201 = scmp.ne.s32.totalorder %s189, %s190
      %p202 = scmp.eq.s32.totalorder %s33, 1
      %p203 = por %p201, %p202
      %p205 = scmp.ne.s32.totalorder %s190, %s204
      %p206 = scmp.eq.s32.totalorder %s33, 0
      %p207 = por %p205, %p206
      %s209 = sadd.s32 %s208, 1
      %p212 = scmp.eq.s32.totalorder %s27, 1
      %p213 = scmp.ne.s32.totalorder %s208, %s210
      %p214 = scmp.eq.s32.totalorder %s27, 0
      %p215 = por %p213, %p214
      %p216 = scmp.ne.s32.totalorder %s208, %s210
      %p217 = scmp.eq.s32.totalorder %s32, 1
      %p218 = por %p216, %p217
      %p219 = scmp.ne.s32.totalorder %s210, %s211
      %p220 = scmp.eq.s32.totalorder %s32, 0
      %p221 = por %p219, %p220
      %p222 = scmp.ne.s32.totalorder %s210, %s211
      %p223 = scmp.eq.s32.totalorder %s33, 1
      %p224 = por %p222, %p223
      %p226 = scmp.ne.s32.totalorder %s211, %s225
      %p227 = scmp.eq.s32.totalorder %s33, 0
      %p228 = por %p226, %p227
      %s230 = sadd.s32 %s229, 1
      %p233 = scmp.eq.s32.totalorder %s27, 1
      %p234 = scmp.ne.s32.totalorder %s229, %s231
      %p235 = scmp.eq.s32.totalorder %s27, 0
      %p236 = por %p234, %p235
      %p237 = scmp.ne.s32.totalorder %s229, %s231
      %p238 = scmp.eq.s32.totalorder %s32, 1
      %p239 = por %p237, %p238
      %p240 = scmp.ne.s32.totalorder %s231, %s232
      %p241 = scmp.eq.s32.totalorder %s32, 0
      %p242 = por %p240, %p241
      %p243 = scmp.ne.s32.totalorder %s231, %s232
      %p244 = scmp.eq.s32.totalorder %s33, 1
      %p245 = por %p243, %p244
      %p247 = scmp.ne.s32.totalorder %s232, %s246
      %p248 = scmp.eq.s32.totalorder %s33, 0
      %p249 = por %p247, %p248
      %s251 = sadd.s32 %s250, 1
      %p254 = scmp.eq.s32.totalorder %s27, 1
      %p255 = scmp.ne.s32.totalorder %s250, %s252
      %p256 = scmp.eq.s32.totalorder %s27, 0
      %p257 = por %p255, %p256
      %p258 = scmp.ne.s32.totalorder %s250, %s252
      %p259 = scmp.eq.s32.totalorder %s32, 1
      %p260 = por %p258, %p259
      %p261 = scmp.ne.s32.totalorder %s252, %s253
      %p262 = scmp.eq.s32.totalorder %s32, 0
      %p263 = por %p261, %p262
      %p264 = scmp.ne.s32.totalorder %s252, %s253
      %p265 = scmp.eq.s32.totalorder %s33, 1
      %p266 = por %p264, %p265
      %p268 = scmp.ne.s32.totalorder %s253, %s267
      %p269 = scmp.eq.s32.totalorder %s33, 0
      %p270 = por %p268, %p269
      %s272 = sadd.s32 %s271, 1
      %p275 = scmp.eq.s32.totalorder %s27, 1
      %p276 = scmp.ne.s32.totalorder %s271, %s273
      %p277 = scmp.eq.s32.totalorder %s27, 0
      %p278 = por %p276, %p277
      %p279 = scmp.ne.s32.totalorder %s271, %s273
      %p280 = scmp.eq.s32.totalorder %s32, 1
      %p281 = por %p279, %p280
      %p282 = scmp.ne.s32.totalorder %s273, %s274
      %p283 = scmp.eq.s32.totalorder %s32, 0
      %p284 = por %p282, %p283
      %p285 = scmp.ne.s32.totalorder %s273, %s274
      %p286 = scmp.eq.s32.totalorder %s33, 1
      %p287 = por %p285, %p286
      %p289 = scmp.ne.s32.totalorder %s274, %s288
      %p290 = scmp.eq.s32.totalorder %s33, 0
      %p291 = por %p289, %p290
      %s293 = sadd.s32 %s292, 1
      %p296 = scmp.eq.s32.totalorder %s27, 1
      %p297 = scmp.ne.s32.totalorder %s292, %s294
      %p298 = scmp.eq.s32.totalorder %s27, 0
      %p299 = por %p297, %p298
      %p300 = scmp.ne.s32.totalorder %s292, %s294
      %p301 = scmp.eq.s32.totalorder %s32, 1
      %p302 = por %p300, %p301
      %p303 = scmp.ne.s32.totalorder %s294, %s295
      %p304 = scmp.eq.s32.totalorder %s32, 0
      %p305 = por %p303, %p304
      %p306 = scmp.ne.s32.totalorder %s294, %s295
      %p307 = scmp.eq.s32.totalorder %s33, 1
      %p308 = por %p306, %p307
      %p310 = scmp.ne.s32.totalorder %s295, %s309
      %p311 = scmp.eq.s32.totalorder %s33, 0
      %p312 = por %p310, %p311
      %s313 = ssub.s32 %s27, %s34
      %p314 = scmp.eq.s32.totalorder %s313, 0
      %s316 = sadd.s32 %s315, 1
      %s317 = scalar_select %p314, %s315, %s316
      %p320 = pneg %p314
      %p321 = scmp.eq.s32.totalorder %s27, 1
      %p322 = por %p320, %p321
      %p323 = scmp.ne.s32.totalorder %s315, %s318
      %p324 = scmp.eq.s32.totalorder %s27, 0
      %p325 = por %p323, %p324
      %p326 = scmp.ne.s32.totalorder %s315, %s318
      %p327 = scmp.eq.s32.totalorder %s32, 1
      %p328 = por %p326, %p327
      %p329 = scmp.ne.s32.totalorder %s318, %s319
      %p330 = scmp.eq.s32.totalorder %s32, 0
      %p331 = por %p329, %p330
      %p332 = scmp.ne.s32.totalorder %s318, %s319
      %p333 = scmp.eq.s32.totalorder %s33, 1
      %p334 = por %p332, %p333
      %p336 = scmp.ne.s32.totalorder %s319, %s335
      %p337 = scmp.eq.s32.totalorder %s33, 0
      %p338 = por %p336, %p337
      %p339 = scmp.le.s32.totalorder 1, %s27
      %p340 = scmp.lt.s32.totalorder %s27, 3
      %p341 = pnand %p339, %p340
      %p342 = pneg %p341
      // Predicated region
      $region9: #{tpu_custom_call.1} parent=5 // pred_check
        _
      $region10: #{tpu_custom_call.1} parent=5 // pred_check_branch
        %344 = sbr.rel (%p341) target = $region12
      $region11: #{tpu_custom_call.1} parent=5 // pred_region
        %s345 = ssub.s32 %s27, 1
        // Predicated region
        $region13: #{tpu_custom_call.1} parent=11 // pred_check
          %p346 = pneg %p74
        $region14: #{tpu_custom_call.1} parent=11 // pred_check_branch
          %348 = sbr.rel (%p346) target = $region16
        $region15: #{tpu_custom_call.1} parent=11 // pred_region
          _
        $region16: #{tpu_custom_call.1} parent=11 // pred_fallthru
          _
        // Predicated region
        $region17: #{tpu_custom_call.1} parent=11 // pred_check
          %p349 = pneg %p95
        $region18: #{tpu_custom_call.1} parent=11 // pred_check_branch
          %351 = sbr.rel (%p349) target = $region20
        $region19: #{tpu_custom_call.1} parent=11 // pred_region
          _
        $region20: #{tpu_custom_call.1} parent=11 // pred_fallthru
          _
        // Predicated region
        $region21: #{tpu_custom_call.1} parent=11 // pred_check
          %p352 = pneg %p116
        $region22: #{tpu_custom_call.1} parent=11 // pred_check_branch
          %354 = sbr.rel (%p352) target = $region24
        $region23: #{tpu_custom_call.1} parent=11 // pred_region
          %s356 = ssub.s32 6144, 6144
          %357 = vsyncadd [#allocation8], %s356
          %s358 = sshll.u32 [#allocation7], 4
          %s359 = int_to_ptr.vmem [resolvable:$true] %s358
          %364 = dma.hbm_to_vmem [thread:$0]  %s3, 6144, %s359, [#allocation8], 384, 384, 24
        $region24: #{tpu_custom_call.1} parent=11 // pred_fallthru
          _
        // Predicated region
        $region25: #{tpu_custom_call.1} parent=11 // pred_check
          %p365 = pneg %p137
        $region26: #{tpu_custom_call.1} parent=11 // pred_check_branch
          %367 = sbr.rel (%p365) target = $region28
        $region27: #{tpu_custom_call.1} parent=11 // pred_region
          _
        $region28: #{tpu_custom_call.1} parent=11 // pred_fallthru
          _
        // Predicated region
        $region29: #{tpu_custom_call.1} parent=11 // pred_check
          %p368 = pneg %p158
        $region30: #{tpu_custom_call.1} parent=11 // pred_check_branch
          %370 = sbr.rel (%p368) target = $region32
        $region31: #{tpu_custom_call.1} parent=11 // pred_region
          %s372 = ssub.s32 2048, 2048
          %373 = vsyncadd [#allocation8], %s372
          %s374 = sshll.u32 [#allocation9], 4
          %s375 = int_to_ptr.vmem [resolvable:$true] %s374
          %380 = dma.hbm_to_vmem [thread:$0]  %s5, 2048, %s375, [#allocation8], 128, 128, 8
        $region32: #{tpu_custom_call.1} parent=11 // pred_fallthru
          _
        // Predicated region
        $region33: #{tpu_custom_call.1} parent=11 // pred_check
          %p381 = pneg %p179
        $region34: #{tpu_custom_call.1} parent=11 // pred_check_branch
          %383 = sbr.rel (%p381) target = $region36
        $region35: #{tpu_custom_call.1} parent=11 // pred_region
          _
        $region36: #{tpu_custom_call.1} parent=11 // pred_fallthru
          _
        // Predicated region
        $region37: #{tpu_custom_call.1} parent=11 // pred_check
          %p384 = pneg %p200
        $region38: #{tpu_custom_call.1} parent=11 // pred_check_branch
          %386 = sbr.rel (%p384) target = $region40
        $region39: #{tpu_custom_call.1} parent=11 // pred_region
          _
        $region40: #{tpu_custom_call.1} parent=11 // pred_fallthru
          _
        // Predicated region
        $region41: #{tpu_custom_call.1} parent=11 // pred_check
          %p387 = pneg %p221
        $region42: #{tpu_custom_call.1} parent=11 // pred_check_branch
          %389 = sbr.rel (%p387) target = $region44
        $region43: #{tpu_custom_call.1} parent=11 // pred_region
          _
        $region44: #{tpu_custom_call.1} parent=11 // pred_fallthru
          _
        // Predicated region
        $region45: #{tpu_custom_call.1} parent=11 // pred_check
          %p390 = pneg %p242
        $region46: #{tpu_custom_call.1} parent=11 // pred_check_branch
          %392 = sbr.rel (%p390) target = $region48
        $region47: #{tpu_custom_call.1} parent=11 // pred_region
          %s394 = ssub.s32 4096, 4096
          %395 = vsyncadd [#allocation11], %s394
          %s396 = sshll.u32 [#allocation10], 4
          %s397 = int_to_ptr.vmem [resolvable:$true] %s396
          %402 = dma.hbm_to_vmem [thread:$0]  %s9, 4096, %s397, [#allocation11], 256, 256, 16
        $region48: #{tpu_custom_call.1} parent=11 // pred_fallthru
          _
        // Predicated region
        $region49: #{tpu_custom_call.1} parent=11 // pred_check
          %p403 = pneg %p263
        $region50: #{tpu_custom_call.1} parent=11 // pred_check_branch
          %405 = sbr.rel (%p403) target = $region52
        $region51: #{tpu_custom_call.1} parent=11 // pred_region
          _
        $region52: #{tpu_custom_call.1} parent=11 // pred_fallthru
          _
        // Predicated region
        $region53: #{tpu_custom_call.1} parent=11 // pred_check
          %p406 = pneg %p284
        $region54: #{tpu_custom_call.1} parent=11 // pred_check_branch
          %408 = sbr.rel (%p406) target = $region56
        $region55: #{tpu_custom_call.1} parent=11 // pred_region
          %s410 = ssub.s32 4096, 4096
          %411 = vsyncadd [#allocation11], %s410
          %s412 = sshll.u32 [#allocation12], 4
          %s413 = int_to_ptr.vmem [resolvable:$true] %s412
          %418 = dma.hbm_to_vmem [thread:$0]  %s11, 4096, %s413, [#allocation11], 128, 128, 8
        $region56: #{tpu_custom_call.1} parent=11 // pred_fallthru
          _
        // Predicated region
        $region57: #{tpu_custom_call.1} parent=11 // pred_check
          %p419 = pneg %p305
        $region58: #{tpu_custom_call.1} parent=11 // pred_check_branch
          %421 = sbr.rel (%p419) target = $region60
        $region59: #{tpu_custom_call.1} parent=11 // pred_region
          _
        $region60: #{tpu_custom_call.1} parent=11 // pred_fallthru
          _
      $region12: #{tpu_custom_call.1} parent=5 // pred_fallthru
        _
      %p422 = scmp.lt.s32.totalorder %s27, 2
      // Predicated region
      $region61: #{tpu_custom_call.1} parent=5 // pred_check
        %p423 = pneg %p422
      $region62: #{tpu_custom_call.1} parent=5 // pred_check_branch
        %425 = sbr.rel (%p423) target = $region64
      $region63: #{tpu_custom_call.1} parent=5 // pred_region
        // Predicated region
        $region65: #{tpu_custom_call.1} parent=63 // pred_check
          %p426 = pneg %p47
        $region66: #{tpu_custom_call.1} parent=63 // pred_check_branch
          %428 = sbr.rel (%p426) target = $region68
        $region67: #{tpu_custom_call.1} parent=63 // pred_region
          %s429 = sand.u32 %s37, 1
          %s430 = scalar_lea.sflag [#allocation5], %s429
          %s431 = sand.u32 %s37, 1
          %s432 = smul.addr %s431, 16
          %s433 = scalar_lea.vmem [#allocation4], %s432
          %s435 = ssub.s32 256, 256
          %436 = vsyncadd %s430, %s435
          %s437 = smul.addr %s27, 2
          %s438 = smul.addr %s437, 128
          %s439 = scalar_lea.hbm %s0, %s438
          %s440 = sshll.u32 %s433, 4
          %s441 = int_to_ptr.vmem [resolvable:$true] %s440
          %446 = dma.hbm_to_vmem [thread:$0]  %s439, 256, %s441, %s430, 128, 128, 8
        $region68: #{tpu_custom_call.1} parent=63 // pred_fallthru
          _
      $region64: #{tpu_custom_call.1} parent=5 // pred_fallthru
        _
      %p447 = scmp.le.s32.totalorder 1, %s27
      %p448 = scmp.lt.s32.totalorder %s27, 3
      %p449 = pnand %p447, %p448
      %p450 = pneg %p449
      // Predicated region
      $region69: #{tpu_custom_call.1} parent=5 // pred_check
        _
      $region70: #{tpu_custom_call.1} parent=5 // pred_check_branch
        %452 = sbr.rel (%p449) target = $region72
      $region71: #{tpu_custom_call.1} parent=5 // pred_region
        %s453 = ssub.s32 %s27, 1
        %s454 = sand.u32 %s40, 1
        %s455 = scalar_lea.sflag [#allocation5], %s454
        %s456 = sand.u32 %s40, 1
        %s457 = smul.addr %s456, 16
        %s458 = scalar_lea.vmem [#allocation4], %s457
        // Predicated region
        $region73: #{tpu_custom_call.1} parent=71 // pred_check
          %p459 = pneg %p53
        $region74: #{tpu_custom_call.1} parent=71 // pred_check_branch
          %461 = sbr.rel (%p459) target = $region76
        $region75: #{tpu_custom_call.1} parent=71 // pred_region
          %462 = dma.done %s455, 256
        $region76: #{tpu_custom_call.1} parent=71 // pred_fallthru
          _
        // Predicated region
        $region77: #{tpu_custom_call.1} parent=71 // pred_check
          %p463 = pneg %p116
        $region78: #{tpu_custom_call.1} parent=71 // pred_check_branch
          %465 = sbr.rel (%p463) target = $region80
        $region79: #{tpu_custom_call.1} parent=71 // pred_region
          %466 = dma.done [#allocation8], 6144
        $region80: #{tpu_custom_call.1} parent=71 // pred_fallthru
          _
        // Predicated region
        $region81: #{tpu_custom_call.1} parent=71 // pred_check
          %p467 = pneg %p158
        $region82: #{tpu_custom_call.1} parent=71 // pred_check_branch
          %469 = sbr.rel (%p467) target = $region84
        $region83: #{tpu_custom_call.1} parent=71 // pred_region
          %470 = dma.done [#allocation8], 2048
        $region84: #{tpu_custom_call.1} parent=71 // pred_fallthru
          _
        // Predicated region
        $region85: #{tpu_custom_call.1} parent=71 // pred_check
          %p471 = pneg %p242
        $region86: #{tpu_custom_call.1} parent=71 // pred_check_branch
          %473 = sbr.rel (%p471) target = $region88
        $region87: #{tpu_custom_call.1} parent=71 // pred_region
          %474 = dma.done [#allocation11], 4096
        $region88: #{tpu_custom_call.1} parent=71 // pred_fallthru
          _
        // Predicated region
        $region89: #{tpu_custom_call.1} parent=71 // pred_check
          %p475 = pneg %p284
        $region90: #{tpu_custom_call.1} parent=71 // pred_check_branch
          %477 = sbr.rel (%p475) target = $region92
        $region91: #{tpu_custom_call.1} parent=71 // pred_region
          %478 = dma.done [#allocation11], 4096
        $region92: #{tpu_custom_call.1} parent=71 // pred_fallthru
          _
        %s479 = sand.u32 %s40, 1
        %s480 = scalar_lea.sflag [#allocation5], %s479
        %s481 = sand.u32 %s40, 1
        %s482 = smul.addr %s481, 16
        %s483 = scalar_lea.vmem [#allocation4], %s482
        %p484 = pneg %p53
        %p485 = pneg %p50
        %p486 = pneg %p74
        %p487 = pneg %p71
        %p488 = pneg %p95
        %p489 = pneg %p92
        %p490 = pneg %p116
        %p491 = pneg %p113
        %p492 = pneg %p137
        %p493 = pneg %p134
        %p494 = pneg %p158
        %p495 = pneg %p155
        %p496 = pneg %p179
        %p497 = pneg %p176
        %p498 = pneg %p200
        %p499 = pneg %p197
        %p500 = pneg %p221
        %p501 = pneg %p218
        %p502 = pneg %p242
        %p503 = pneg %p239
        %p504 = pneg %p263
        %p505 = pneg %p260
        %p506 = pneg %p284
        %p507 = pneg %p281
        %p508 = pneg %p305
        %p509 = pneg %p302
        %p510 = pneg %p331
        %p511 = pneg %p328
        %s512 = sand.u32 %s318, 1
        %s513 = scalar_lea.sflag [#allocation6], %s512
        %s514 = sand.u32 %s318, 1
        %s515 = smul.addr %s514, 16
        %s516 = scalar_lea.vmem [#allocation13], %s515
        %v517 = vld [vmem:[%s458] sm:$0xff]
        %v518 = vld [vmem:[%s458 + $0x8] sm:$0xff]
        %519 = vadd.xlane.f32.xlu0 %v517
        %v520 = vpop.xlane.xlu0 %519
        %521 = vadd.xlane.f32.xlu0 %v518
        %v522 = vpop.xlane.xlu0 %521
        %v523 = vrcp.pop 128.0
        %v524 = vmul.f32 %v520, %v523
        %v525 = vmul.f32 %v522, %v523
        %v526 = vsub.f32 %v517, %v524
        %v527 = vsub.f32 %v518, %v525
        %v528 = vmul.f32 %v526, %v526
        %v529 = vmul.f32 %v527, %v527
        %530 = vadd.xlane.f32.xlu0 %v528
        %v531 = vpop.xlane.xlu0 %530
        %532 = vadd.xlane.f32.xlu0 %v529
        %v533 = vpop.xlane.xlu0 %532
        %v534 = vmul.f32 %v531, %v523
        %v535 = vmul.f32 %v533, %v523
        %v536 = vadd.f32 %v534, 1e-05
        %v537 = vadd.f32 %v535, 1e-05
        %v538 = vrsqrt.pop %v536
        %v539 = vrsqrt.pop %v537
        %v540 = vmul.f32 %v526, %v538
        %v541 = vmul.f32 %v527, %v539
        %v542 = vld [vmem:[%s1] sm:$0x1]
        %v544 = vlaneseq
        %v545 = vshrl.u32 %v544, 7
        %v546 = vsub.s32 0, %v545
        %v547 = vrot.slane %v542, %v546
        %v549 = vmul.f32 %v540, %v547
        %v550 = vmul.f32 %v541, %v547
        %v551 = vld [vmem:[%s2] sm:$0x1]
        %v553 = vlaneseq
        %v554 = vshrl.u32 %v553, 7
        %v555 = vsub.s32 0, %v554
        %v556 = vrot.slane %v551, %v555
        %v558 = vadd.f32 %v549, %v556
        %v559 = vadd.f32 %v550, %v556
        %v560 = vld [vmem:[#allocation7] sm:$0xff]
        %v561 = vld [vmem:[#allocation7 + $0x8] sm:$0xff]
        %v562 = vld [vmem:[#allocation7 + $0x10] sm:$0xff]
        %v563 = vld [vmem:[#allocation7 + $0x18] sm:$0xff]
        %v564 = vld [vmem:[#allocation7 + $0x20] sm:$0xff]
        %v565 = vld [vmem:[#allocation7 + $0x28] sm:$0xff]
        %v566 = vld [vmem:[#allocation7 + $0x30] sm:$0xff]
        %v567 = vld [vmem:[#allocation7 + $0x38] sm:$0xff]
        %v568 = vld [vmem:[#allocation7 + $0x40] sm:$0xff]
        %v569 = vld [vmem:[#allocation7 + $0x48] sm:$0xff]
        %v570 = vld [vmem:[#allocation7 + $0x50] sm:$0xff]
        %v571 = vld [vmem:[#allocation7 + $0x58] sm:$0xff]
        %v572 = vld [vmem:[#allocation7 + $0x60] sm:$0xff]
        %v573 = vld [vmem:[#allocation7 + $0x68] sm:$0xff]
        %v574 = vld [vmem:[#allocation7 + $0x70] sm:$0xff]
        %v575 = vld [vmem:[#allocation7 + $0x78] sm:$0xff]
        %v576 = vld [vmem:[#allocation7 + $0x80] sm:$0xff]
        %v577 = vld [vmem:[#allocation7 + $0x88] sm:$0xff]
        %v578 = vld [vmem:[#allocation7 + $0x90] sm:$0xff]
        %v579 = vld [vmem:[#allocation7 + $0x98] sm:$0xff]
        %v580 = vld [vmem:[#allocation7 + $0xa0] sm:$0xff]
        %v581 = vld [vmem:[#allocation7 + $0xa8] sm:$0xff]
        %v582 = vld [vmem:[#allocation7 + $0xb0] sm:$0xff]
        %v583 = vld [vmem:[#allocation7 + $0xb8] sm:$0xff]
        %v584 = vld [vmem:[#allocation7 + $0xc0] sm:$0xff]
        %v585 = vld [vmem:[#allocation7 + $0xc8] sm:$0xff]
        %v586 = vld [vmem:[#allocation7 + $0xd0] sm:$0xff]
        %v587 = vld [vmem:[#allocation7 + $0xd8] sm:$0xff]
        %v588 = vld [vmem:[#allocation7 + $0xe0] sm:$0xff]
        %v589 = vld [vmem:[#allocation7 + $0xe8] sm:$0xff]
        %v590 = vld [vmem:[#allocation7 + $0xf0] sm:$0xff]
        %v591 = vld [vmem:[#allocation7 + $0xf8] sm:$0xff]
        %v592 = vld [vmem:[#allocation7 + $0x100] sm:$0xff]
        %v593 = vld [vmem:[#allocation7 + $0x108] sm:$0xff]
        %v594 = vld [vmem:[#allocation7 + $0x110] sm:$0xff]
        %v595 = vld [vmem:[#allocation7 + $0x118] sm:$0xff]
        %v596 = vld [vmem:[#allocation7 + $0x120] sm:$0xff]
        %v597 = vld [vmem:[#allocation7 + $0x128] sm:$0xff]
        %v598 = vld [vmem:[#allocation7 + $0x130] sm:$0xff]
        %v599 = vld [vmem:[#allocation7 + $0x138] sm:$0xff]
        %v600 = vld [vmem:[#allocation7 + $0x140] sm:$0xff]
        %v601 = vld [vmem:[#allocation7 + $0x148] sm:$0xff]
        %v602 = vld [vmem:[#allocation7 + $0x150] sm:$0xff]
        %v603 = vld [vmem:[#allocation7 + $0x158] sm:$0xff]
        %v604 = vld [vmem:[#allocation7 + $0x160] sm:$0xff]
        %v605 = vld [vmem:[#allocation7 + $0x168] sm:$0xff]
        %v606 = vld [vmem:[#allocation7 + $0x170] sm:$0xff]
        %v607 = vld [vmem:[#allocation7 + $0x178] sm:$0xff]
        %v608 = vld [vmem:[%s4] sm:$0x7]
        %v610 = vlaneseq
        %v611 = vshrl.u32 %v610, 7
        %v612 = vsub.s32 0, %v611
        %v613 = vrot.slane %v608, %v612
        %v614 = vlaneseq
        %v615 = vshrl.u32 %v614, 7
        %v616 = vsub.s32 1, %v615
        %v617 = vrot.slane %v608, %v616
        %v618 = vlaneseq
        %v619 = vshrl.u32 %v618, 7
        %v620 = vsub.s32 2, %v619
        %v621 = vrot.slane %v608, %v620
        %625 = vmatprep.subr.mxu0 %v561
        %626 = vmatpush1.msra.mxu0 %v560
        %627 = vmatprep.subr.mxu0 %v564
        %628 = vmatpush1.msra.mxu0 %v563
        %629 = vmatprep.subr.mxu0 %v567
        %630 = vmatpush1.msra.mxu0 %v566
        %631 = vmatprep.subr.mxu0 %v570
        %632 = vmatpush1.msra.mxu0 %v569
        %633 = vmatprep.subr.mxu0 %v573
        %634 = vmatpush1.msra.mxu0 %v572
        %635 = vmatprep.subr.mxu0 %v576
        %636 = vmatpush1.msra.mxu0 %v575
        %637 = vmatprep.subr.mxu0 %v579
        %638 = vmatpush1.msra.mxu0 %v578
        %639 = vmatprep.subr.mxu0 %v582
        %640 = vmatpush1.msra.mxu0 %v581
        %641 = vmatprep.subr.mxu0 %v585
        %642 = vmatpush1.msra.mxu0 %v584
        %643 = vmatprep.subr.mxu0 %v588
        %644 = vmatpush1.msra.mxu0 %v587
        %645 = vmatprep.subr.mxu0 %v591
        %646 = vmatpush1.msra.mxu0 %v590
        %647 = vmatprep.subr.mxu0 %v594
        %648 = vmatpush1.msra.mxu0 %v593
        %649 = vmatprep.subr.mxu0 %v597
        %650 = vmatpush1.msra.mxu0 %v596
        %651 = vmatprep.subr.mxu0 %v600
        %652 = vmatpush1.msra.mxu0 %v599
        %653 = vmatprep.subr.mxu0 %v603
        %654 = vmatpush1.msra.mxu0 %v602
        %655 = vmatprep.subr.mxu0 %v606
        %656 = vmatpush1.msra.mxu0 %v605
        %657 = vmatprep.subr.mxu0 0.0
        %658 = vmatpush1.msra.mxu0 0.0
        %659 = vmatprep.subr.mxu0 0.0
        %660 = vmatpush1.msra.mxu0 0.0
        %661 = vmatprep.subr.mxu0 0.0
        %662 = vmatpush1.msra.mxu0 0.0
        %663 = vmatprep.subr.mxu0 0.0
        %664 = vmatpush1.msra.mxu0 0.0
        %665 = vmatprep.subr.mxu0 0.0
        %666 = vmatpush1.msra.mxu0 0.0
        %667 = vmatprep.subr.mxu0 0.0
        %668 = vmatpush1.msra.mxu0 0.0
        %669 = vmatprep.subr.mxu0 0.0
        %670 = vmatpush1.msra.mxu0 0.0
        %671 = vmatprep.subr.mxu0 0.0
        %672 = vmatpush1.msra.mxu0 0.0
        %673 = vmatprep.subr.mxu0 0.0
        %674 = vmatpush1.msra.mxu0 0.0
        %675 = vmatprep.subr.mxu0 0.0
        %676 = vmatpush1.msra.mxu0 0.0
        %677 = vmatprep.subr.mxu0 0.0
        %678 = vmatpush1.msra.mxu0 0.0
        %679 = vmatprep.subr.mxu0 0.0
        %680 = vmatpush1.msra.mxu0 0.0
        %681 = vmatprep.subr.mxu0 0.0
        %682 = vmatpush1.msra.mxu0 0.0
        %683 = vmatprep.subr.mxu0 0.0
        %684 = vmatpush1.msra.mxu0 0.0
        %685 = vmatprep.subr.mxu0 0.0
        %686 = vmatpush1.msra.mxu0 0.0
        %687 = vmatprep.subr.mxu0 0.0
        %688 = vmatpush1.msra.mxu0 0.0
        %689 = vmatprep.mubr.f32.mxu0 0.0
        %690 = vmatmul.mubr.f32.gmra.mrb[0].mxu0 %v558
        %v691 = vpop.f32.mrb[0].mxu0
        %v692 = vadd.f32 %v613, %v691
        %v693 = vpop.f32.mrb[0].mxu0
        %v694 = vadd.f32 %v617, %v693
        %695 = vmatprep.mubr.f32.mxu0 0.0
        %696 = vmatmul.mubr.f32.gmra.mrb[0].mxu0 %v559
        %v697 = vpop.f32.mrb[0].mxu0
        %v698 = vadd.f32 %v613, %v697
        %v699 = vpop.f32.mrb[0].mxu0
        %v700 = vadd.f32 %v617, %v699
        %701 = vdwg.mxu0
        %702 = vmatprep.subr.mxu0 0.0
        %703 = vmatpush1.msra.mxu0 %v562
        %704 = vmatprep.subr.mxu0 0.0
        %705 = vmatpush1.msra.mxu0 %v565
        %706 = vmatprep.subr.mxu0 0.0
        %707 = vmatpush1.msra.mxu0 %v568
        %708 = vmatprep.subr.mxu0 0.0
        %709 = vmatpush1.msra.mxu0 %v571
        %710 = vmatprep.subr.mxu0 0.0
        %711 = vmatpush1.msra.mxu0 %v574
        %712 = vmatprep.subr.mxu0 0.0
        %713 = vmatpush1.msra.mxu0 %v577
        %714 = vmatprep.subr.mxu0 0.0
        %715 = vmatpush1.msra.mxu0 %v580
        %716 = vmatprep.subr.mxu0 0.0
        %717 = vmatpush1.msra.mxu0 %v583
        %718 = vmatprep.subr.mxu0 0.0
        %719 = vmatpush1.msra.mxu0 %v586
        %720 = vmatprep.subr.mxu0 0.0
        %721 = vmatpush1.msra.mxu0 %v589
        %722 = vmatprep.subr.mxu0 0.0
        %723 = vmatpush1.msra.mxu0 %v592
        %724 = vmatprep.subr.mxu0 0.0
        %725 = vmatpush1.msra.mxu0 %v595
        %726 = vmatprep.subr.mxu0 0.0
        %727 = vmatpush1.msra.mxu0 %v598
        %728 = vmatprep.subr.mxu0 0.0
        %729 = vmatpush1.msra.mxu0 %v601
        %730 = vmatprep.subr.mxu0 0.0
        %731 = vmatpush1.msra.mxu0 %v604
        %732 = vmatprep.subr.mxu0 0.0
        %733 = vmatpush1.msra.mxu0 %v607
        %734 = vmatprep.subr.mxu0 0.0
        %735 = vmatpush1.msra.mxu0 0.0
        %736 = vmatprep.subr.mxu0 0.0
        %737 = vmatpush1.msra.mxu0 0.0
        %738 = vmatprep.subr.mxu0 0.0
        %739 = vmatpush1.msra.mxu0 0.0
        %740 = vmatprep.subr.mxu0 0.0
        %741 = vmatpush1.msra.mxu0 0.0
        %742 = vmatprep.subr.mxu0 0.0
        %743 = vmatpush1.msra.mxu0 0.0
        %744 = vmatprep.subr.mxu0 0.0
        %745 = vmatpush1.msra.mxu0 0.0
        %746 = vmatprep.subr.mxu0 0.0
        %747 = vmatpush1.msra.mxu0 0.0
        %748 = vmatprep.subr.mxu0 0.0
        %749 = vmatpush1.msra.mxu0 0.0
        %750 = vmatprep.subr.mxu0 0.0
        %751 = vmatpush1.msra.mxu0 0.0
        %752 = vmatprep.subr.mxu0 0.0
        %753 = vmatpush1.msra.mxu0 0.0
        %754 = vmatprep.subr.mxu0 0.0
        %755 = vmatpush1.msra.mxu0 0.0
        %756 = vmatprep.subr.mxu0 0.0
        %757 = vmatpush1.msra.mxu0 0.0
        %758 = vmatprep.subr.mxu0 0.0
        %759 = vmatpush1.msra.mxu0 0.0
        %760 = vmatprep.subr.mxu0 0.0
        %761 = vmatpush1.msra.mxu0 0.0
        %762 = vmatprep.subr.mxu0 0.0
        %763 = vmatpush1.msra.mxu0 0.0
        %764 = vmatprep.subr.mxu0 0.0
        %765 = vmatpush1.msra.mxu0 0.0
        %766 = vmatprep.mubr.f32.mxu0 0.0
        %767 = vmatmul.mubr.f32.gmra.mrb[0].mxu0 %v558
        %v768 = vpop.f32.mrb[0].mxu0
        %v769 = vadd.f32 %v621, %v768
        %v770 = vpop.f32.mrb[0].mxu0
        %771 = vmatprep.mubr.f32.mxu0 0.0
        %772 = vmatmul.mubr.f32.gmra.mrb[0].mxu0 %v559
        %v773 = vpop.f32.mrb[0].mxu0
        %v774 = vadd.f32 %v621, %v773
        %v775 = vpop.f32.mrb[0].mxu0
        %776 = vdwg.mxu0
        %777 = vst [vmem:[#allocation2] sm:$0xff] %v692
        %778 = vst [vmem:[#allocation2 + $0x8] sm:$0xff] %v694
        %779 = vst [vmem:[#allocation2 + $0x10] sm:$0xff] %v769
        %780 = vst [vmem:[#allocation2 + $0x18] sm:$0xff] %v698
        %781 = vst [vmem:[#allocation2 + $0x20] sm:$0xff] %v700
        %782 = vst [vmem:[#allocation2 + $0x28] sm:$0xff] %v774
        %v783 = vld [vmem:[#allocation2] sm:$0xff]
        %v784 = vld [vmem:[#allocation2 + $0x18] sm:$0xff]
        %v785 = vld [vmem:[#allocation2 + $0x8] sm:$0xff]
        %v786 = vld [vmem:[#allocation2 + $0x20] sm:$0xff]
        %v787 = vld [vmem:[#allocation2 + $0x10] sm:$0xff]
        %v788 = vld [vmem:[#allocation2 + $0x28] sm:$0xff]
        %vm789 = vcmask 261120
        %v791 = vsel %vm789, %v783, 0
        %v794 = vsel %vm789, %v784, 0
        %v797 = vsel %vm789, %v785, 0
        %v800 = vsel %vm789, %v786, 0
        %802 = vmatprep.subr.mxu0 0.0
        %803 = vmatpush1.xpose.msra.mxu0 %v797
        %804 = vmatprep.subr.mxu0 0.0
        %805 = vmatpush1.xpose.msra.mxu0 %v800
        %806 = vmatprep.subr.mxu0 0.0
        %807 = vmatpush1.xpose.msra.mxu0 0.0
        %808 = vmatprep.subr.mxu0 0.0
        %809 = vmatpush1.xpose.msra.mxu0 0.0
        %810 = vmatprep.subr.mxu0 0.0
        %811 = vmatpush1.xpose.msra.mxu0 0.0
        %812 = vmatprep.subr.mxu0 0.0
        %813 = vmatpush1.xpose.msra.mxu0 0.0
        %814 = vmatprep.subr.mxu0 0.0
        %815 = vmatpush1.xpose.msra.mxu0 0.0
        %816 = vmatprep.subr.mxu0 0.0
        %817 = vmatpush1.xpose.msra.mxu0 0.0
        %818 = vmatprep.subr.mxu0 0.0
        %819 = vmatpush1.xpose.msra.mxu0 0.0
        %820 = vmatprep.subr.mxu0 0.0
        %821 = vmatpush1.xpose.msra.mxu0 0.0
        %822 = vmatprep.subr.mxu0 0.0
        %823 = vmatpush1.xpose.msra.mxu0 0.0
        %824 = vmatprep.subr.mxu0 0.0
        %825 = vmatpush1.xpose.msra.mxu0 0.0
        %826 = vmatprep.subr.mxu0 0.0
        %827 = vmatpush1.xpose.msra.mxu0 0.0
        %828 = vmatprep.subr.mxu0 0.0
        %829 = vmatpush1.xpose.msra.mxu0 0.0
        %830 = vmatprep.subr.mxu0 0.0
        %831 = vmatpush1.xpose.msra.mxu0 0.0
        %832 = vmatprep.subr.mxu0 0.0
        %833 = vmatpush1.xpose.msra.mxu0 0.0
        %834 = vmatprep.subr.mxu0 0.0
        %835 = vmatpush1.xpose.msra.mxu0 0.0
        %836 = vmatprep.subr.mxu0 0.0
        %837 = vmatpush1.xpose.msra.mxu0 0.0
        %838 = vmatprep.subr.mxu0 0.0
        %839 = vmatpush1.xpose.msra.mxu0 0.0
        %840 = vmatprep.subr.mxu0 0.0
        %841 = vmatpush1.xpose.msra.mxu0 0.0
        %842 = vmatprep.subr.mxu0 0.0
        %843 = vmatpush1.xpose.msra.mxu0 0.0
        %844 = vmatprep.subr.mxu0 0.0
        %845 = vmatpush1.xpose.msra.mxu0 0.0
        %846 = vmatprep.subr.mxu0 0.0
        %847 = vmatpush1.xpose.msra.mxu0 0.0
        %848 = vmatprep.subr.mxu0 0.0
        %849 = vmatpush1.xpose.msra.mxu0 0.0
        %850 = vmatprep.subr.mxu0 0.0
        %851 = vmatpush1.xpose.msra.mxu0 0.0
        %852 = vmatprep.subr.mxu0 0.0
        %853 = vmatpush1.xpose.msra.mxu0 0.0
        %854 = vmatprep.subr.mxu0 0.0
        %855 = vmatpush1.xpose.msra.mxu0 0.0
        %856 = vmatprep.subr.mxu0 0.0
        %857 = vmatpush1.xpose.msra.mxu0 0.0
        %858 = vmatprep.subr.mxu0 0.0
        %859 = vmatpush1.xpose.msra.mxu0 0.0
        %860 = vmatprep.subr.mxu0 0.0
        %861 = vmatpush1.xpose.msra.mxu0 0.0
        %862 = vmatprep.subr.mxu0 0.0
        %863 = vmatpush1.xpose.msra.mxu0 0.0
        %864 = vmatprep.subr.mxu0 0.0
        %865 = vmatpush1.xpose.msra.mxu0 0.0
        %866 = vmatprep.mubr.f32.mxu0 0.0
        %867 = vmatmul.mubr.f32.gmra.mrb[0].mxu0 %v791
        %v868 = vpop.f32.mrb[0].mxu0
        %v869 = vadd.f32 0.0, %v868
        %v870 = vpop.f32.mrb[0].mxu0
        %871 = vmatprep.mubr.f32.mxu0 0.0
        %872 = vmatmul.mubr.f32.gmra.mrb[0].mxu0 %v794
        %v873 = vpop.f32.mrb[0].mxu0
        %v874 = vadd.f32 0.0, %v873
        %v875 = vpop.f32.mrb[0].mxu0
        %876 = vdwg.mxu0
        %vm877 = vcmask 130048
        %v878 = vsel %vm877, %v869, -inf
        %879 = vmax.xlane.f32.xlu0 %v878
        %v880 = vpop.xlane.xlu0 %879
        %v881 = vsel %vm877, %v874, -inf
        %882 = vmax.xlane.f32.xlu0 %v881
        %v883 = vpop.xlane.xlu0 %882
        %v884 = vsub.f32 %v869, %v880
        %v885 = vsub.f32 %v874, %v883
        %v886 = vmul.f32 %v884, 1.442695
        %v887 = vpow.pop %v886
        %v888 = vmul.f32 %v885, 1.442695
        %v889 = vpow.pop %v888
        %v890 = vsel %vm877, %v887, 0.0
        %891 = vadd.xlane.f32.xlu0 %v890
        %v892 = vpop.xlane.xlu0 %891
        %v893 = vsel %vm877, %v889, 0.0
        %894 = vadd.xlane.f32.xlu0 %v893
        %v895 = vpop.xlane.xlu0 %894
        %v896 = vrcp.pop %v892
        %v897 = vmul.f32 %v887, %v896
        %v898 = vrcp.pop %v895
        %v899 = vmul.f32 %v889, %v898
        %v901 = vsel %vm877, %v897, 0
        %v904 = vsel %vm877, %v899, 0
        %906 = vmatprep.subr.mxu0 0.0
        %907 = vmatpush1.msra.mxu0 %v787
        %908 = vmatprep.subr.mxu0 0.0
        %909 = vmatpush1.msra.mxu0 %v788
        %910 = vmatprep.subr.mxu0 0.0
        %911 = vmatpush1.msra.mxu0 0.0
        %912 = vmatprep.subr.mxu0 0.0
        %913 = vmatpush1.msra.mxu0 0.0
        %914 = vmatprep.subr.mxu0 0.0
        %915 = vmatpush1.msra.mxu0 0.0
        %916 = vmatprep.subr.mxu0 0.0
        %917 = vmatpush1.msra.mxu0 0.0
        %918 = vmatprep.subr.mxu0 0.0
        %919 = vmatpush1.msra.mxu0 0.0
        %920 = vmatprep.subr.mxu0 0.0
        %921 = vmatpush1.msra.mxu0 0.0
        %922 = vmatprep.subr.mxu0 0.0
        %923 = vmatpush1.msra.mxu0 0.0
        %924 = vmatprep.subr.mxu0 0.0
        %925 = vmatpush1.msra.mxu0 0.0
        %926 = vmatprep.subr.mxu0 0.0
        %927 = vmatpush1.msra.mxu0 0.0
        %928 = vmatprep.subr.mxu0 0.0
        %929 = vmatpush1.msra.mxu0 0.0
        %930 = vmatprep.subr.mxu0 0.0
        %931 = vmatpush1.msra.mxu0 0.0
        %932 = vmatprep.subr.mxu0 0.0
        %933 = vmatpush1.msra.mxu0 0.0
        %934 = vmatprep.subr.mxu0 0.0
        %935 = vmatpush1.msra.mxu0 0.0
        %936 = vmatprep.subr.mxu0 0.0
        %937 = vmatpush1.msra.mxu0 0.0
        %938 = vmatprep.subr.mxu0 0.0
        %939 = vmatpush1.msra.mxu0 0.0
        %940 = vmatprep.subr.mxu0 0.0
        %941 = vmatpush1.msra.mxu0 0.0
        %942 = vmatprep.subr.mxu0 0.0
        %943 = vmatpush1.msra.mxu0 0.0
        %944 = vmatprep.subr.mxu0 0.0
        %945 = vmatpush1.msra.mxu0 0.0
        %946 = vmatprep.subr.mxu0 0.0
        %947 = vmatpush1.msra.mxu0 0.0
        %948 = vmatprep.subr.mxu0 0.0
        %949 = vmatpush1.msra.mxu0 0.0
        %950 = vmatprep.subr.mxu0 0.0
        %951 = vmatpush1.msra.mxu0 0.0
        %952 = vmatprep.subr.mxu0 0.0
        %953 = vmatpush1.msra.mxu0 0.0
        %954 = vmatprep.subr.mxu0 0.0
        %955 = vmatpush1.msra.mxu0 0.0
        %956 = vmatprep.subr.mxu0 0.0
        %957 = vmatpush1.msra.mxu0 0.0
        %958 = vmatprep.subr.mxu0 0.0
        %959 = vmatpush1.msra.mxu0 0.0
        %960 = vmatprep.subr.mxu0 0.0
        %961 = vmatpush1.msra.mxu0 0.0
        %962 = vmatprep.subr.mxu0 0.0
        %963 = vmatpush1.msra.mxu0 0.0
        %964 = vmatprep.subr.mxu0 0.0
        %965 = vmatpush1.msra.mxu0 0.0
        %966 = vmatprep.subr.mxu0 0.0
        %967 = vmatpush1.msra.mxu0 0.0
        %968 = vmatprep.subr.mxu0 0.0
        %969 = vmatpush1.msra.mxu0 0.0
        %970 = vmatprep.mubr.f32.mxu0 0.0
        %971 = vmatmul.mubr.f32.gmra.mrb[0].mxu0 %v901
        %v972 = vpop.f32.mrb[0].mxu0
        %v973 = vadd.f32 0.0, %v972
        %v974 = vpop.f32.mrb[0].mxu0
        %975 = vmatprep.mubr.f32.mxu0 0.0
        %976 = vmatmul.mubr.f32.gmra.mrb[0].mxu0 %v904
        %v977 = vpop.f32.mrb[0].mxu0
        %v978 = vadd.f32 0.0, %v977
        %v979 = vpop.f32.mrb[0].mxu0
        %980 = vdwg.mxu0
        %v981 = vld [vmem:[#allocation9] sm:$0xff]
        %v982 = vld [vmem:[#allocation9 + $0x8] sm:$0xff]
        %v983 = vld [vmem:[#allocation9 + $0x10] sm:$0xff]
        %v984 = vld [vmem:[#allocation9 + $0x18] sm:$0xff]
        %985 = vrot.lane.b32.xlu0 %v783, 96
        %v986 = vpop.permute.xlu0 %985
        %987 = vrot.lane.b32.xlu0 %v784, 96
        %v988 = vpop.permute.xlu0 %987
        %989 = vrot.lane.b32.xlu0 %v785, 96
        %v990 = vpop.permute.xlu0 %989
        %991 = vrot.lane.b32.xlu0 %v786, 96
        %v992 = vpop.permute.xlu0 %991
        %v993 = vsel %vm789, %v986, 0
        %v995 = vsel %vm789, %v988, 0
        %v997 = vsel %vm789, %v990, 0
        %v999 = vsel %vm789, %v992, 0
        %1001 = vmatprep.subr.mxu0 0.0
        %1002 = vmatpush1.xpose.msra.mxu0 %v997
        %1003 = vmatprep.subr.mxu0 0.0
        %1004 = vmatpush1.xpose.msra.mxu0 %v999
        %1005 = vmatprep.subr.mxu0 0.0
        %1006 = vmatpush1.xpose.msra.mxu0 0.0
        %1007 = vmatprep.subr.mxu0 0.0
        %1008 = vmatpush1.xpose.msra.mxu0 0.0
        %1009 = vmatprep.subr.mxu0 0.0
        %1010 = vmatpush1.xpose.msra.mxu0 0.0
        %1011 = vmatprep.subr.mxu0 0.0
        %1012 = vmatpush1.xpose.msra.mxu0 0.0
        %1013 = vmatprep.subr.mxu0 0.0
        %1014 = vmatpush1.xpose.msra.mxu0 0.0
        %1015 = vmatprep.subr.mxu0 0.0
        %1016 = vmatpush1.xpose.msra.mxu0 0.0
        %1017 = vmatprep.subr.mxu0 0.0
        %1018 = vmatpush1.xpose.msra.mxu0 0.0
        %1019 = vmatprep.subr.mxu0 0.0
        %1020 = vmatpush1.xpose.msra.mxu0 0.0
        %1021 = vmatprep.subr.mxu0 0.0
        %1022 = vmatpush1.xpose.msra.mxu0 0.0
        %1023 = vmatprep.subr.mxu0 0.0
        %1024 = vmatpush1.xpose.msra.mxu0 0.0
        %1025 = vmatprep.subr.mxu0 0.0
        %1026 = vmatpush1.xpose.msra.mxu0 0.0
        %1027 = vmatprep.subr.mxu0 0.0
        %1028 = vmatpush1.xpose.msra.mxu0 0.0
        %1029 = vmatprep.subr.mxu0 0.0
        %1030 = vmatpush1.xpose.msra.mxu0 0.0
        %1031 = vmatprep.subr.mxu0 0.0
        %1032 = vmatpush1.xpose.msra.mxu0 0.0
        %1033 = vmatprep.subr.mxu0 0.0
        %1034 = vmatpush1.xpose.msra.mxu0 0.0
        %1035 = vmatprep.subr.mxu0 0.0
        %1036 = vmatpush1.xpose.msra.mxu0 0.0
        %1037 = vmatprep.subr.mxu0 0.0
        %1038 = vmatpush1.xpose.msra.mxu0 0.0
        %1039 = vmatprep.subr.mxu0 0.0
        %1040 = vmatpush1.xpose.msra.mxu0 0.0
        %1041 = vmatprep.subr.mxu0 0.0
        %1042 = vmatpush1.xpose.msra.mxu0 0.0
        %1043 = vmatprep.subr.mxu0 0.0
        %1044 = vmatpush1.xpose.msra.mxu0 0.0
        %1045 = vmatprep.subr.mxu0 0.0
        %1046 = vmatpush1.xpose.msra.mxu0 0.0
        %1047 = vmatprep.subr.mxu0 0.0
        %1048 = vmatpush1.xpose.msra.mxu0 0.0
        %1049 = vmatprep.subr.mxu0 0.0
        %1050 = vmatpush1.xpose.msra.mxu0 0.0
        %1051 = vmatprep.subr.mxu0 0.0
        %1052 = vmatpush1.xpose.msra.mxu0 0.0
        %1053 = vmatprep.subr.mxu0 0.0
        %1054 = vmatpush1.xpose.msra.mxu0 0.0
        %1055 = vmatprep.subr.mxu0 0.0
        %1056 = vmatpush1.xpose.msra.mxu0 0.0
        %1057 = vmatprep.subr.mxu0 0.0
        %1058 = vmatpush1.xpose.msra.mxu0 0.0
        %1059 = vmatprep.subr.mxu0 0.0
        %1060 = vmatpush1.xpose.msra.mxu0 0.0
        %1061 = vmatprep.subr.mxu0 0.0
        %1062 = vmatpush1.xpose.msra.mxu0 0.0
        %1063 = vmatprep.subr.mxu0 0.0
        %1064 = vmatpush1.xpose.msra.mxu0 0.0
        %1065 = vmatprep.mubr.f32.mxu0 0.0
        %1066 = vmatmul.mubr.f32.gmra.mrb[0].mxu0 %v993
        %v1067 = vpop.f32.mrb[0].mxu0
        %v1068 = vadd.f32 0.0, %v1067
        %v1069 = vpop.f32.mrb[0].mxu0
        %1070 = vmatprep.mubr.f32.mxu0 0.0
        %1071 = vmatmul.mubr.f32.gmra.mrb[0].mxu0 %v995
        %v1072 = vpop.f32.mrb[0].mxu0
        %v1073 = vadd.f32 0.0, %v1072
        %v1074 = vpop.f32.mrb[0].mxu0
        %1075 = vdwg.mxu0
        %v1076 = vsel %vm877, %v1068, -inf
        %1077 = vmax.xlane.f32.xlu0 %v1076
        %v1078 = vpop.xlane.xlu0 %1077
        %v1079 = vsel %vm877, %v1073, -inf
        %1080 = vmax.xlane.f32.xlu0 %v1079
        %v1081 = vpop.xlane.xlu0 %1080
        %v1082 = vsub.f32 %v1068, %v1078
        %v1083 = vsub.f32 %v1073, %v1081
        %v1084 = vmul.f32 %v1082, 1.442695
        %v1085 = vpow.pop %v1084
        %v1086 = vmul.f32 %v1083, 1.442695
        %v1087 = vpow.pop %v1086
        %v1088 = vsel %vm877, %v1085, 0.0
        %1089 = vadd.xlane.f32.xlu0 %v1088
        %v1090 = vpop.xlane.xlu0 %1089
        %v1091 = vsel %vm877, %v1087, 0.0
        %1092 = vadd.xlane.f32.xlu0 %v1091
        %v1093 = vpop.xlane.xlu0 %1092
        %v1094 = vrcp.pop %v1090
        %v1095 = vmul.f32 %v1085, %v1094
        %v1096 = vrcp.pop %v1093
        %v1097 = vmul.f32 %v1087, %v1096
        %1100 = vrot.lane.b32.xlu0 %v787, 96
        %v1101 = vpop.permute.xlu0 %1100
        %1102 = vrot.lane.b32.xlu0 %v788, 96
        %v1103 = vpop.permute.xlu0 %1102
        %v1107 = vsel %vm877, %v1095, 0
        %v1110 = vsel %vm877, %v1097, 0
        %1112 = vmatprep.subr.mxu0 0.0
        %1113 = vmatpush1.msra.mxu0 %v1101
        %1114 = vmatprep.subr.mxu0 0.0
        %1115 = vmatpush1.msra.mxu0 %v1103
        %1116 = vmatprep.subr.mxu0 0.0
        %1117 = vmatpush1.msra.mxu0 0.0
        %1118 = vmatprep.subr.mxu0 0.0
        %1119 = vmatpush1.msra.mxu0 0.0
        %1120 = vmatprep.subr.mxu0 0.0
        %1121 = vmatpush1.msra.mxu0 0.0
        %1122 = vmatprep.subr.mxu0 0.0
        %1123 = vmatpush1.msra.mxu0 0.0
        %1124 = vmatprep.subr.mxu0 0.0
        %1125 = vmatpush1.msra.mxu0 0.0
        %1126 = vmatprep.subr.mxu0 0.0
        %1127 = vmatpush1.msra.mxu0 0.0
        %1128 = vmatprep.subr.mxu0 0.0
        %1129 = vmatpush1.msra.mxu0 0.0
        %1130 = vmatprep.subr.mxu0 0.0
        %1131 = vmatpush1.msra.mxu0 0.0
        %1132 = vmatprep.subr.mxu0 0.0
        %1133 = vmatpush1.msra.mxu0 0.0
        %1134 = vmatprep.subr.mxu0 0.0
        %1135 = vmatpush1.msra.mxu0 0.0
        %1136 = vmatprep.subr.mxu0 0.0
        %1137 = vmatpush1.msra.mxu0 0.0
        %1138 = vmatprep.subr.mxu0 0.0
        %1139 = vmatpush1.msra.mxu0 0.0
        %1140 = vmatprep.subr.mxu0 0.0
        %1141 = vmatpush1.msra.mxu0 0.0
        %1142 = vmatprep.subr.mxu0 0.0
        %1143 = vmatpush1.msra.mxu0 0.0
        %1144 = vmatprep.subr.mxu0 0.0
        %1145 = vmatpush1.msra.mxu0 0.0
        %1146 = vmatprep.subr.mxu0 0.0
        %1147 = vmatpush1.msra.mxu0 0.0
        %1148 = vmatprep.subr.mxu0 0.0
        %1149 = vmatpush1.msra.mxu0 0.0
        %1150 = vmatprep.subr.mxu0 0.0
        %1151 = vmatpush1.msra.mxu0 0.0
        %1152 = vmatprep.subr.mxu0 0.0
        %1153 = vmatpush1.msra.mxu0 0.0
        %1154 = vmatprep.subr.mxu0 0.0
        %1155 = vmatpush1.msra.mxu0 0.0
        %1156 = vmatprep.subr.mxu0 0.0
        %1157 = vmatpush1.msra.mxu0 0.0
        %1158 = vmatprep.subr.mxu0 0.0
        %1159 = vmatpush1.msra.mxu0 0.0
        %1160 = vmatprep.subr.mxu0 0.0
        %1161 = vmatpush1.msra.mxu0 0.0
        %1162 = vmatprep.subr.mxu0 0.0
        %1163 = vmatpush1.msra.mxu0 0.0
        %1164 = vmatprep.subr.mxu0 0.0
        %1165 = vmatpush1.msra.mxu0 0.0
        %1166 = vmatprep.subr.mxu0 0.0
        %1167 = vmatpush1.msra.mxu0 0.0
        %1168 = vmatprep.subr.mxu0 0.0
        %1169 = vmatpush1.msra.mxu0 0.0
        %1170 = vmatprep.subr.mxu0 0.0
        %1171 = vmatpush1.msra.mxu0 0.0
        %1172 = vmatprep.subr.mxu0 0.0
        %1173 = vmatpush1.msra.mxu0 0.0
        %1174 = vmatprep.subr.mxu0 0.0
        %1175 = vmatpush1.msra.mxu0 0.0
        %1176 = vmatprep.mubr.f32.mxu0 0.0
        %1177 = vmatmul.mubr.f32.gmra.mrb[0].mxu0 %v1107
        %v1178 = vpop.f32.mrb[0].mxu0
        %v1179 = vadd.f32 0.0, %v1178
        %v1180 = vpop.f32.mrb[0].mxu0
        %1181 = vmatprep.mubr.f32.mxu0 0.0
        %1182 = vmatmul.mubr.f32.gmra.mrb[0].mxu0 %v1110
        %v1183 = vpop.f32.mrb[0].mxu0
        %v1184 = vadd.f32 0.0, %v1183
        %v1185 = vpop.f32.mrb[0].mxu0
        %1186 = vdwg.mxu0
        %v1187 = vld [vmem:[#allocation9 + $0x20] sm:$0xff]
        %v1188 = vld [vmem:[#allocation9 + $0x28] sm:$0xff]
        %v1189 = vld [vmem:[#allocation9 + $0x30] sm:$0xff]
        %v1190 = vld [vmem:[#allocation9 + $0x38] sm:$0xff]
        %v1192 = vsel %vm789, %v1179, 0
        %v1195 = vsel %vm789, %v1184, 0
        %1197 = vmatprep.subr.mxu0 0.0
        %1198 = vmatpush1.msra.mxu0 %v1187
        %1199 = vmatprep.subr.mxu0 0.0
        %1200 = vmatpush1.msra.mxu0 %v1188
        %1201 = vmatprep.subr.mxu0 0.0
        %1202 = vmatpush1.msra.mxu0 %v1189
        %1203 = vmatprep.subr.mxu0 0.0
        %1204 = vmatpush1.msra.mxu0 %v1190
        %1205 = vmatprep.subr.mxu0 0.0
        %1206 = vmatpush1.msra.mxu0 0.0
        %1207 = vmatprep.subr.mxu0 0.0
        %1208 = vmatpush1.msra.mxu0 0.0
        %1209 = vmatprep.subr.mxu0 0.0
        %1210 = vmatpush1.msra.mxu0 0.0
        %1211 = vmatprep.subr.mxu0 0.0
        %1212 = vmatpush1.msra.mxu0 0.0
        %1213 = vmatprep.subr.mxu0 0.0
        %1214 = vmatpush1.msra.mxu0 0.0
        %1215 = vmatprep.subr.mxu0 0.0
        %1216 = vmatpush1.msra.mxu0 0.0
        %1217 = vmatprep.subr.mxu0 0.0
        %1218 = vmatpush1.msra.mxu0 0.0
        %1219 = vmatprep.subr.mxu0 0.0
        %1220 = vmatpush1.msra.mxu0 0.0
        %1221 = vmatprep.subr.mxu0 0.0
        %1222 = vmatpush1.msra.mxu0 0.0
        %1223 = vmatprep.subr.mxu0 0.0
        %1224 = vmatpush1.msra.mxu0 0.0
        %1225 = vmatprep.subr.mxu0 0.0
        %1226 = vmatpush1.msra.mxu0 0.0
        %1227 = vmatprep.subr.mxu0 0.0
        %1228 = vmatpush1.msra.mxu0 0.0
        %1229 = vmatprep.subr.mxu0 0.0
        %1230 = vmatpush1.msra.mxu0 0.0
        %1231 = vmatprep.subr.mxu0 0.0
        %1232 = vmatpush1.msra.mxu0 0.0
        %1233 = vmatprep.subr.mxu0 0.0
        %1234 = vmatpush1.msra.mxu0 0.0
        %1235 = vmatprep.subr.mxu0 0.0
        %1236 = vmatpush1.msra.mxu0 0.0
        %1237 = vmatprep.subr.mxu0 0.0
        %1238 = vmatpush1.msra.mxu0 0.0
        %1239 = vmatprep.subr.mxu0 0.0
        %1240 = vmatpush1.msra.mxu0 0.0
        %1241 = vmatprep.subr.mxu0 0.0
        %1242 = vmatpush1.msra.mxu0 0.0
        %1243 = vmatprep.subr.mxu0 0.0
        %1244 = vmatpush1.msra.mxu0 0.0
        %1245 = vmatprep.subr.mxu0 0.0
        %1246 = vmatpush1.msra.mxu0 0.0
        %1247 = vmatprep.subr.mxu0 0.0
        %1248 = vmatpush1.msra.mxu0 0.0
        %1249 = vmatprep.subr.mxu0 0.0
        %1250 = vmatpush1.msra.mxu0 0.0
        %1251 = vmatprep.subr.mxu0 0.0
        %1252 = vmatpush1.msra.mxu0 0.0
        %1253 = vmatprep.subr.mxu0 0.0
        %1254 = vmatpush1.msra.mxu0 0.0
        %1255 = vmatprep.subr.mxu0 0.0
        %1256 = vmatpush1.msra.mxu0 0.0
        %1257 = vmatprep.subr.mxu0 0.0
        %1258 = vmatpush1.msra.mxu0 0.0
        %1259 = vmatprep.subr.mxu0 0.0
        %1260 = vmatpush1.msra.mxu0 0.0
        %1261 = vmatprep.mubr.f32.mxu0 0.0
        %1262 = vmatmul.mubr.f32.gmra.mrb[0].mxu0 %v1192
        %v1263 = vpop.f32.mrb[0].mxu0
        %v1264 = vadd.f32 0.0, %v1263
        %v1265 = vpop.f32.mrb[0].mxu0
        %1266 = vmatprep.mubr.f32.mxu0 0.0
        %1267 = vmatmul.mubr.f32.gmra.mrb[0].mxu0 %v1195
        %v1268 = vpop.f32.mrb[0].mxu0
        %v1269 = vadd.f32 0.0, %v1268
        %v1270 = vpop.f32.mrb[0].mxu0
        %1271 = vdwg.mxu0
        %v1273 = vsel %vm789, %v973, 0
        %v1276 = vsel %vm789, %v978, 0
        %1278 = vmatprep.subr.mxu0 0.0
        %1279 = vmatpush1.msra.mxu0 %v981
        %1280 = vmatprep.subr.mxu0 0.0
        %1281 = vmatpush1.msra.mxu0 %v982
        %1282 = vmatprep.subr.mxu0 0.0
        %1283 = vmatpush1.msra.mxu0 %v983
        %1284 = vmatprep.subr.mxu0 0.0
        %1285 = vmatpush1.msra.mxu0 %v984
        %1286 = vmatprep.subr.mxu0 0.0
        %1287 = vmatpush1.msra.mxu0 0.0
        %1288 = vmatprep.subr.mxu0 0.0
        %1289 = vmatpush1.msra.mxu0 0.0
        %1290 = vmatprep.subr.mxu0 0.0
        %1291 = vmatpush1.msra.mxu0 0.0
        %1292 = vmatprep.subr.mxu0 0.0
        %1293 = vmatpush1.msra.mxu0 0.0
        %1294 = vmatprep.subr.mxu0 0.0
        %1295 = vmatpush1.msra.mxu0 0.0
        %1296 = vmatprep.subr.mxu0 0.0
        %1297 = vmatpush1.msra.mxu0 0.0
        %1298 = vmatprep.subr.mxu0 0.0
        %1299 = vmatpush1.msra.mxu0 0.0
        %1300 = vmatprep.subr.mxu0 0.0
        %1301 = vmatpush1.msra.mxu0 0.0
        %1302 = vmatprep.subr.mxu0 0.0
        %1303 = vmatpush1.msra.mxu0 0.0
        %1304 = vmatprep.subr.mxu0 0.0
        %1305 = vmatpush1.msra.mxu0 0.0
        %1306 = vmatprep.subr.mxu0 0.0
        %1307 = vmatpush1.msra.mxu0 0.0
        %1308 = vmatprep.subr.mxu0 0.0
        %1309 = vmatpush1.msra.mxu0 0.0
        %1310 = vmatprep.subr.mxu0 0.0
        %1311 = vmatpush1.msra.mxu0 0.0
        %1312 = vmatprep.subr.mxu0 0.0
        %1313 = vmatpush1.msra.mxu0 0.0
        %1314 = vmatprep.subr.mxu0 0.0
        %1315 = vmatpush1.msra.mxu0 0.0
        %1316 = vmatprep.subr.mxu0 0.0
        %1317 = vmatpush1.msra.mxu0 0.0
        %1318 = vmatprep.subr.mxu0 0.0
        %1319 = vmatpush1.msra.mxu0 0.0
        %1320 = vmatprep.subr.mxu0 0.0
        %1321 = vmatpush1.msra.mxu0 0.0
        %1322 = vmatprep.subr.mxu0 0.0
        %1323 = vmatpush1.msra.mxu0 0.0
        %1324 = vmatprep.subr.mxu0 0.0
        %1325 = vmatpush1.msra.mxu0 0.0
        %1326 = vmatprep.subr.mxu0 0.0
        %1327 = vmatpush1.msra.mxu0 0.0
        %1328 = vmatprep.subr.mxu0 0.0
        %1329 = vmatpush1.msra.mxu0 0.0
        %1330 = vmatprep.subr.mxu0 0.0
        %1331 = vmatpush1.msra.mxu0 0.0
        %1332 = vmatprep.subr.mxu0 0.0
        %1333 = vmatpush1.msra.mxu0 0.0
        %1334 = vmatprep.subr.mxu0 0.0
        %1335 = vmatpush1.msra.mxu0 0.0
        %1336 = vmatprep.subr.mxu0 0.0
        %1337 = vmatpush1.msra.mxu0 0.0
        %1338 = vmatprep.subr.mxu0 0.0
        %1339 = vmatpush1.msra.mxu0 0.0
        %1340 = vmatprep.subr.mxu0 0.0
        %1341 = vmatpush1.msra.mxu0 0.0
        %1342 = vmatprep.mubr.f32.mxu0 0.0
        %1343 = vmatmul.mubr.f32.gmra.mrb[0].mxu0 %v1273
        %v1344 = vpop.f32.mrb[0].mxu0
        %v1345 = vadd.f32 %v1264, %v1344
        %v1346 = vpop.f32.mrb[0].mxu0
        %1347 = vmatprep.mubr.f32.mxu0 0.0
        %1348 = vmatmul.mubr.f32.gmra.mrb[0].mxu0 %v1276
        %v1349 = vpop.f32.mrb[0].mxu0
        %v1350 = vadd.f32 %v1269, %v1349
        %v1351 = vpop.f32.mrb[0].mxu0
        %1352 = vdwg.mxu0
        %1353 = vrot.lane.b32.xlu0 %v783, 64
        %v1354 = vpop.permute.xlu0 %1353
        %1355 = vrot.lane.b32.xlu0 %v784, 64
        %v1356 = vpop.permute.xlu0 %1355
        %1357 = vrot.lane.b32.xlu0 %v785, 64
        %v1358 = vpop.permute.xlu0 %1357
        %1359 = vrot.lane.b32.xlu0 %v786, 64
        %v1360 = vpop.permute.xlu0 %1359
        %v1361 = vsel %vm789, %v1354, 0
        %v1363 = vsel %vm789, %v1356, 0
        %v1365 = vsel %vm789, %v1358, 0
        %v1367 = vsel %vm789, %v1360, 0
        %1369 = vmatprep.subr.mxu0 0.0
        %1370 = vmatpush1.xpose.msra.mxu0 %v1365
        %1371 = vmatprep.subr.mxu0 0.0
        %1372 = vmatpush1.xpose.msra.mxu0 %v1367
        %1373 = vmatprep.subr.mxu0 0.0
        %1374 = vmatpush1.xpose.msra.mxu0 0.0
        %1375 = vmatprep.subr.mxu0 0.0
        %1376 = vmatpush1.xpose.msra.mxu0 0.0
        %1377 = vmatprep.subr.mxu0 0.0
        %1378 = vmatpush1.xpose.msra.mxu0 0.0
        %1379 = vmatprep.subr.mxu0 0.0
        %1380 = vmatpush1.xpose.msra.mxu0 0.0
        %1381 = vmatprep.subr.mxu0 0.0
        %1382 = vmatpush1.xpose.msra.mxu0 0.0
        %1383 = vmatprep.subr.mxu0 0.0
        %1384 = vmatpush1.xpose.msra.mxu0 0.0
        %1385 = vmatprep.subr.mxu0 0.0
        %1386 = vmatpush1.xpose.msra.mxu0 0.0
        %1387 = vmatprep.subr.mxu0 0.0
        %1388 = vmatpush1.xpose.msra.mxu0 0.0
        %1389 = vmatprep.subr.mxu0 0.0
        %1390 = vmatpush1.xpose.msra.mxu0 0.0
        %1391 = vmatprep.subr.mxu0 0.0
        %1392 = vmatpush1.xpose.msra.mxu0 0.0
        %1393 = vmatprep.subr.mxu0 0.0
        %1394 = vmatpush1.xpose.msra.mxu0 0.0
        %1395 = vmatprep.subr.mxu0 0.0
        %1396 = vmatpush1.xpose.msra.mxu0 0.0
        %1397 = vmatprep.subr.mxu0 0.0
        %1398 = vmatpush1.xpose.msra.mxu0 0.0
        %1399 = vmatprep.subr.mxu0 0.0
        %1400 = vmatpush1.xpose.msra.mxu0 0.0
        %1401 = vmatprep.subr.mxu0 0.0
        %1402 = vmatpush1.xpose.msra.mxu0 0.0
        %1403 = vmatprep.subr.mxu0 0.0
        %1404 = vmatpush1.xpose.msra.mxu0 0.0
        %1405 = vmatprep.subr.mxu0 0.0
        %1406 = vmatpush1.xpose.msra.mxu0 0.0
        %1407 = vmatprep.subr.mxu0 0.0
        %1408 = vmatpush1.xpose.msra.mxu0 0.0
        %1409 = vmatprep.subr.mxu0 0.0
        %1410 = vmatpush1.xpose.msra.mxu0 0.0
        %1411 = vmatprep.subr.mxu0 0.0
        %1412 = vmatpush1.xpose.msra.mxu0 0.0
        %1413 = vmatprep.subr.mxu0 0.0
        %1414 = vmatpush1.xpose.msra.mxu0 0.0
        %1415 = vmatprep.subr.mxu0 0.0
        %1416 = vmatpush1.xpose.msra.mxu0 0.0
        %1417 = vmatprep.subr.mxu0 0.0
        %1418 = vmatpush1.xpose.msra.mxu0 0.0
        %1419 = vmatprep.subr.mxu0 0.0
        %1420 = vmatpush1.xpose.msra.mxu0 0.0
        %1421 = vmatprep.subr.mxu0 0.0
        %1422 = vmatpush1.xpose.msra.mxu0 0.0
        %1423 = vmatprep.subr.mxu0 0.0
        %1424 = vmatpush1.xpose.msra.mxu0 0.0
        %1425 = vmatprep.subr.mxu0 0.0
        %1426 = vmatpush1.xpose.msra.mxu0 0.0
        %1427 = vmatprep.subr.mxu0 0.0
        %1428 = vmatpush1.xpose.msra.mxu0 0.0
        %1429 = vmatprep.subr.mxu0 0.0
        %1430 = vmatpush1.xpose.msra.mxu0 0.0
        %1431 = vmatprep.subr.mxu0 0.0
        %1432 = vmatpush1.xpose.msra.mxu0 0.0
        %1433 = vmatprep.mubr.f32.mxu0 0.0
        %1434 = vmatmul.mubr.f32.gmra.mrb[0].mxu0 %v1361
        %v1435 = vpop.f32.mrb[0].mxu0
        %v1436 = vadd.f32 0.0, %v1435
        %v1437 = vpop.f32.mrb[0].mxu0
        %1438 = vmatprep.mubr.f32.mxu0 0.0
        %1439 = vmatmul.mubr.f32.gmra.mrb[0].mxu0 %v1363
        %v1440 = vpop.f32.mrb[0].mxu0
        %v1441 = vadd.f32 0.0, %v1440
        %v1442 = vpop.f32.mrb[0].mxu0
        %1443 = vdwg.mxu0
        %v1444 = vsel %vm877, %v1436, -inf
        %1445 = vmax.xlane.f32.xlu0 %v1444
        %v1446 = vpop.xlane.xlu0 %1445
        %v1447 = vsel %vm877, %v1441, -inf
        %1448 = vmax.xlane.f32.xlu0 %v1447
        %v1449 = vpop.xlane.xlu0 %1448
        %v1450 = vsub.f32 %v1436, %v1446
        %v1451 = vsub.f32 %v1441, %v1449
        %v1452 = vmul.f32 %v1450, 1.442695
        %v1453 = vpow.pop %v1452
        %v1454 = vmul.f32 %v1451, 1.442695
        %v1455 = vpow.pop %v1454
        %v1456 = vsel %vm877, %v1453, 0.0
        %1457 = vadd.xlane.f32.xlu0 %v1456
        %v1458 = vpop.xlane.xlu0 %1457
        %v1459 = vsel %vm877, %v1455, 0.0
        %1460 = vadd.xlane.f32.xlu0 %v1459
        %v1461 = vpop.xlane.xlu0 %1460
        %v1462 = vrcp.pop %v1458
        %v1463 = vmul.f32 %v1453, %v1462
        %v1464 = vrcp.pop %v1461
        %v1465 = vmul.f32 %v1455, %v1464
        %1466 = vrot.lane.b32.xlu0 %v787, 64
        %v1467 = vpop.permute.xlu0 %1466
        %1468 = vrot.lane.b32.xlu0 %v788, 64
        %v1469 = vpop.permute.xlu0 %1468
        %v1473 = vsel %vm877, %v1463, 0
        %v1476 = vsel %vm877, %v1465, 0
        %1478 = vmatprep.subr.mxu0 0.0
        %1479 = vmatpush1.msra.mxu0 %v1467
        %1480 = vmatprep.subr.mxu0 0.0
        %1481 = vmatpush1.msra.mxu0 %v1469
        %1482 = vmatprep.subr.mxu0 0.0
        %1483 = vmatpush1.msra.mxu0 0.0
        %1484 = vmatprep.subr.mxu0 0.0
        %1485 = vmatpush1.msra.mxu0 0.0
        %1486 = vmatprep.subr.mxu0 0.0
        %1487 = vmatpush1.msra.mxu0 0.0
        %1488 = vmatprep.subr.mxu0 0.0
        %1489 = vmatpush1.msra.mxu0 0.0
        %1490 = vmatprep.subr.mxu0 0.0
        %1491 = vmatpush1.msra.mxu0 0.0
        %1492 = vmatprep.subr.mxu0 0.0
        %1493 = vmatpush1.msra.mxu0 0.0
        %1494 = vmatprep.subr.mxu0 0.0
        %1495 = vmatpush1.msra.mxu0 0.0
        %1496 = vmatprep.subr.mxu0 0.0
        %1497 = vmatpush1.msra.mxu0 0.0
        %1498 = vmatprep.subr.mxu0 0.0
        %1499 = vmatpush1.msra.mxu0 0.0
        %1500 = vmatprep.subr.mxu0 0.0
        %1501 = vmatpush1.msra.mxu0 0.0
        %1502 = vmatprep.subr.mxu0 0.0
        %1503 = vmatpush1.msra.mxu0 0.0
        %1504 = vmatprep.subr.mxu0 0.0
        %1505 = vmatpush1.msra.mxu0 0.0
        %1506 = vmatprep.subr.mxu0 0.0
        %1507 = vmatpush1.msra.mxu0 0.0
        %1508 = vmatprep.subr.mxu0 0.0
        %1509 = vmatpush1.msra.mxu0 0.0
        %1510 = vmatprep.subr.mxu0 0.0
        %1511 = vmatpush1.msra.mxu0 0.0
        %1512 = vmatprep.subr.mxu0 0.0
        %1513 = vmatpush1.msra.mxu0 0.0
        %1514 = vmatprep.subr.mxu0 0.0
        %1515 = vmatpush1.msra.mxu0 0.0
        %1516 = vmatprep.subr.mxu0 0.0
        %1517 = vmatpush1.msra.mxu0 0.0
        %1518 = vmatprep.subr.mxu0 0.0
        %1519 = vmatpush1.msra.mxu0 0.0
        %1520 = vmatprep.subr.mxu0 0.0
        %1521 = vmatpush1.msra.mxu0 0.0
        %1522 = vmatprep.subr.mxu0 0.0
        %1523 = vmatpush1.msra.mxu0 0.0
        %1524 = vmatprep.subr.mxu0 0.0
        %1525 = vmatpush1.msra.mxu0 0.0
        %1526 = vmatprep.subr.mxu0 0.0
        %1527 = vmatpush1.msra.mxu0 0.0
        %1528 = vmatprep.subr.mxu0 0.0
        %1529 = vmatpush1.msra.mxu0 0.0
        %1530 = vmatprep.subr.mxu0 0.0
        %1531 = vmatpush1.msra.mxu0 0.0
        %1532 = vmatprep.subr.mxu0 0.0
        %1533 = vmatpush1.msra.mxu0 0.0
        %1534 = vmatprep.subr.mxu0 0.0
        %1535 = vmatpush1.msra.mxu0 0.0
        %1536 = vmatprep.subr.mxu0 0.0
        %1537 = vmatpush1.msra.mxu0 0.0
        %1538 = vmatprep.subr.mxu0 0.0
        %1539 = vmatpush1.msra.mxu0 0.0
        %1540 = vmatprep.subr.mxu0 0.0
        %1541 = vmatpush1.msra.mxu0 0.0
        %1542 = vmatprep.mubr.f32.mxu0 0.0
        %1543 = vmatmul.mubr.f32.gmra.mrb[0].mxu0 %v1473
        %v1544 = vpop.f32.mrb[0].mxu0
        %v1545 = vadd.f32 0.0, %v1544
        %v1546 = vpop.f32.mrb[0].mxu0
        %1547 = vmatprep.mubr.f32.mxu0 0.0
        %1548 = vmatmul.mubr.f32.gmra.mrb[0].mxu0 %v1476
        %v1549 = vpop.f32.mrb[0].mxu0
        %v1550 = vadd.f32 0.0, %v1549
        %v1551 = vpop.f32.mrb[0].mxu0
        %1552 = vdwg.mxu0
        %v1553 = vld [vmem:[#allocation9 + $0x40] sm:$0xff]
        %v1554 = vld [vmem:[#allocation9 + $0x48] sm:$0xff]
        %v1555 = vld [vmem:[#allocation9 + $0x50] sm:$0xff]
        %v1556 = vld [vmem:[#allocation9 + $0x58] sm:$0xff]
        %v1558 = vsel %vm789, %v1545, 0
        %v1561 = vsel %vm789, %v1550, 0
        %1563 = vmatprep.subr.mxu0 0.0
        %1564 = vmatpush1.msra.mxu0 %v1553
        %1565 = vmatprep.subr.mxu0 0.0
        %1566 = vmatpush1.msra.mxu0 %v1554
        %1567 = vmatprep.subr.mxu0 0.0
        %1568 = vmatpush1.msra.mxu0 %v1555
        %1569 = vmatprep.subr.mxu0 0.0
        %1570 = vmatpush1.msra.mxu0 %v1556
        %1571 = vmatprep.subr.mxu0 0.0
        %1572 = vmatpush1.msra.mxu0 0.0
        %1573 = vmatprep.subr.mxu0 0.0
        %1574 = vmatpush1.msra.mxu0 0.0
        %1575 = vmatprep.subr.mxu0 0.0
        %1576 = vmatpush1.msra.mxu0 0.0
        %1577 = vmatprep.subr.mxu0 0.0
        %1578 = vmatpush1.msra.mxu0 0.0
        %1579 = vmatprep.subr.mxu0 0.0
        %1580 = vmatpush1.msra.mxu0 0.0
        %1581 = vmatprep.subr.mxu0 0.0
        %1582 = vmatpush1.msra.mxu0 0.0
        %1583 = vmatprep.subr.mxu0 0.0
        %1584 = vmatpush1.msra.mxu0 0.0
        %1585 = vmatprep.subr.mxu0 0.0
        %1586 = vmatpush1.msra.mxu0 0.0
        %1587 = vmatprep.subr.mxu0 0.0
        %1588 = vmatpush1.msra.mxu0 0.0
        %1589 = vmatprep.subr.mxu0 0.0
        %1590 = vmatpush1.msra.mxu0 0.0
        %1591 = vmatprep.subr.mxu0 0.0
        %1592 = vmatpush1.msra.mxu0 0.0
        %1593 = vmatprep.subr.mxu0 0.0
        %1594 = vmatpush1.msra.mxu0 0.0
        %1595 = vmatprep.subr.mxu0 0.0
        %1596 = vmatpush1.msra.mxu0 0.0
        %1597 = vmatprep.subr.mxu0 0.0
        %1598 = vmatpush1.msra.mxu0 0.0
        %1599 = vmatprep.subr.mxu0 0.0
        %1600 = vmatpush1.msra.mxu0 0.0
        %1601 = vmatprep.subr.mxu0 0.0
        %1602 = vmatpush1.msra.mxu0 0.0
        %1603 = vmatprep.subr.mxu0 0.0
        %1604 = vmatpush1.msra.mxu0 0.0
        %1605 = vmatprep.subr.mxu0 0.0
        %1606 = vmatpush1.msra.mxu0 0.0
        %1607 = vmatprep.subr.mxu0 0.0
        %1608 = vmatpush1.msra.mxu0 0.0
        %1609 = vmatprep.subr.mxu0 0.0
        %1610 = vmatpush1.msra.mxu0 0.0
        %1611 = vmatprep.subr.mxu0 0.0
        %1612 = vmatpush1.msra.mxu0 0.0
        %1613 = vmatprep.subr.mxu0 0.0
        %1614 = vmatpush1.msra.mxu0 0.0
        %1615 = vmatprep.subr.mxu0 0.0
        %1616 = vmatpush1.msra.mxu0 0.0
        %1617 = vmatprep.subr.mxu0 0.0
        %1618 = vmatpush1.msra.mxu0 0.0
        %1619 = vmatprep.subr.mxu0 0.0
        %1620 = vmatpush1.msra.mxu0 0.0
        %1621 = vmatprep.subr.mxu0 0.0
        %1622 = vmatpush1.msra.mxu0 0.0
        %1623 = vmatprep.subr.mxu0 0.0
        %1624 = vmatpush1.msra.mxu0 0.0
        %1625 = vmatprep.subr.mxu0 0.0
        %1626 = vmatpush1.msra.mxu0 0.0
        %1627 = vmatprep.mubr.f32.mxu0 0.0
        %1628 = vmatmul.mubr.f32.gmra.mrb[0].mxu0 %v1558
        %v1629 = vpop.f32.mrb[0].mxu0
        %v1630 = vadd.f32 0.0, %v1629
        %v1631 = vpop.f32.mrb[0].mxu0
        %1632 = vmatprep.mubr.f32.mxu0 0.0
        %1633 = vmatmul.mubr.f32.gmra.mrb[0].mxu0 %v1561
        %v1634 = vpop.f32.mrb[0].mxu0
        %v1635 = vadd.f32 0.0, %v1634
        %v1636 = vpop.f32.mrb[0].mxu0
        %1637 = vdwg.mxu0
        %v1638 = vadd.f32 %v1345, %v1630
        %v1639 = vadd.f32 %v1350, %v1635
        %1640 = vrot.lane.b32.xlu0 %v783, 32
        %v1641 = vpop.permute.xlu0 %1640
        %1642 = vrot.lane.b32.xlu0 %v784, 32
        %v1643 = vpop.permute.xlu0 %1642
        %1644 = vrot.lane.b32.xlu0 %v785, 32
        %v1645 = vpop.permute.xlu0 %1644
        %1646 = vrot.lane.b32.xlu0 %v786, 32
        %v1647 = vpop.permute.xlu0 %1646
        %v1648 = vsel %vm789, %v1641, 0
        %v1650 = vsel %vm789, %v1643, 0
        %v1652 = vsel %vm789, %v1645, 0
        %v1654 = vsel %vm789, %v1647, 0
        %1656 = vmatprep.subr.mxu0 0.0
        %1657 = vmatpush1.xpose.msra.mxu0 %v1652
        %1658 = vmatprep.subr.mxu0 0.0
        %1659 = vmatpush1.xpose.msra.mxu0 %v1654
        %1660 = vmatprep.subr.mxu0 0.0
        %1661 = vmatpush1.xpose.msra.mxu0 0.0
        %1662 = vmatprep.subr.mxu0 0.0
        %1663 = vmatpush1.xpose.msra.mxu0 0.0
        %1664 = vmatprep.subr.mxu0 0.0
        %1665 = vmatpush1.xpose.msra.mxu0 0.0
        %1666 = vmatprep.subr.mxu0 0.0
        %1667 = vmatpush1.xpose.msra.mxu0 0.0
        %1668 = vmatprep.subr.mxu0 0.0
        %1669 = vmatpush1.xpose.msra.mxu0 0.0
        %1670 = vmatprep.subr.mxu0 0.0
        %1671 = vmatpush1.xpose.msra.mxu0 0.0
        %1672 = vmatprep.subr.mxu0 0.0
        %1673 = vmatpush1.xpose.msra.mxu0 0.0
        %1674 = vmatprep.subr.mxu0 0.0
        %1675 = vmatpush1.xpose.msra.mxu0 0.0
        %1676 = vmatprep.subr.mxu0 0.0
        %1677 = vmatpush1.xpose.msra.mxu0 0.0
        %1678 = vmatprep.subr.mxu0 0.0
        %1679 = vmatpush1.xpose.msra.mxu0 0.0
        %1680 = vmatprep.subr.mxu0 0.0
        %1681 = vmatpush1.xpose.msra.mxu0 0.0
        %1682 = vmatprep.subr.mxu0 0.0
        %1683 = vmatpush1.xpose.msra.mxu0 0.0
        %1684 = vmatprep.subr.mxu0 0.0
        %1685 = vmatpush1.xpose.msra.mxu0 0.0
        %1686 = vmatprep.subr.mxu0 0.0
        %1687 = vmatpush1.xpose.msra.mxu0 0.0
        %1688 = vmatprep.subr.mxu0 0.0
        %1689 = vmatpush1.xpose.msra.mxu0 0.0
        %1690 = vmatprep.subr.mxu0 0.0
        %1691 = vmatpush1.xpose.msra.mxu0 0.0
        %1692 = vmatprep.subr.mxu0 0.0
        %1693 = vmatpush1.xpose.msra.mxu0 0.0
        %1694 = vmatprep.subr.mxu0 0.0
        %1695 = vmatpush1.xpose.msra.mxu0 0.0
        %1696 = vmatprep.subr.mxu0 0.0
        %1697 = vmatpush1.xpose.msra.mxu0 0.0
        %1698 = vmatprep.subr.mxu0 0.0
        %1699 = vmatpush1.xpose.msra.mxu0 0.0
        %1700 = vmatprep.subr.mxu0 0.0
        %1701 = vmatpush1.xpose.msra.mxu0 0.0
        %1702 = vmatprep.subr.mxu0 0.0
        %1703 = vmatpush1.xpose.msra.mxu0 0.0
        %1704 = vmatprep.subr.mxu0 0.0
        %1705 = vmatpush1.xpose.msra.mxu0 0.0
        %1706 = vmatprep.subr.mxu0 0.0
        %1707 = vmatpush1.xpose.msra.mxu0 0.0
        %1708 = vmatprep.subr.mxu0 0.0
        %1709 = vmatpush1.xpose.msra.mxu0 0.0
        %1710 = vmatprep.subr.mxu0 0.0
        %1711 = vmatpush1.xpose.msra.mxu0 0.0
        %1712 = vmatprep.subr.mxu0 0.0
        %1713 = vmatpush1.xpose.msra.mxu0 0.0
        %1714 = vmatprep.subr.mxu0 0.0
        %1715 = vmatpush1.xpose.msra.mxu0 0.0
        %1716 = vmatprep.subr.mxu0 0.0
        %1717 = vmatpush1.xpose.msra.mxu0 0.0
        %1718 = vmatprep.subr.mxu0 0.0
        %1719 = vmatpush1.xpose.msra.mxu0 0.0
        %1720 = vmatprep.mubr.f32.mxu0 0.0
        %1721 = vmatmul.mubr.f32.gmra.mrb[0].mxu0 %v1648
        %v1722 = vpop.f32.mrb[0].mxu0
        %v1723 = vadd.f32 0.0, %v1722
        %v1724 = vpop.f32.mrb[0].mxu0
        %1725 = vmatprep.mubr.f32.mxu0 0.0
        %1726 = vmatmul.mubr.f32.gmra.mrb[0].mxu0 %v1650
        %v1727 = vpop.f32.mrb[0].mxu0
        %v1728 = vadd.f32 0.0, %v1727
        %v1729 = vpop.f32.mrb[0].mxu0
        %1730 = vdwg.mxu0
        %v1731 = vsel %vm877, %v1723, -inf
        %1732 = vmax.xlane.f32.xlu0 %v1731
        %v1733 = vpop.xlane.xlu0 %1732
        %v1734 = vsel %vm877, %v1728, -inf
        %1735 = vmax.xlane.f32.xlu0 %v1734
        %v1736 = vpop.xlane.xlu0 %1735
        %v1737 = vsub.f32 %v1723, %v1733
        %v1738 = vsub.f32 %v1728, %v1736
        %v1739 = vmul.f32 %v1737, 1.442695
        %v1740 = vpow.pop %v1739
        %v1741 = vmul.f32 %v1738, 1.442695
        %v1742 = vpow.pop %v1741
        %v1743 = vsel %vm877, %v1740, 0.0
        %1744 = vadd.xlane.f32.xlu0 %v1743
        %v1745 = vpop.xlane.xlu0 %1744
        %v1746 = vsel %vm877, %v1742, 0.0
        %1747 = vadd.xlane.f32.xlu0 %v1746
        %v1748 = vpop.xlane.xlu0 %1747
        %v1749 = vrcp.pop %v1745
        %v1750 = vmul.f32 %v1740, %v1749
        %v1751 = vrcp.pop %v1748
        %v1752 = vmul.f32 %v1742, %v1751
        %1753 = vrot.lane.b32.xlu0 %v787, 32
        %v1754 = vpop.permute.xlu0 %1753
        %1755 = vrot.lane.b32.xlu0 %v788, 32
        %v1756 = vpop.permute.xlu0 %1755
        %v1760 = vsel %vm877, %v1750, 0
        %v1763 = vsel %vm877, %v1752, 0
        %1765 = vmatprep.subr.mxu0 0.0
        %1766 = vmatpush1.msra.mxu0 %v1754
        %1767 = vmatprep.subr.mxu0 0.0
        %1768 = vmatpush1.msra.mxu0 %v1756
        %1769 = vmatprep.subr.mxu0 0.0
        %1770 = vmatpush1.msra.mxu0 0.0
        %1771 = vmatprep.subr.mxu0 0.0
        %1772 = vmatpush1.msra.mxu0 0.0
        %1773 = vmatprep.subr.mxu0 0.0
        %1774 = vmatpush1.msra.mxu0 0.0
        %1775 = vmatprep.subr.mxu0 0.0
        %1776 = vmatpush1.msra.mxu0 0.0
        %1777 = vmatprep.subr.mxu0 0.0
        %1778 = vmatpush1.msra.mxu0 0.0
        %1779 = vmatprep.subr.mxu0 0.0
        %1780 = vmatpush1.msra.mxu0 0.0
        %1781 = vmatprep.subr.mxu0 0.0
        %1782 = vmatpush1.msra.mxu0 0.0
        %1783 = vmatprep.subr.mxu0 0.0
        %1784 = vmatpush1.msra.mxu0 0.0
        %1785 = vmatprep.subr.mxu0 0.0
        %1786 = vmatpush1.msra.mxu0 0.0
        %1787 = vmatprep.subr.mxu0 0.0
        %1788 = vmatpush1.msra.mxu0 0.0
        %1789 = vmatprep.subr.mxu0 0.0
        %1790 = vmatpush1.msra.mxu0 0.0
        %1791 = vmatprep.subr.mxu0 0.0
        %1792 = vmatpush1.msra.mxu0 0.0
        %1793 = vmatprep.subr.mxu0 0.0
        %1794 = vmatpush1.msra.mxu0 0.0
        %1795 = vmatprep.subr.mxu0 0.0
        %1796 = vmatpush1.msra.mxu0 0.0
        %1797 = vmatprep.subr.mxu0 0.0
        %1798 = vmatpush1.msra.mxu0 0.0
        %1799 = vmatprep.subr.mxu0 0.0
        %1800 = vmatpush1.msra.mxu0 0.0
        %1801 = vmatprep.subr.mxu0 0.0
        %1802 = vmatpush1.msra.mxu0 0.0
        %1803 = vmatprep.subr.mxu0 0.0
        %1804 = vmatpush1.msra.mxu0 0.0
        %1805 = vmatprep.subr.mxu0 0.0
        %1806 = vmatpush1.msra.mxu0 0.0
        %1807 = vmatprep.subr.mxu0 0.0
        %1808 = vmatpush1.msra.mxu0 0.0
        %1809 = vmatprep.subr.mxu0 0.0
        %1810 = vmatpush1.msra.mxu0 0.0
        %1811 = vmatprep.subr.mxu0 0.0
        %1812 = vmatpush1.msra.mxu0 0.0
        %1813 = vmatprep.subr.mxu0 0.0
        %1814 = vmatpush1.msra.mxu0 0.0
        %1815 = vmatprep.subr.mxu0 0.0
        %1816 = vmatpush1.msra.mxu0 0.0
        %1817 = vmatprep.subr.mxu0 0.0
        %1818 = vmatpush1.msra.mxu0 0.0
        %1819 = vmatprep.subr.mxu0 0.0
        %1820 = vmatpush1.msra.mxu0 0.0
        %1821 = vmatprep.subr.mxu0 0.0
        %1822 = vmatpush1.msra.mxu0 0.0
        %1823 = vmatprep.subr.mxu0 0.0
        %1824 = vmatpush1.msra.mxu0 0.0
        %1825 = vmatprep.subr.mxu0 0.0
        %1826 = vmatpush1.msra.mxu0 0.0
        %1827 = vmatprep.subr.mxu0 0.0
        %1828 = vmatpush1.msra.mxu0 0.0
        %1829 = vmatprep.mubr.f32.mxu0 0.0
        %1830 = vmatmul.mubr.f32.gmra.mrb[0].mxu0 %v1760
        %v1831 = vpop.f32.mrb[0].mxu0
        %v1832 = vadd.f32 0.0, %v1831
        %v1833 = vpop.f32.mrb[0].mxu0
        %1834 = vmatprep.mubr.f32.mxu0 0.0
        %1835 = vmatmul.mubr.f32.gmra.mrb[0].mxu0 %v1763
        %v1836 = vpop.f32.mrb[0].mxu0
        %v1837 = vadd.f32 0.0, %v1836
        %v1838 = vpop.f32.mrb[0].mxu0
        %1839 = vdwg.mxu0
        %v1840 = vld [vmem:[#allocation9 + $0x60] sm:$0xff]
        %v1841 = vld [vmem:[#allocation9 + $0x68] sm:$0xff]
        %v1842 = vld [vmem:[#allocation9 + $0x70] sm:$0xff]
        %v1843 = vld [vmem:[#allocation9 + $0x78] sm:$0xff]
        %v1845 = vsel %vm789, %v1832, 0
        %v1848 = vsel %vm789, %v1837, 0
        %1850 = vmatprep.subr.mxu0 0.0
        %1851 = vmatpush1.msra.mxu0 %v1840
        %1852 = vmatprep.subr.mxu0 0.0
        %1853 = vmatpush1.msra.mxu0 %v1841
        %1854 = vmatprep.subr.mxu0 0.0
        %1855 = vmatpush1.msra.mxu0 %v1842
        %1856 = vmatprep.subr.mxu0 0.0
        %1857 = vmatpush1.msra.mxu0 %v1843
        %1858 = vmatprep.subr.mxu0 0.0
        %1859 = vmatpush1.msra.mxu0 0.0
        %1860 = vmatprep.subr.mxu0 0.0
        %1861 = vmatpush1.msra.mxu0 0.0
        %1862 = vmatprep.subr.mxu0 0.0
        %1863 = vmatpush1.msra.mxu0 0.0
        %1864 = vmatprep.subr.mxu0 0.0
        %1865 = vmatpush1.msra.mxu0 0.0
        %1866 = vmatprep.subr.mxu0 0.0
        %1867 = vmatpush1.msra.mxu0 0.0
        %1868 = vmatprep.subr.mxu0 0.0
        %1869 = vmatpush1.msra.mxu0 0.0
        %1870 = vmatprep.subr.mxu0 0.0
        %1871 = vmatpush1.msra.mxu0 0.0
        %1872 = vmatprep.subr.mxu0 0.0
        %1873 = vmatpush1.msra.mxu0 0.0
        %1874 = vmatprep.subr.mxu0 0.0
        %1875 = vmatpush1.msra.mxu0 0.0
        %1876 = vmatprep.subr.mxu0 0.0
        %1877 = vmatpush1.msra.mxu0 0.0
        %1878 = vmatprep.subr.mxu0 0.0
        %1879 = vmatpush1.msra.mxu0 0.0
        %1880 = vmatprep.subr.mxu0 0.0
        %1881 = vmatpush1.msra.mxu0 0.0
        %1882 = vmatprep.subr.mxu0 0.0
        %1883 = vmatpush1.msra.mxu0 0.0
        %1884 = vmatprep.subr.mxu0 0.0
        %1885 = vmatpush1.msra.mxu0 0.0
        %1886 = vmatprep.subr.mxu0 0.0
        %1887 = vmatpush1.msra.mxu0 0.0
        %1888 = vmatprep.subr.mxu0 0.0
        %1889 = vmatpush1.msra.mxu0 0.0
        %1890 = vmatprep.subr.mxu0 0.0
        %1891 = vmatpush1.msra.mxu0 0.0
        %1892 = vmatprep.subr.mxu0 0.0
        %1893 = vmatpush1.msra.mxu0 0.0
        %1894 = vmatprep.subr.mxu0 0.0
        %1895 = vmatpush1.msra.mxu0 0.0
        %1896 = vmatprep.subr.mxu0 0.0
        %1897 = vmatpush1.msra.mxu0 0.0
        %1898 = vmatprep.subr.mxu0 0.0
        %1899 = vmatpush1.msra.mxu0 0.0
        %1900 = vmatprep.subr.mxu0 0.0
        %1901 = vmatpush1.msra.mxu0 0.0
        %1902 = vmatprep.subr.mxu0 0.0
        %1903 = vmatpush1.msra.mxu0 0.0
        %1904 = vmatprep.subr.mxu0 0.0
        %1905 = vmatpush1.msra.mxu0 0.0
        %1906 = vmatprep.subr.mxu0 0.0
        %1907 = vmatpush1.msra.mxu0 0.0
        %1908 = vmatprep.subr.mxu0 0.0
        %1909 = vmatpush1.msra.mxu0 0.0
        %1910 = vmatprep.subr.mxu0 0.0
        %1911 = vmatpush1.msra.mxu0 0.0
        %1912 = vmatprep.subr.mxu0 0.0
        %1913 = vmatpush1.msra.mxu0 0.0
        %1914 = vmatprep.mubr.f32.mxu0 0.0
        %1915 = vmatmul.mubr.f32.gmra.mrb[0].mxu0 %v1845
        %v1916 = vpop.f32.mrb[0].mxu0
        %v1917 = vadd.f32 0.0, %v1916
        %v1918 = vpop.f32.mrb[0].mxu0
        %1919 = vmatprep.mubr.f32.mxu0 0.0
        %1920 = vmatmul.mubr.f32.gmra.mrb[0].mxu0 %v1848
        %v1921 = vpop.f32.mrb[0].mxu0
        %v1922 = vadd.f32 0.0, %v1921
        %v1923 = vpop.f32.mrb[0].mxu0
        %1924 = vdwg.mxu0
        %v1925 = vadd.f32 %v1638, %v1917
        %v1926 = vadd.f32 %v1639, %v1922
        %v1927 = vld [vmem:[%s6] sm:$0x1]
        %v1929 = vlaneseq
        %v1930 = vshrl.u32 %v1929, 7
        %v1931 = vsub.s32 0, %v1930
        %v1932 = vrot.slane %v1927, %v1931
        %v1934 = vadd.f32 %v1925, %v1932
        %v1935 = vadd.f32 %v1926, %v1932
        %v1936 = vld [vmem:[%s458] sm:$0xff]
        %v1937 = vld [vmem:[%s458 + $0x8] sm:$0xff]
        %v1938 = vadd.f32 %v1934, %v1936
        %v1939 = vadd.f32 %v1935, %v1937
        %1940 = vadd.xlane.f32.xlu0 %v1938
        %v1941 = vpop.xlane.xlu0 %1940
        %1942 = vadd.xlane.f32.xlu0 %v1939
        %v1943 = vpop.xlane.xlu0 %1942
        %v1944 = vmul.f32 %v1941, %v523
        %v1945 = vmul.f32 %v1943, %v523
        %v1946 = vsub.f32 %v1938, %v1944
        %v1947 = vsub.f32 %v1939, %v1945
        %v1948 = vmul.f32 %v1946, %v1946
        %v1949 = vmul.f32 %v1947, %v1947
        %1950 = vadd.xlane.f32.xlu0 %v1948
        %v1951 = vpop.xlane.xlu0 %1950
        %1952 = vadd.xlane.f32.xlu0 %v1949
        %v1953 = vpop.xlane.xlu0 %1952
        %v1954 = vmul.f32 %v1951, %v523
        %v1955 = vmul.f32 %v1953, %v523
        %v1956 = vadd.f32 %v1954, 1e-05
        %v1957 = vadd.f32 %v1955, 1e-05
        %v1958 = vrsqrt.pop %v1956
        %v1959 = vrsqrt.pop %v1957
        %v1960 = vmul.f32 %v1946, %v1958
        %v1961 = vmul.f32 %v1947, %v1959
        %v1962 = vld [vmem:[%s7] sm:$0x1]
        %v1964 = vlaneseq
        %v1965 = vshrl.u32 %v1964, 7
        %v1966 = vsub.s32 0, %v1965
        %v1967 = vrot.slane %v1962, %v1966
        %v1969 = vmul.f32 %v1960, %v1967
        %v1970 = vmul.f32 %v1961, %v1967
        %v1971 = vld [vmem:[%s8] sm:$0x1]
        %v1973 = vlaneseq
        %v1974 = vshrl.u32 %v1973, 7
        %v1975 = vsub.s32 0, %v1974
        %v1976 = vrot.slane %v1971, %v1975
        %v1978 = vadd.f32 %v1969, %v1976
        %v1979 = vadd.f32 %v1970, %v1976
        %1980 = vst [vmem:[#allocation3] sm:$0xff] %v1978
        %1981 = vst [vmem:[#allocation3 + $0x8] sm:$0xff] %v1979
        %v1982 = vld [vmem:[#allocation3] sm:$0xff]
        %v1983 = vld [vmem:[#allocation3 + $0x8] sm:$0xff]
        %v1984 = vld [vmem:[#allocation10] sm:$0xff]
        %v1985 = vld [vmem:[#allocation10 + $0x8] sm:$0xff]
        %v1986 = vld [vmem:[#allocation10 + $0x10] sm:$0xff]
        %v1987 = vld [vmem:[#allocation10 + $0x18] sm:$0xff]
        %v1988 = vld [vmem:[#allocation10 + $0x20] sm:$0xff]
        %v1989 = vld [vmem:[#allocation10 + $0x28] sm:$0xff]
        %v1990 = vld [vmem:[#allocation10 + $0x30] sm:$0xff]
        %v1991 = vld [vmem:[#allocation10 + $0x38] sm:$0xff]
        %v1992 = vld [vmem:[#allocation10 + $0x40] sm:$0xff]
        %v1993 = vld [vmem:[#allocation10 + $0x48] sm:$0xff]
        %v1994 = vld [vmem:[#allocation10 + $0x50] sm:$0xff]
        %v1995 = vld [vmem:[#allocation10 + $0x58] sm:$0xff]
        %v1996 = vld [vmem:[#allocation10 + $0x60] sm:$0xff]
        %v1997 = vld [vmem:[#allocation10 + $0x68] sm:$0xff]
        %v1998 = vld [vmem:[#allocation10 + $0x70] sm:$0xff]
        %v1999 = vld [vmem:[#allocation10 + $0x78] sm:$0xff]
        %v2000 = vld [vmem:[#allocation10 + $0x80] sm:$0xff]
        %v2001 = vld [vmem:[#allocation10 + $0x88] sm:$0xff]
        %v2002 = vld [vmem:[#allocation10 + $0x90] sm:$0xff]
        %v2003 = vld [vmem:[#allocation10 + $0x98] sm:$0xff]
        %v2004 = vld [vmem:[#allocation10 + $0xa0] sm:$0xff]
        %v2005 = vld [vmem:[#allocation10 + $0xa8] sm:$0xff]
        %v2006 = vld [vmem:[#allocation10 + $0xb0] sm:$0xff]
        %v2007 = vld [vmem:[#allocation10 + $0xb8] sm:$0xff]
        %v2008 = vld [vmem:[#allocation10 + $0xc0] sm:$0xff]
        %v2009 = vld [vmem:[#allocation10 + $0xc8] sm:$0xff]
        %v2010 = vld [vmem:[#allocation10 + $0xd0] sm:$0xff]
        %v2011 = vld [vmem:[#allocation10 + $0xd8] sm:$0xff]
        %v2012 = vld [vmem:[#allocation10 + $0xe0] sm:$0xff]
        %v2013 = vld [vmem:[#allocation10 + $0xe8] sm:$0xff]
        %v2014 = vld [vmem:[#allocation10 + $0xf0] sm:$0xff]
        %v2015 = vld [vmem:[#allocation10 + $0xf8] sm:$0xff]
        %v2016 = vld [vmem:[%s10] sm:$0x3]
        %v2018 = vlaneseq
        %v2019 = vshrl.u32 %v2018, 7
        %v2020 = vsub.s32 0, %v2019
        %v2021 = vrot.slane %v2016, %v2020
        %v2022 = vlaneseq
        %v2023 = vshrl.u32 %v2022, 7
        %v2024 = vsub.s32 1, %v2023
        %v2025 = vrot.slane %v2016, %v2024
        %2028 = vmatprep.subr.mxu0 %v1985
        %2029 = vmatpush1.msra.mxu0 %v1984
        %2030 = vmatprep.subr.mxu0 %v1987
        %2031 = vmatpush1.msra.mxu0 %v1986
        %2032 = vmatprep.subr.mxu0 %v1989
        %2033 = vmatpush1.msra.mxu0 %v1988
        %2034 = vmatprep.subr.mxu0 %v1991
        %2035 = vmatpush1.msra.mxu0 %v1990
        %2036 = vmatprep.subr.mxu0 %v1993
        %2037 = vmatpush1.msra.mxu0 %v1992
        %2038 = vmatprep.subr.mxu0 %v1995
        %2039 = vmatpush1.msra.mxu0 %v1994
        %2040 = vmatprep.subr.mxu0 %v1997
        %2041 = vmatpush1.msra.mxu0 %v1996
        %2042 = vmatprep.subr.mxu0 %v1999
        %2043 = vmatpush1.msra.mxu0 %v1998
        %2044 = vmatprep.subr.mxu0 %v2001
        %2045 = vmatpush1.msra.mxu0 %v2000
        %2046 = vmatprep.subr.mxu0 %v2003
        %2047 = vmatpush1.msra.mxu0 %v2002
        %2048 = vmatprep.subr.mxu0 %v2005
        %2049 = vmatpush1.msra.mxu0 %v2004
        %2050 = vmatprep.subr.mxu0 %v2007
        %2051 = vmatpush1.msra.mxu0 %v2006
        %2052 = vmatprep.subr.mxu0 %v2009
        %2053 = vmatpush1.msra.mxu0 %v2008
        %2054 = vmatprep.subr.mxu0 %v2011
        %2055 = vmatpush1.msra.mxu0 %v2010
        %2056 = vmatprep.subr.mxu0 %v2013
        %2057 = vmatpush1.msra.mxu0 %v2012
        %2058 = vmatprep.subr.mxu0 %v2015
        %2059 = vmatpush1.msra.mxu0 %v2014
        %2060 = vmatprep.subr.mxu0 0.0
        %2061 = vmatpush1.msra.mxu0 0.0
        %2062 = vmatprep.subr.mxu0 0.0
        %2063 = vmatpush1.msra.mxu0 0.0
        %2064 = vmatprep.subr.mxu0 0.0
        %2065 = vmatpush1.msra.mxu0 0.0
        %2066 = vmatprep.subr.mxu0 0.0
        %2067 = vmatpush1.msra.mxu0 0.0
        %2068 = vmatprep.subr.mxu0 0.0
        %2069 = vmatpush1.msra.mxu0 0.0
        %2070 = vmatprep.subr.mxu0 0.0
        %2071 = vmatpush1.msra.mxu0 0.0
        %2072 = vmatprep.subr.mxu0 0.0
        %2073 = vmatpush1.msra.mxu0 0.0
        %2074 = vmatprep.subr.mxu0 0.0
        %2075 = vmatpush1.msra.mxu0 0.0
        %2076 = vmatprep.subr.mxu0 0.0
        %2077 = vmatpush1.msra.mxu0 0.0
        %2078 = vmatprep.subr.mxu0 0.0
        %2079 = vmatpush1.msra.mxu0 0.0
        %2080 = vmatprep.subr.mxu0 0.0
        %2081 = vmatpush1.msra.mxu0 0.0
        %2082 = vmatprep.subr.mxu0 0.0
        %2083 = vmatpush1.msra.mxu0 0.0
        %2084 = vmatprep.subr.mxu0 0.0
        %2085 = vmatpush1.msra.mxu0 0.0
        %2086 = vmatprep.subr.mxu0 0.0
        %2087 = vmatpush1.msra.mxu0 0.0
        %2088 = vmatprep.subr.mxu0 0.0
        %2089 = vmatpush1.msra.mxu0 0.0
        %2090 = vmatprep.subr.mxu0 0.0
        %2091 = vmatpush1.msra.mxu0 0.0
        %2092 = vmatprep.mubr.f32.mxu0 0.0
        %2093 = vmatmul.mubr.f32.gmra.mrb[0].mxu0 %v1982
        %v2094 = vpop.f32.mrb[0].mxu0
        %v2095 = vadd.f32 %v2021, %v2094
        %v2096 = vpop.f32.mrb[0].mxu0
        %v2097 = vadd.f32 %v2025, %v2096
        %2098 = vmatprep.mubr.f32.mxu0 0.0
        %2099 = vmatmul.mubr.f32.gmra.mrb[0].mxu0 %v1983
        %v2100 = vpop.f32.mrb[0].mxu0
        %v2101 = vadd.f32 %v2021, %v2100
        %v2102 = vpop.f32.mrb[0].mxu0
        %v2103 = vadd.f32 %v2025, %v2102
        %2104 = vdwg.mxu0
        %v2105 = vmax.f32 %v2095, 0.0
        %v2106 = vmax.f32 %v2097, 0.0
        %v2107 = vmax.f32 %v2101, 0.0
        %v2108 = vmax.f32 %v2103, 0.0
        %v2109 = vld [vmem:[#allocation12] sm:$0xff]
        %v2110 = vld [vmem:[#allocation12 + $0x8] sm:$0xff]
        %v2111 = vld [vmem:[#allocation12 + $0x10] sm:$0xff]
        %v2112 = vld [vmem:[#allocation12 + $0x18] sm:$0xff]
        %v2113 = vld [vmem:[#allocation12 + $0x20] sm:$0xff]
        %v2114 = vld [vmem:[#allocation12 + $0x28] sm:$0xff]
        %v2115 = vld [vmem:[#allocation12 + $0x30] sm:$0xff]
        %v2116 = vld [vmem:[#allocation12 + $0x38] sm:$0xff]
        %v2117 = vld [vmem:[#allocation12 + $0x40] sm:$0xff]
        %v2118 = vld [vmem:[#allocation12 + $0x48] sm:$0xff]
        %v2119 = vld [vmem:[#allocation12 + $0x50] sm:$0xff]
        %v2120 = vld [vmem:[#allocation12 + $0x58] sm:$0xff]
        %v2121 = vld [vmem:[#allocation12 + $0x60] sm:$0xff]
        %v2122 = vld [vmem:[#allocation12 + $0x68] sm:$0xff]
        %v2123 = vld [vmem:[#allocation12 + $0x70] sm:$0xff]
        %v2124 = vld [vmem:[#allocation12 + $0x78] sm:$0xff]
        %v2125 = vld [vmem:[#allocation12 + $0x80] sm:$0xff]
        %v2126 = vld [vmem:[#allocation12 + $0x88] sm:$0xff]
        %v2127 = vld [vmem:[#allocation12 + $0x90] sm:$0xff]
        %v2128 = vld [vmem:[#allocation12 + $0x98] sm:$0xff]
        %v2129 = vld [vmem:[#allocation12 + $0xa0] sm:$0xff]
        %v2130 = vld [vmem:[#allocation12 + $0xa8] sm:$0xff]
        %v2131 = vld [vmem:[#allocation12 + $0xb0] sm:$0xff]
        %v2132 = vld [vmem:[#allocation12 + $0xb8] sm:$0xff]
        %v2133 = vld [vmem:[#allocation12 + $0xc0] sm:$0xff]
        %v2134 = vld [vmem:[#allocation12 + $0xc8] sm:$0xff]
        %v2135 = vld [vmem:[#allocation12 + $0xd0] sm:$0xff]
        %v2136 = vld [vmem:[#allocation12 + $0xd8] sm:$0xff]
        %v2137 = vld [vmem:[#allocation12 + $0xe0] sm:$0xff]
        %v2138 = vld [vmem:[#allocation12 + $0xe8] sm:$0xff]
        %v2139 = vld [vmem:[#allocation12 + $0xf0] sm:$0xff]
        %v2140 = vld [vmem:[#allocation12 + $0xf8] sm:$0xff]
        %v2141 = vld [vmem:[%s12] sm:$0x1]
        %v2143 = vlaneseq
        %v2144 = vshrl.u32 %v2143, 7
        %v2145 = vsub.s32 0, %v2144
        %v2146 = vrot.slane %v2141, %v2145
        %2148 = vmatprep.subr.mxu0 0.0
        %2149 = vmatpush1.msra.mxu0 %v2109
        %2150 = vmatprep.subr.mxu0 0.0
        %2151 = vmatpush1.msra.mxu0 %v2110
        %2152 = vmatprep.subr.mxu0 0.0
        %2153 = vmatpush1.msra.mxu0 %v2111
        %2154 = vmatprep.subr.mxu0 0.0
        %2155 = vmatpush1.msra.mxu0 %v2112
        %2156 = vmatprep.subr.mxu0 0.0
        %2157 = vmatpush1.msra.mxu0 %v2113
        %2158 = vmatprep.subr.mxu0 0.0
        %2159 = vmatpush1.msra.mxu0 %v2114
        %2160 = vmatprep.subr.mxu0 0.0
        %2161 = vmatpush1.msra.mxu0 %v2115
        %2162 = vmatprep.subr.mxu0 0.0
        %2163 = vmatpush1.msra.mxu0 %v2116
        %2164 = vmatprep.subr.mxu0 0.0
        %2165 = vmatpush1.msra.mxu0 %v2117
        %2166 = vmatprep.subr.mxu0 0.0
        %2167 = vmatpush1.msra.mxu0 %v2118
        %2168 = vmatprep.subr.mxu0 0.0
        %2169 = vmatpush1.msra.mxu0 %v2119
        %2170 = vmatprep.subr.mxu0 0.0
        %2171 = vmatpush1.msra.mxu0 %v2120
        %2172 = vmatprep.subr.mxu0 0.0
        %2173 = vmatpush1.msra.mxu0 %v2121
        %2174 = vmatprep.subr.mxu0 0.0
        %2175 = vmatpush1.msra.mxu0 %v2122
        %2176 = vmatprep.subr.mxu0 0.0
        %2177 = vmatpush1.msra.mxu0 %v2123
        %2178 = vmatprep.subr.mxu0 0.0
        %2179 = vmatpush1.msra.mxu0 %v2124
        %2180 = vmatprep.subr.mxu0 0.0
        %2181 = vmatpush1.msra.mxu0 %v2125
        %2182 = vmatprep.subr.mxu0 0.0
        %2183 = vmatpush1.msra.mxu0 %v2126
        %2184 = vmatprep.subr.mxu0 0.0
        %2185 = vmatpush1.msra.mxu0 %v2127
        %2186 = vmatprep.subr.mxu0 0.0
        %2187 = vmatpush1.msra.mxu0 %v2128
        %2188 = vmatprep.subr.mxu0 0.0
        %2189 = vmatpush1.msra.mxu0 %v2129
        %2190 = vmatprep.subr.mxu0 0.0
        %2191 = vmatpush1.msra.mxu0 %v2130
        %2192 = vmatprep.subr.mxu0 0.0
        %2193 = vmatpush1.msra.mxu0 %v2131
        %2194 = vmatprep.subr.mxu0 0.0
        %2195 = vmatpush1.msra.mxu0 %v2132
        %2196 = vmatprep.subr.mxu0 0.0
        %2197 = vmatpush1.msra.mxu0 %v2133
        %2198 = vmatprep.subr.mxu0 0.0
        %2199 = vmatpush1.msra.mxu0 %v2134
        %2200 = vmatprep.subr.mxu0 0.0
        %2201 = vmatpush1.msra.mxu0 %v2135
        %2202 = vmatprep.subr.mxu0 0.0
        %2203 = vmatpush1.msra.mxu0 %v2136
        %2204 = vmatprep.subr.mxu0 0.0
        %2205 = vmatpush1.msra.mxu0 %v2137
        %2206 = vmatprep.subr.mxu0 0.0
        %2207 = vmatpush1.msra.mxu0 %v2138
        %2208 = vmatprep.subr.mxu0 0.0
        %2209 = vmatpush1.msra.mxu0 %v2139
        %2210 = vmatprep.subr.mxu0 0.0
        %2211 = vmatpush1.msra.mxu0 %v2140
        %2212 = vmatprep.mubr.f32.mxu0 %v2106
        %2213 = vmatmul.mubr.f32.gmra.mrb[0].mxu0 %v2105
        %v2214 = vpop.f32.mrb[0].mxu0
        %v2215 = vadd.f32 %v2146, %v2214
        %v2216 = vpop.f32.mrb[0].mxu0
        %2217 = vmatprep.mubr.f32.mxu0 %v2108
        %2218 = vmatmul.mubr.f32.gmra.mrb[0].mxu0 %v2107
        %v2219 = vpop.f32.mrb[0].mxu0
        %v2220 = vadd.f32 %v2146, %v2219
        %v2221 = vpop.f32.mrb[0].mxu0
        %2222 = vdwg.mxu0
        %2223 = vst [vmem:[%s516] sm:$0xff] %v2215
        %2224 = vst [vmem:[%s516 + $0x8] sm:$0xff] %v2220
        %s2225 = sand.u32 %s318, 1
        %s2226 = scalar_lea.sflag [#allocation6], %s2225
        %s2227 = sand.u32 %s318, 1
        %s2228 = smul.addr %s2227, 16
        %s2229 = scalar_lea.vmem [#allocation13], %s2228
        // Predicated region
        $region93: #{tpu_custom_call.1} parent=71 // pred_check
          %p2230 = pneg %p328
        $region94: #{tpu_custom_call.1} parent=71 // pred_check_branch
          %2232 = sbr.rel (%p2230) target = $region96
        $region95: #{tpu_custom_call.1} parent=71 // pred_region
          %s2234 = ssub.s32 256, 256
          %2235 = vsyncadd %s2226, %s2234
          %s2236 = smul.addr %s32, 2
          %s2237 = smul.addr %s2236, 128
          %s2238 = scalar_lea.hbm %s13, %s2237
          %s2239 = sshll.u32 %s2229, 4
          %s2240 = int_to_ptr.vmem [resolvable:$true] %s2239
          %2245 = dma.vmem_to_hbm [thread:$0]  %s2240, 256, %s2238, %s2226, 128, 128, 8
        $region96: #{tpu_custom_call.1} parent=71 // pred_fallthru
          _
      $region72: #{tpu_custom_call.1} parent=5 // pred_fallthru
        _
      %p2246 = scmp.le.s32.totalorder 2, %s27
      // Predicated region
      $region97: #{tpu_custom_call.1} parent=5 // pred_check
        %p2247 = pneg %p2246
      $region98: #{tpu_custom_call.1} parent=5 // pred_check_branch
        %2249 = sbr.rel (%p2247) target = $region100
      $region99: #{tpu_custom_call.1} parent=5 // pred_region
        %s2250 = ssub.s32 %s27, 2
        // Predicated region
        $region101: #{tpu_custom_call.1} parent=99 // pred_check
          %p2251 = pneg %p334
        $region102: #{tpu_custom_call.1} parent=99 // pred_check_branch
          %2253 = sbr.rel (%p2251) target = $region104
        $region103: #{tpu_custom_call.1} parent=99 // pred_region
          %s2254 = sand.u32 %s319, 1
          %s2255 = scalar_lea.sflag [#allocation6], %s2254
          %s2256 = sand.u32 %s319, 1
          %s2257 = smul.addr %s2256, 16
          %s2258 = scalar_lea.vmem [#allocation13], %s2257
          %2259 = dma.done %s2255, 256
        $region104: #{tpu_custom_call.1} parent=99 // pred_fallthru
          _
      $region100: #{tpu_custom_call.1} parent=5 // pred_fallthru
        _
    $region6: #{tpu_custom_call.1} parent=1 // loop_footer
      %s31 = sadd.s32 1, %s27
    $region7: #{tpu_custom_call.1} parent=1 // loop_footer_branch
      %26 = sbr.rel target = $region3
    $region8: #{tpu_custom_call.1} parent=1 // loop_exit
      _
    %2260 = vsyncpa [#allocation5], 1
    %s2261 = scalar_lea.sflag [#allocation5], 1
    %2262 = vsyncpa %s2261, 1
    %2263 = vsyncpa [#allocation8], 1
    %2264 = vsyncpa [#allocation11], 1
    %2265 = vsyncpa [#allocation6], 1
    %s2266 = scalar_lea.sflag [#allocation6], 1
    %2267 = vsyncpa %s2266, 1

// kernel: tpu_custom_call.1
$region0: #{tpu_custom_call.1}
  #allocation0 [shape = 'u32[]', space=smem, size = 0x4, offset = 0x4, fixed_abs, tag = 'smem constant byte address 0x4 - core index']
  #allocation1 [shape = 'u32[144,128]{1,0:T(1,128)}', space=vmem, size = 0x12000, scoped, tag = 'internal scratch']
  #allocation2 [shape = 'f32[1,16,384]{2,1,0:T(8,128)}', space=vmem, size = 0x6000, scoped, tag = 'scratch operand']
  #allocation3 [shape = 'f32[1,16,128]{2,1,0:T(8,128)}', space=vmem, size = 0x2000, scoped, tag = 'scratch operand']
  %s0 = inlined_call_operand.hbm [shape: f32[2,16,128], index: 0, kind: input, shape index: {}]
  %s1 = inlined_call_operand.vmem [shape: f32[1,128], index: 1, kind: input, shape index: {}]
  %s2 = inlined_call_operand.vmem [shape: f32[1,128], index: 2, kind: input, shape index: {}]
  %s3 = inlined_call_operand.hbm [shape: f32[128,384], index: 3, kind: input, shape index: {}]
  %s4 = inlined_call_operand.vmem [shape: f32[1,384], index: 4, kind: input, shape index: {}]
  %s5 = inlined_call_operand.hbm [shape: f32[128,128], index: 5, kind: input, shape index: {}]
  %s6 = inlined_call_operand.vmem [shape: f32[1,128], index: 6, kind: input, shape index: {}]
  %s7 = inlined_call_operand.vmem [shape: f32[1,128], index: 7, kind: input, shape index: {}]
  %s8 = inlined_call_operand.vmem [shape: f32[1,128], index: 8, kind: input, shape index: {}]
  %s9 = inlined_call_operand.hbm [shape: f32[128,256], index: 9, kind: input, shape index: {}]
  %s10 = inlined_call_operand.vmem [shape: f32[1,256], index: 10, kind: input, shape index: {}]
  %s11 = inlined_call_operand.hbm [shape: f32[256,128], index: 11, kind: input, shape index: {}]
  %s12 = inlined_call_operand.vmem [shape: f32[1,128], index: 12, kind: input, shape index: {}]
  %s13 = inlined_call_operand.hbm [shape: f32[2,16,128], index: 13, kind: output, shape index: {}]
  %s14 = sld [smem:[#allocation0]]
  $region105: #{tpu_custom_call.1} parent=0
    _
  %s16 = ssub.s32 1, %s14
  %s17 = scalar_select 0, %s16, %s14
  $region1: #{tpu_custom_call.1} parent=0
    #allocation4 [shape = 'u8[16384]{0}', space=vmem, size = 0x4000, scoped, tag = 'input window, operand 0']
    #allocation5 [shape = 's32[2]{0}', space=sflag, size = 0x8, scoped, tag = 'scoped memory for tpu_custom_call.1']
    #allocation6 [shape = 's32[2]{0}', space=sflag, size = 0x8, scoped, tag = 'scoped memory for tpu_custom_call.1']
    #allocation7 [shape = 'u8[196608]{0}', space=vmem, size = 0x30000, scoped, tag = 'input window, operand 3, single buffered']
    #allocation8 [shape = 's32[1]{0}', space=sflag, size = 0x4, scoped, tag = 'scoped memory for tpu_custom_call.1']
    #allocation9 [shape = 'u8[65536]{0}', space=vmem, size = 0x10000, scoped, tag = 'input window, operand 5, single buffered']
    #allocation10 [shape = 'u8[131072]{0}', space=vmem, size = 0x20000, scoped, tag = 'input window, operand 9, single buffered']
    #allocation11 [shape = 's32[1]{0}', space=sflag, size = 0x4, scoped, tag = 'scoped memory for tpu_custom_call.1']
    #allocation12 [shape = 'u8[131072]{0}', space=vmem, size = 0x20000, scoped, tag = 'input window, operand 11, single buffered']
    #allocation13 [shape = 'u8[16384]{0}', space=vmem, size = 0x4000, scoped, tag = 'output window, operand 0']
    %18 = vsyncpa [#allocation5], 0
    %s19 = scalar_lea.sflag [#allocation5], 1
    %20 = vsyncpa %s19, 0
    %21 = vsyncpa [#allocation8], 0
    %22 = vsyncpa [#allocation11], 0
    %23 = vsyncpa [#allocation6], 0
    %s24 = scalar_lea.sflag [#allocation6], 1
    %25 = vsyncpa %s24, 0
    loop: start=0, step=1, limit=4
    $region2: #{tpu_custom_call.1} parent=1 // loop_pre_header
      _
    $region3: #{tpu_custom_call.1} parent=1 // loop_header
      %s27 = sphi 0, %s31
      %p28 = scmp.ge.s32.totalorder %s27, 4
      %s37 = sphi 0, %s39
      %s40 = sphi 0, %s37
      %s41 = sphi 0, %s40
      %s57 = sphi 0, %s41
      %s61 = sphi 0, %s61
      %s63 = sphi 0, %s61
      %s64 = sphi 0, %s63
      %s78 = sphi 0, %s64
      %s82 = sphi 0, %s82
      %s84 = sphi 0, %s82
      %s85 = sphi 0, %s84
      %s99 = sphi 0, %s85
      %s103 = sphi 0, %s103
      %s105 = sphi 0, %s103
      %s106 = sphi 0, %s105
      %s120 = sphi 0, %s106
      %s124 = sphi 0, %s124
      %s126 = sphi 0, %s124
      %s127 = sphi 0, %s126
      %s141 = sphi 0, %s127
      %s145 = sphi 0, %s145
      %s147 = sphi 0, %s145
      %s148 = sphi 0, %s147
      %s162 = sphi 0, %s148
      %s166 = sphi 0, %s166
      %s168 = sphi 0, %s166
      %s169 = sphi 0, %s168
      %s183 = sphi 0, %s169
      %s187 = sphi 0, %s187
      %s189 = sphi 0, %s187
      %s190 = sphi 0, %s189
      %s204 = sphi 0, %s190
      %s208 = sphi 0, %s208
      %s210 = sphi 0, %s208
      %s211 = sphi 0, %s210
      %s225 = sphi 0, %s211
      %s229 = sphi 0, %s229
      %s231 = sphi 0, %s229
      %s232 = sphi 0, %s231
      %s246 = sphi 0, %s232
      %s250 = sphi 0, %s250
      %s252 = sphi 0, %s250
      %s253 = sphi 0, %s252
      %s267 = sphi 0, %s253
      %s271 = sphi 0, %s271
      %s273 = sphi 0, %s271
      %s274 = sphi 0, %s273
      %s288 = sphi 0, %s274
      %s292 = sphi 0, %s292
      %s294 = sphi 0, %s292
      %s295 = sphi 0, %s294
      %s309 = sphi 0, %s295
      %s315 = sphi 0, %s317
      %s318 = sphi 0, %s315
      %s319 = sphi 0, %s318
      %s335 = sphi 0, %s319
    $region4: #{tpu_custom_call.1} parent=1 // loop_header_branch
      %30 = sbr.rel (%p28) target = $region8
    $region5: #{tpu_custom_call.1} parent=1 // loop_body
      %s32 = ssub.s32 %s27, 1
      %s33 = ssub.s32 %s27, 2
      %s34 = sadd.s32 %s27, 1
      %s35 = ssub.s32 %s27, %s34
      %p36 = scmp.eq.s32.totalorder %s35, 0
      %s38 = sadd.s32 %s37, 1
      %s39 = scalar_select %p36, %s37, %s38
      %p42 = pneg %p36
      %p43 = scmp.eq.s32.totalorder %s27, 1
      %p44 = por %p42, %p43
      %p45 = scmp.ne.s32.totalorder %s37, %s40
      %p46 = scmp.eq.s32.totalorder %s27, 0
      %p47 = por %p45, %p46
      %p48 = scmp.ne.s32.totalorder %s37, %s40
      %p49 = scmp.eq.s32.totalorder %s32, 1
      %p50 = por %p48, %p49
      %p51 = scmp.ne.s32.totalorder %s40, %s41
      %p52 = scmp.eq.s32.totalorder %s32, 0
      %p53 = por %p51, %p52
      %p54 = scmp.ne.s32.totalorder %s40, %s41
      %p55 = scmp.eq.s32.totalorder %s33, 1
      %p56 = por %p54, %p55
      %p58 = scmp.ne.s32.totalorder %s41, %s57
      %p59 = scmp.eq.s32.totalorder %s33, 0
      %p60 = por %p58, %p59
      %s62 = sadd.s32 %s61, 1
      %p65 = scmp.eq.s32.totalorder %s27, 1
      %p66 = scmp.ne.s32.totalorder %s61, %s63
      %p67 = scmp.eq.s32.totalorder %s27, 0
      %p68 = por %p66, %p67
      %p69 = scmp.ne.s32.totalorder %s61, %s63
      %p70 = scmp.eq.s32.totalorder %s32, 1
      %p71 = por %p69, %p70
      %p72 = scmp.ne.s32.totalorder %s63, %s64
      %p73 = scmp.eq.s32.totalorder %s32, 0
      %p74 = por %p72, %p73
      %p75 = scmp.ne.s32.totalorder %s63, %s64
      %p76 = scmp.eq.s32.totalorder %s33, 1
      %p77 = por %p75, %p76
      %p79 = scmp.ne.s32.totalorder %s64, %s78
      %p80 = scmp.eq.s32.totalorder %s33, 0
      %p81 = por %p79, %p80
      %s83 = sadd.s32 %s82, 1
      %p86 = scmp.eq.s32.totalorder %s27, 1
      %p87 = scmp.ne.s32.totalorder %s82, %s84
      %p88 = scmp.eq.s32.totalorder %s27, 0
      %p89 = por %p87, %p88
      %p90 = scmp.ne.s32.totalorder %s82, %s84
      %p91 = scmp.eq.s32.totalorder %s32, 1
      %p92 = por %p90, %p91
      %p93 = scmp.ne.s32.totalorder %s84, %s85
      %p94 = scmp.eq.s32.totalorder %s32, 0
      %p95 = por %p93, %p94
      %p96 = scmp.ne.s32.totalorder %s84, %s85
      %p97 = scmp.eq.s32.totalorder %s33, 1
      %p98 = por %p96, %p97
      %p100 = scmp.ne.s32.totalorder %s85, %s99
      %p101 = scmp.eq.s32.totalorder %s33, 0
      %p102 = por %p100, %p101
      %s104 = sadd.s32 %s103, 1
      %p107 = scmp.eq.s32.totalorder %s27, 1
      %p108 = scmp.ne.s32.totalorder %s103, %s105
      %p109 = scmp.eq.s32.totalorder %s27, 0
      %p110 = por %p108, %p109
      %p111 = scmp.ne.s32.totalorder %s103, %s105
      %p112 = scmp.eq.s32.totalorder %s32, 1
      %p113 = por %p111, %p112
      %p114 = scmp.ne.s32.totalorder %s105, %s106
      %p115 = scmp.eq.s32.totalorder %s32, 0
      %p116 = por %p114, %p115
      %p117 = scmp.ne.s32.totalorder %s105, %s106
      %p118 = scmp.eq.s32.totalorder %s33, 1
      %p119 = por %p117, %p118
      %p121 = scmp.ne.s32.totalorder %s106, %s120
      %p122 = scmp.eq.s32.totalorder %s33, 0
      %p123 = por %p121, %p122
      %s125 = sadd.s32 %s124, 1
      %p128 = scmp.eq.s32.totalorder %s27, 1
      %p129 = scmp.ne.s32.totalorder %s124, %s126
      %p130 = scmp.eq.s32.totalorder %s27, 0
      %p131 = por %p129, %p130
      %p132 = scmp.ne.s32.totalorder %s124, %s126
      %p133 = scmp.eq.s32.totalorder %s32, 1
      %p134 = por %p132, %p133
      %p135 = scmp.ne.s32.totalorder %s126, %s127
      %p136 = scmp.eq.s32.totalorder %s32, 0
      %p137 = por %p135, %p136
      %p138 = scmp.ne.s32.totalorder %s126, %s127
      %p139 = scmp.eq.s32.totalorder %s33, 1
      %p140 = por %p138, %p139
      %p142 = scmp.ne.s32.totalorder %s127, %s141
      %p143 = scmp.eq.s32.totalorder %s33, 0
      %p144 = por %p142, %p143
      %s146 = sadd.s32 %s145, 1
      %p149 = scmp.eq.s32.totalorder %s27, 1
      %p150 = scmp.ne.s32.totalorder %s145, %s147
      %p151 = scmp.eq.s32.totalorder %s27, 0
      %p152 = por %p150, %p151
      %p153 = scmp.ne.s32.totalorder %s145, %s147
      %p154 = scmp.eq.s32.totalorder %s32, 1
      %p155 = por %p153, %p154
      %p156 = scmp.ne.s32.totalorder %s147, %s148
      %p157 = scmp.eq.s32.totalorder %s32, 0
      %p158 = por %p156, %p157
      %p159 = scmp.ne.s32.totalorder %s147, %s148
      %p160 = scmp.eq.s32.totalorder %s33, 1
      %p161 = por %p159, %p160
      %p163 = scmp.ne.s32.totalorder %s148, %s162
      %p164 = scmp.eq.s32.totalorder %s33, 0
      %p165 = por %p163, %p164
      %s167 = sadd.s32 %s166, 1
      %p170 = scmp.eq.s32.totalorder %s27, 1
      %p171 = scmp.ne.s32.totalorder %s166, %s168
      %p172 = scmp.eq.s32.totalorder %s27, 0
      %p173 = por %p171, %p172
      %p174 = scmp.ne.s32.totalorder %s166, %s168
      %p175 = scmp.eq.s32.totalorder %s32, 1
      %p176 = por %p174, %p175
      %p177 = scmp.ne.s32.totalorder %s168, %s169
      %p178 = scmp.eq.s32.totalorder %s32, 0
      %p179 = por %p177, %p178
      %p180 = scmp.ne.s32.totalorder %s168, %s169
      %p181 = scmp.eq.s32.totalorder %s33, 1
      %p182 = por %p180, %p181
      %p184 = scmp.ne.s32.totalorder %s169, %s183
      %p185 = scmp.eq.s32.totalorder %s33, 0
      %p186 = por %p184, %p185
      %s188 = sadd.s32 %s187, 1
      %p191 = scmp.eq.s32.totalorder %s27, 1
      %p192 = scmp.ne.s32.totalorder %s187, %s189
      %p193 = scmp.eq.s32.totalorder %s27, 0
      %p194 = por %p192, %p193
      %p195 = scmp.ne.s32.totalorder %s187, %s189
      %p196 = scmp.eq.s32.totalorder %s32, 1
      %p197 = por %p195, %p196
      %p198 = scmp.ne.s32.totalorder %s189, %s190
      %p199 = scmp.eq.s32.totalorder %s32, 0
      %p200 = por %p198, %p199
      %p201 = scmp.ne.s32.totalorder %s189, %s190
      %p202 = scmp.eq.s32.totalorder %s33, 1
      %p203 = por %p201, %p202
      %p205 = scmp.ne.s32.totalorder %s190, %s204
      %p206 = scmp.eq.s32.totalorder %s33, 0
      %p207 = por %p205, %p206
      %s209 = sadd.s32 %s208, 1
      %p212 = scmp.eq.s32.totalorder %s27, 1
      %p213 = scmp.ne.s32.totalorder %s208, %s210
      %p214 = scmp.eq.s32.totalorder %s27, 0
      %p215 = por %p213, %p214
      %p216 = scmp.ne.s32.totalorder %s208, %s210
      %p217 = scmp.eq.s32.totalorder %s32, 1
      %p218 = por %p216, %p217
      %p219 = scmp.ne.s32.totalorder %s210, %s211
      %p220 = scmp.eq.s32.totalorder %s32, 0
      %p221 = por %p219, %p220
      %p222 = scmp.ne.s32.totalorder %s210, %s211
      %p223 = scmp.eq.s32.totalorder %s33, 1
      %p224 = por %p222, %p223
      %p226 = scmp.ne.s32.totalorder %s211, %s225
      %p227 = scmp.eq.s32.totalorder %s33, 0
      %p228 = por %p226, %p227
      %s230 = sadd.s32 %s229, 1
      %p233 = scmp.eq.s32.totalorder %s27, 1
      %p234 = scmp.ne.s32.totalorder %s229, %s231
      %p235 = scmp.eq.s32.totalorder %s27, 0
      %p236 = por %p234, %p235
      %p237 = scmp.ne.s32.totalorder %s229, %s231
      %p238 = scmp.eq.s32.totalorder %s32, 1
      %p239 = por %p237, %p238
      %p240 = scmp.ne.s32.totalorder %s231, %s232
      %p241 = scmp.eq.s32.totalorder %s32, 0
      %p242 = por %p240, %p241
      %p243 = scmp.ne.s32.totalorder %s231, %s232
      %p244 = scmp.eq.s32.totalorder %s33, 1
      %p245 = por %p243, %p244
      %p247 = scmp.ne.s32.totalorder %s232, %s246
      %p248 = scmp.eq.s32.totalorder %s33, 0
      %p249 = por %p247, %p248
      %s251 = sadd.s32 %s250, 1
      %p254 = scmp.eq.s32.totalorder %s27, 1
      %p255 = scmp.ne.s32.totalorder %s250, %s252
      %p256 = scmp.eq.s32.totalorder %s27, 0
      %p257 = por %p255, %p256
      %p258 = scmp.ne.s32.totalorder %s250, %s252
      %p259 = scmp.eq.s32.totalorder %s32, 1
      %p260 = por %p258, %p259
      %p261 = scmp.ne.s32.totalorder %s252, %s253
      %p262 = scmp.eq.s32.totalorder %s32, 0
      %p263 = por %p261, %p262
      %p264 = scmp.ne.s32.totalorder %s252, %s253
      %p265 = scmp.eq.s32.totalorder %s33, 1
      %p266 = por %p264, %p265
      %p268 = scmp.ne.s32.totalorder %s253, %s267
      %p269 = scmp.eq.s32.totalorder %s33, 0
      %p270 = por %p268, %p269
      %s272 = sadd.s32 %s271, 1
      %p275 = scmp.eq.s32.totalorder %s27, 1
      %p276 = scmp.ne.s32.totalorder %s271, %s273
      %p277 = scmp.eq.s32.totalorder %s27, 0
      %p278 = por %p276, %p277
      %p279 = scmp.ne.s32.totalorder %s271, %s273
      %p280 = scmp.eq.s32.totalorder %s32, 1
      %p281 = por %p279, %p280
      %p282 = scmp.ne.s32.totalorder %s273, %s274
      %p283 = scmp.eq.s32.totalorder %s32, 0
      %p284 = por %p282, %p283
      %p285 = scmp.ne.s32.totalorder %s273, %s274
      %p286 = scmp.eq.s32.totalorder %s33, 1
      %p287 = por %p285, %p286
      %p289 = scmp.ne.s32.totalorder %s274, %s288
      %p290 = scmp.eq.s32.totalorder %s33, 0
      %p291 = por %p289, %p290
      %s293 = sadd.s32 %s292, 1
      %p296 = scmp.eq.s32.totalorder %s27, 1
      %p297 = scmp.ne.s32.totalorder %s292, %s294
      %p298 = scmp.eq.s32.totalorder %s27, 0
      %p299 = por %p297, %p298
      %p300 = scmp.ne.s32.totalorder %s292, %s294
      %p301 = scmp.eq.s32.totalorder %s32, 1
      %p302 = por %p300, %p301
      %p303 = scmp.ne.s32.totalorder %s294, %s295
      %p304 = scmp.eq.s32.totalorder %s32, 0
      %p305 = por %p303, %p304
      %p306 = scmp.ne.s32.totalorder %s294, %s295
      %p307 = scmp.eq.s32.totalorder %s33, 1
      %p308 = por %p306, %p307
      %p310 = scmp.ne.s32.totalorder %s295, %s309
      %p311 = scmp.eq.s32.totalorder %s33, 0
      %p312 = por %p310, %p311
      %s313 = ssub.s32 %s27, %s34
      %p314 = scmp.eq.s32.totalorder %s313, 0
      %s316 = sadd.s32 %s315, 1
      %s317 = scalar_select %p314, %s315, %s316
      %p320 = pneg %p314
      %p321 = scmp.eq.s32.totalorder %s27, 1
      %p322 = por %p320, %p321
      %p323 = scmp.ne.s32.totalorder %s315, %s318
      %p324 = scmp.eq.s32.totalorder %s27, 0
      %p325 = por %p323, %p324
      %p326 = scmp.ne.s32.totalorder %s315, %s318
      %p327 = scmp.eq.s32.totalorder %s32, 1
      %p328 = por %p326, %p327
      %p329 = scmp.ne.s32.totalorder %s318, %s319
      %p330 = scmp.eq.s32.totalorder %s32, 0
      %p331 = por %p329, %p330
      %p332 = scmp.ne.s32.totalorder %s318, %s319
      %p333 = scmp.eq.s32.totalorder %s33, 1
      %p334 = por %p332, %p333
      %p336 = scmp.ne.s32.totalorder %s319, %s335
      %p337 = scmp.eq.s32.totalorder %s33, 0
      %p338 = por %p336, %p337
      %p339 = scmp.le.s32.totalorder 1, %s27
      %p340 = scmp.lt.s32.totalorder %s27, 3
      %p341 = pnand %p339, %p340
      %p342 = pneg %p341
      // Predicated region
      $region9: #{tpu_custom_call.1} parent=5 // pred_check
        _
      $region10: #{tpu_custom_call.1} parent=5 // pred_check_branch
        %344 = sbr.rel (%p341) target = $region12
      $region11: #{tpu_custom_call.1} parent=5 // pred_region
        %s345 = ssub.s32 %s27, 1
        // Predicated region
        $region13: #{tpu_custom_call.1} parent=11 // pred_check
          %p346 = pneg %p74
        $region14: #{tpu_custom_call.1} parent=11 // pred_check_branch
          %348 = sbr.rel (%p346) target = $region16
        $region15: #{tpu_custom_call.1} parent=11 // pred_region
          _
        $region16: #{tpu_custom_call.1} parent=11 // pred_fallthru
          _
        // Predicated region
        $region17: #{tpu_custom_call.1} parent=11 // pred_check
          %p349 = pneg %p95
        $region18: #{tpu_custom_call.1} parent=11 // pred_check_branch
          %351 = sbr.rel (%p349) target = $region20
        $region19: #{tpu_custom_call.1} parent=11 // pred_region
          _
        $region20: #{tpu_custom_call.1} parent=11 // pred_fallthru
          _
        // Predicated region
        $region21: #{tpu_custom_call.1} parent=11 // pred_check
          %p352 = pneg %p116
        $region22: #{tpu_custom_call.1} parent=11 // pred_check_branch
          %354 = sbr.rel (%p352) target = $region24
        $region23: #{tpu_custom_call.1} parent=11 // pred_region
          %s356 = ssub.s32 6144, 6144
          %357 = vsyncadd [#allocation8], %s356
          %s358 = sshll.u32 [#allocation7], 4
          %s359 = int_to_ptr.vmem [resolvable:$true] %s358
          %364 = dma.hbm_to_vmem [thread:$0]  %s3, 6144, %s359, [#allocation8], 384, 384, 24
        $region24: #{tpu_custom_call.1} parent=11 // pred_fallthru
          _
        // Predicated region
        $region25: #{tpu_custom_call.1} parent=11 // pred_check
          %p365 = pneg %p137
        $region26: #{tpu_custom_call.1} parent=11 // pred_check_branch
          %367 = sbr.rel (%p365) target = $region28
        $region27: #{tpu_custom_call.1} parent=11 // pred_region
          _
        $region28: #{tpu_custom_call.1} parent=11 // pred_fallthru
          _
        // Predicated region
        $region29: #{tpu_custom_call.1} parent=11 // pred_check
          %p368 = pneg %p158
        $region30: #{tpu_custom_call.1} parent=11 // pred_check_branch
          %370 = sbr.rel (%p368) target = $region32
        $region31: #{tpu_custom_call.1} parent=11 // pred_region
          %s372 = ssub.s32 2048, 2048
          %373 = vsyncadd [#allocation8], %s372
          %s374 = sshll.u32 [#allocation9], 4
          %s375 = int_to_ptr.vmem [resolvable:$true] %s374
          %380 = dma.hbm_to_vmem [thread:$0]  %s5, 2048, %s375, [#allocation8], 128, 128, 8
        $region32: #{tpu_custom_call.1} parent=11 // pred_fallthru
          _
        // Predicated region
        $region33: #{tpu_custom_call.1} parent=11 // pred_check
          %p381 = pneg %p179
        $region34: #{tpu_custom_call.1} parent=11 // pred_check_branch
          %383 = sbr.rel (%p381) target = $region36
        $region35: #{tpu_custom_call.1} parent=11 // pred_region
          _
        $region36: #{tpu_custom_call.1} parent=11 // pred_fallthru
          _
        // Predicated region
        $region37: #{tpu_custom_call.1} parent=11 // pred_check
          %p384 = pneg %p200
        $region38: #{tpu_custom_call.1} parent=11 // pred_check_branch
          %386 = sbr.rel (%p384) target = $region40
        $region39: #{tpu_custom_call.1} parent=11 // pred_region
          _
        $region40: #{tpu_custom_call.1} parent=11 // pred_fallthru
          _
        // Predicated region
        $region41: #{tpu_custom_call.1} parent=11 // pred_check
          %p387 = pneg %p221
        $region42: #{tpu_custom_call.1} parent=11 // pred_check_branch
          %389 = sbr.rel (%p387) target = $region44
        $region43: #{tpu_custom_call.1} parent=11 // pred_region
          _
        $region44: #{tpu_custom_call.1} parent=11 // pred_fallthru
          _
        // Predicated region
        $region45: #{tpu_custom_call.1} parent=11 // pred_check
          %p390 = pneg %p242
        $region46: #{tpu_custom_call.1} parent=11 // pred_check_branch
          %392 = sbr.rel (%p390) target = $region48
        $region47: #{tpu_custom_call.1} parent=11 // pred_region
          %s394 = ssub.s32 4096, 4096
          %395 = vsyncadd [#allocation11], %s394
          %s396 = sshll.u32 [#allocation10], 4
          %s397 = int_to_ptr.vmem [resolvable:$true] %s396
          %402 = dma.hbm_to_vmem [thread:$0]  %s9, 4096, %s397, [#allocation11], 256, 256, 16
        $region48: #{tpu_custom_call.1} parent=11 // pred_fallthru
          _
        // Predicated region
        $region49: #{tpu_custom_call.1} parent=11 // pred_check
          %p403 = pneg %p263
        $region50: #{tpu_custom_call.1} parent=11 // pred_check_branch
          %405 = sbr.rel (%p403) target = $region52
        $region51: #{tpu_custom_call.1} parent=11 // pred_region
          _
        $region52: #{tpu_custom_call.1} parent=11 // pred_fallthru
          _
        // Predicated region
        $region53: #{tpu_custom_call.1} parent=11 // pred_check
          %p406 = pneg %p284
        $region54: #{tpu_custom_call.1} parent=11 // pred_check_branch
          %408 = sbr.rel (%p406) target = $region56
        $region55: #{tpu_custom_call.1} parent=11 // pred_region
          %s410 = ssub.s32 4096, 4096
          %411 = vsyncadd [#allocation11], %s410
          %s412 = sshll.u32 [#allocation12], 4
          %s413 = int_to_ptr.vmem [resolvable:$true] %s412
          %418 = dma.hbm_to_vmem [thread:$0]  %s11, 4096, %s413, [#allocation11], 128, 128, 8
        $region56: #{tpu_custom_call.1} parent=11 // pred_fallthru
          _
        // Predicated region
        $region57: #{tpu_custom_call.1} parent=11 // pred_check
          %p419 = pneg %p305
        $region58: #{tpu_custom_call.1} parent=11 // pred_check_branch
          %421 = sbr.rel (%p419) target = $region60
        $region59: #{tpu_custom_call.1} parent=11 // pred_region
          _
        $region60: #{tpu_custom_call.1} parent=11 // pred_fallthru
          _
      $region12: #{tpu_custom_call.1} parent=5 // pred_fallthru
        _
      %p422 = scmp.lt.s32.totalorder %s27, 2
      // Predicated region
      $region61: #{tpu_custom_call.1} parent=5 // pred_check
        %p423 = pneg %p422
      $region62: #{tpu_custom_call.1} parent=5 // pred_check_branch
        %425 = sbr.rel (%p423) target = $region64
      $region63: #{tpu_custom_call.1} parent=5 // pred_region
        // Predicated region
        $region65: #{tpu_custom_call.1} parent=63 // pred_check
          %p426 = pneg %p47
        $region66: #{tpu_custom_call.1} parent=63 // pred_check_branch
          %428 = sbr.rel (%p426) target = $region68
        $region67: #{tpu_custom_call.1} parent=63 // pred_region
          %s429 = sand.u32 %s37, 1
          %s430 = scalar_lea.sflag [#allocation5], %s429
          %s431 = sand.u32 %s37, 1
          %s432 = smul.addr %s431, 16
          %s433 = scalar_lea.vmem [#allocation4], %s432
          %s435 = ssub.s32 256, 256
          %436 = vsyncadd %s430, %s435
          %s437 = smul.addr %s27, 2
          %s438 = smul.addr %s437, 128
          %s439 = scalar_lea.hbm %s0, %s438
          %s440 = sshll.u32 %s433, 4
          %s441 = int_to_ptr.vmem [resolvable:$true] %s440
          %446 = dma.hbm_to_vmem [thread:$0]  %s439, 256, %s441, %s430, 128, 128, 8
        $region68: #{tpu_custom_call.1} parent=63 // pred_fallthru
          _
      $region64: #{tpu_custom_call.1} parent=5 // pred_fallthru
        _
      %p447 = scmp.le.s32.totalorder 1, %s27
      %p448 = scmp.lt.s32.totalorder %s27, 3
      %p449 = pnand %p447, %p448
      %p450 = pneg %p449
      // Predicated region
      $region69: #{tpu_custom_call.1} parent=5 // pred_check
        _
      $region70: #{tpu_custom_call.1} parent=5 // pred_check_branch
        %452 = sbr.rel (%p449) target = $region72
      $region71: #{tpu_custom_call.1} parent=5 // pred_region
        %s453 = ssub.s32 %s27, 1
        %s454 = sand.u32 %s40, 1
        %s455 = scalar_lea.sflag [#allocation5], %s454
        %s456 = sand.u32 %s40, 1
        %s457 = smul.addr %s456, 16
        %s458 = scalar_lea.vmem [#allocation4], %s457
        // Predicated region
        $region73: #{tpu_custom_call.1} parent=71 // pred_check
          %p459 = pneg %p53
        $region74: #{tpu_custom_call.1} parent=71 // pred_check_branch
          %461 = sbr.rel (%p459) target = $region76
        $region75: #{tpu_custom_call.1} parent=71 // pred_region
          %462 = dma.done %s455, 256
        $region76: #{tpu_custom_call.1} parent=71 // pred_fallthru
          _
        // Predicated region
        $region77: #{tpu_custom_call.1} parent=71 // pred_check
          %p463 = pneg %p116
        $region78: #{tpu_custom_call.1} parent=71 // pred_check_branch
          %465 = sbr.rel (%p463) target = $region80
        $region79: #{tpu_custom_call.1} parent=71 // pred_region
          %466 = dma.done [#allocation8], 6144
        $region80: #{tpu_custom_call.1} parent=71 // pred_fallthru
          _
        // Predicated region
        $region81: #{tpu_custom_call.1} parent=71 // pred_check
          %p467 = pneg %p158
        $region82: #{tpu_custom_call.1} parent=71 // pred_check_branch
          %469 = sbr.rel (%p467) target = $region84
        $region83: #{tpu_custom_call.1} parent=71 // pred_region
          %470 = dma.done [#allocation8], 2048
        $region84: #{tpu_custom_call.1} parent=71 // pred_fallthru
          _
        // Predicated region
        $region85: #{tpu_custom_call.1} parent=71 // pred_check
          %p471 = pneg %p242
        $region86: #{tpu_custom_call.1} parent=71 // pred_check_branch
          %473 = sbr.rel (%p471) target = $region88
        $region87: #{tpu_custom_call.1} parent=71 // pred_region
          %474 = dma.done [#allocation11], 4096
        $region88: #{tpu_custom_call.1} parent=71 // pred_fallthru
          _
        // Predicated region
        $region89: #{tpu_custom_call.1} parent=71 // pred_check
          %p475 = pneg %p284
        $region90: #{tpu_custom_call.1} parent=71 // pred_check_branch
          %477 = sbr.rel (%p475) target = $region92
        $region91: #{tpu_custom_call.1} parent=71 // pred_region
          %478 = dma.done [#allocation11], 4096
        $region92: #{tpu_custom_call.1} parent=71 // pred_fallthru
          _
        %s479 = sand.u32 %s40, 1
        %s480 = scalar_lea.sflag [#allocation5], %s479
        %s481 = sand.u32 %s40, 1
        %s482 = smul.addr %s481, 16
        %s483 = scalar_lea.vmem [#allocation4], %s482
        %p484 = pneg %p53
        %p485 = pneg %p50
        %p486 = pneg %p74
        %p487 = pneg %p71
        %p488 = pneg %p95
        %p489 = pneg %p92
        %p490 = pneg %p116
        %p491 = pneg %p113
        %p492 = pneg %p137
        %p493 = pneg %p134
        %p494 = pneg %p158
        %p495 = pneg %p155
        %p496 = pneg %p179
        %p497 = pneg %p176
        %p498 = pneg %p200
        %p499 = pneg %p197
        %p500 = pneg %p221
        %p501 = pneg %p218
        %p502 = pneg %p242
        %p503 = pneg %p239
        %p504 = pneg %p263
        %p505 = pneg %p260
        %p506 = pneg %p284
        %p507 = pneg %p281
        %p508 = pneg %p305
        %p509 = pneg %p302
        %p510 = pneg %p331
        %p511 = pneg %p328
        %s512 = sand.u32 %s318, 1
        %s513 = scalar_lea.sflag [#allocation6], %s512
        %s514 = sand.u32 %s318, 1
        %s515 = smul.addr %s514, 16
        %s516 = scalar_lea.vmem [#allocation13], %s515
        %v517 = vld [vmem:[%s458] sm:$0xff]
        %v518 = vld [vmem:[%s458 + $0x8] sm:$0xff]
        %519 = vadd.xlane.f32.xlu0 %v517
        %v520 = vpop.xlane.xlu0 %519
        %521 = vadd.xlane.f32.xlu0 %v518
        %v522 = vpop.xlane.xlu0 %521
        %v523 = vrcp.pop 128.0
        %v524 = vmul.f32 %v520, %v523
        %v525 = vmul.f32 %v522, %v523
        %v526 = vsub.f32 %v517, %v524
        %v527 = vsub.f32 %v518, %v525
        %v528 = vmul.f32 %v526, %v526
        %v529 = vmul.f32 %v527, %v527
        %530 = vadd.xlane.f32.xlu0 %v528
        %v531 = vpop.xlane.xlu0 %530
        %532 = vadd.xlane.f32.xlu0 %v529
        %v533 = vpop.xlane.xlu0 %532
        %v534 = vmul.f32 %v531, %v523
        %v535 = vmul.f32 %v533, %v523
        %v536 = vadd.f32 %v534, 1e-05
        %v537 = vadd.f32 %v535, 1e-05
        %v538 = vrsqrt.pop %v536
        %v539 = vrsqrt.pop %v537
        %v540 = vmul.f32 %v526, %v538
        %v541 = vmul.f32 %v527, %v539
        %v542 = vld [vmem:[%s1] sm:$0x1]
        %v544 = vlaneseq
        %v545 = vshrl.u32 %v544, 7
        %v546 = vsub.s32 0, %v545
        %v547 = vrot.slane %v542, %v546
        %v549 = vmul.f32 %v540, %v547
        %v550 = vmul.f32 %v541, %v547
        %v551 = vld [vmem:[%s2] sm:$0x1]
        %v553 = vlaneseq
        %v554 = vshrl.u32 %v553, 7
        %v555 = vsub.s32 0, %v554
        %v556 = vrot.slane %v551, %v555
        %v558 = vadd.f32 %v549, %v556
        %v559 = vadd.f32 %v550, %v556
        %v560 = vld [vmem:[#allocation7] sm:$0xff]
        %v561 = vld [vmem:[#allocation7 + $0x8] sm:$0xff]
        %v562 = vld [vmem:[#allocation7 + $0x10] sm:$0xff]
        %v563 = vld [vmem:[#allocation7 + $0x18] sm:$0xff]
        %v564 = vld [vmem:[#allocation7 + $0x20] sm:$0xff]
        %v565 = vld [vmem:[#allocation7 + $0x28] sm:$0xff]
        %v566 = vld [vmem:[#allocation7 + $0x30] sm:$0xff]
        %v567 = vld [vmem:[#allocation7 + $0x38] sm:$0xff]
        %v568 = vld [vmem:[#allocation7 + $0x40] sm:$0xff]
        %v569 = vld [vmem:[#allocation7 + $0x48] sm:$0xff]
        %v570 = vld [vmem:[#allocation7 + $0x50] sm:$0xff]
        %v571 = vld [vmem:[#allocation7 + $0x58] sm:$0xff]
        %v572 = vld [vmem:[#allocation7 + $0x60] sm:$0xff]
        %v573 = vld [vmem:[#allocation7 + $0x68] sm:$0xff]
        %v574 = vld [vmem:[#allocation7 + $0x70] sm:$0xff]
        %v575 = vld [vmem:[#allocation7 + $0x78] sm:$0xff]
        %v576 = vld [vmem:[#allocation7 + $0x80] sm:$0xff]
        %v577 = vld [vmem:[#allocation7 + $0x88] sm:$0xff]
        %v578 = vld [vmem:[#allocation7 + $0x90] sm:$0xff]
        %v579 = vld [vmem:[#allocation7 + $0x98] sm:$0xff]
        %v580 = vld [vmem:[#allocation7 + $0xa0] sm:$0xff]
        %v581 = vld [vmem:[#allocation7 + $0xa8] sm:$0xff]
        %v582 = vld [vmem:[#allocation7 + $0xb0] sm:$0xff]
        %v583 = vld [vmem:[#allocation7 + $0xb8] sm:$0xff]
        %v584 = vld [vmem:[#allocation7 + $0xc0] sm:$0xff]
        %v585 = vld [vmem:[#allocation7 + $0xc8] sm:$0xff]
        %v586 = vld [vmem:[#allocation7 + $0xd0] sm:$0xff]
        %v587 = vld [vmem:[#allocation7 + $0xd8] sm:$0xff]
        %v588 = vld [vmem:[#allocation7 + $0xe0] sm:$0xff]
        %v589 = vld [vmem:[#allocation7 + $0xe8] sm:$0xff]
        %v590 = vld [vmem:[#allocation7 + $0xf0] sm:$0xff]
        %v591 = vld [vmem:[#allocation7 + $0xf8] sm:$0xff]
        %v592 = vld [vmem:[#allocation7 + $0x100] sm:$0xff]
        %v593 = vld [vmem:[#allocation7 + $0x108] sm:$0xff]
        %v594 = vld [vmem:[#allocation7 + $0x110] sm:$0xff]
        %v595 = vld [vmem:[#allocation7 + $0x118] sm:$0xff]
        %v596 = vld [vmem:[#allocation7 + $0x120] sm:$0xff]
        %v597 = vld [vmem:[#allocation7 + $0x128] sm:$0xff]
        %v598 = vld [vmem:[#allocation7 + $0x130] sm:$0xff]
        %v599 = vld [vmem:[#allocation7 + $0x138] sm:$0xff]
        %v600 = vld [vmem:[#allocation7 + $0x140] sm:$0xff]
        %v601 = vld [vmem:[#allocation7 + $0x148] sm:$0xff]
        %v602 = vld [vmem:[#allocation7 + $0x150] sm:$0xff]
        %v603 = vld [vmem:[#allocation7 + $0x158] sm:$0xff]
        %v604 = vld [vmem:[#allocation7 + $0x160] sm:$0xff]
        %v605 = vld [vmem:[#allocation7 + $0x168] sm:$0xff]
        %v606 = vld [vmem:[#allocation7 + $0x170] sm:$0xff]
        %v607 = vld [vmem:[#allocation7 + $0x178] sm:$0xff]
        %v608 = vld [vmem:[%s4] sm:$0x7]
        %v610 = vlaneseq
        %v611 = vshrl.u32 %v610, 7
        %v612 = vsub.s32 0, %v611
        %v613 = vrot.slane %v608, %v612
        %v614 = vlaneseq
        %v615 = vshrl.u32 %v614, 7
        %v616 = vsub.s32 1, %v615
        %v617 = vrot.slane %v608, %v616
        %v618 = vlaneseq
        %v619 = vshrl.u32 %v618, 7
        %v620 = vsub.s32 2, %v619
        %v621 = vrot.slane %v608, %v620
        %625 = vmatprep.subr.mxu0 %v561
        %626 = vmatpush1.msra.mxu0 %v560
        %627 = vmatprep.subr.mxu0 %v564
        %628 = vmatpush1.msra.mxu0 %v563
        %629 = vmatprep.subr.mxu0 %v567
        %630 = vmatpush1.msra.mxu0 %v566
        %631 = vmatprep.subr.mxu0 %v570
        %632 = vmatpush1.msra.mxu0 %v569
        %633 = vmatprep.subr.mxu0 %v573
        %634 = vmatpush1.msra.mxu0 %v572
        %635 = vmatprep.subr.mxu0 %v576
        %636 = vmatpush1.msra.mxu0 %v575
        %637 = vmatprep.subr.mxu0 %v579
        %638 = vmatpush1.msra.mxu0 %v578
        %639 = vmatprep.subr.mxu0 %v582
        %640 = vmatpush1.msra.mxu0 %v581
        %641 = vmatprep.subr.mxu0 %v585
        %642 = vmatpush1.msra.mxu0 %v584
        %643 = vmatprep.subr.mxu0 %v588
        %644 = vmatpush1.msra.mxu0 %v587
        %645 = vmatprep.subr.mxu0 %v591
        %646 = vmatpush1.msra.mxu0 %v590
        %647 = vmatprep.subr.mxu0 %v594
        %648 = vmatpush1.msra.mxu0 %v593
        %649 = vmatprep.subr.mxu0 %v597
        %650 = vmatpush1.msra.mxu0 %v596
        %651 = vmatprep.subr.mxu0 %v600
        %652 = vmatpush1.msra.mxu0 %v599
        %653 = vmatprep.subr.mxu0 %v603
        %654 = vmatpush1.msra.mxu0 %v602
        %655 = vmatprep.subr.mxu0 %v606
        %656 = vmatpush1.msra.mxu0 %v605
        %657 = vmatprep.subr.mxu0 0.0
        %658 = vmatpush1.msra.mxu0 0.0
        %659 = vmatprep.subr.mxu0 0.0
        %660 = vmatpush1.msra.mxu0 0.0
        %661 = vmatprep.subr.mxu0 0.0
        %662 = vmatpush1.msra.mxu0 0.0
        %663 = vmatprep.subr.mxu0 0.0
        %664 = vmatpush1.msra.mxu0 0.0
        %665 = vmatprep.subr.mxu0 0.0
        %666 = vmatpush1.msra.mxu0 0.0
        %667 = vmatprep.subr.mxu0 0.0
        %668 = vmatpush1.msra.mxu0 0.0
        %669 = vmatprep.subr.mxu0 0.0
        %670 = vmatpush1.msra.mxu0 0.0
        %671 = vmatprep.subr.mxu0 0.0
        %672 = vmatpush1.msra.mxu0 0.0
        %673 = vmatprep.subr.mxu0 0.0
        %674 = vmatpush1.msra.mxu0 0.0
        %675 = vmatprep.subr.mxu0 0.0
        %676 = vmatpush1.msra.mxu0 0.0
        %677 = vmatprep.subr.mxu0 0.0
        %678 = vmatpush1.msra.mxu0 0.0
        %679 = vmatprep.subr.mxu0 0.0
        %680 = vmatpush1.msra.mxu0 0.0
        %681 = vmatprep.subr.mxu0 0.0
        %682 = vmatpush1.msra.mxu0 0.0
        %683 = vmatprep.subr.mxu0 0.0
        %684 = vmatpush1.msra.mxu0 0.0
        %685 = vmatprep.subr.mxu0 0.0
        %686 = vmatpush1.msra.mxu0 0.0
        %687 = vmatprep.subr.mxu0 0.0
        %688 = vmatpush1.msra.mxu0 0.0
        %689 = vmatprep.mubr.f32.mxu0 0.0
        %690 = vmatmul.mubr.f32.gmra.mrb[0].mxu0 %v558
        %v691 = vpop.f32.mrb[0].mxu0
        %v692 = vadd.f32 %v613, %v691
        %v693 = vpop.f32.mrb[0].mxu0
        %v694 = vadd.f32 %v617, %v693
        %695 = vmatprep.mubr.f32.mxu0 0.0
        %696 = vmatmul.mubr.f32.gmra.mrb[0].mxu0 %v559
        %v697 = vpop.f32.mrb[0].mxu0
        %v698 = vadd.f32 %v613, %v697
        %v699 = vpop.f32.mrb[0].mxu0
        %v700 = vadd.f32 %v617, %v699
        %701 = vdwg.mxu0
        %702 = vmatprep.subr.mxu0 0.0
        %703 = vmatpush1.msra.mxu0 %v562
        %704 = vmatprep.subr.mxu0 0.0
        %705 = vmatpush1.msra.mxu0 %v565
        %706 = vmatprep.subr.mxu0 0.0
        %707 = vmatpush1.msra.mxu0 %v568
        %708 = vmatprep.subr.mxu0 0.0
        %709 = vmatpush1.msra.mxu0 %v571
        %710 = vmatprep.subr.mxu0 0.0
        %711 = vmatpush1.msra.mxu0 %v574
        %712 = vmatprep.subr.mxu0 0.0
        %713 = vmatpush1.msra.mxu0 %v577
        %714 = vmatprep.subr.mxu0 0.0
        %715 = vmatpush1.msra.mxu0 %v580
        %716 = vmatprep.subr.mxu0 0.0
        %717 = vmatpush1.msra.mxu0 %v583
        %718 = vmatprep.subr.mxu0 0.0
        %719 = vmatpush1.msra.mxu0 %v586
        %720 = vmatprep.subr.mxu0 0.0
        %721 = vmatpush1.msra.mxu0 %v589
        %722 = vmatprep.subr.mxu0 0.0
        %723 = vmatpush1.msra.mxu0 %v592
        %724 = vmatprep.subr.mxu0 0.0
        %725 = vmatpush1.msra.mxu0 %v595
        %726 = vmatprep.subr.mxu0 0.0
        %727 = vmatpush1.msra.mxu0 %v598
        %728 = vmatprep.subr.mxu0 0.0
        %729 = vmatpush1.msra.mxu0 %v601
        %730 = vmatprep.subr.mxu0 0.0
        %731 = vmatpush1.msra.mxu0 %v604
        %732 = vmatprep.subr.mxu0 0.0
        %733 = vmatpush1.msra.mxu0 %v607
        %734 = vmatprep.subr.mxu0 0.0
        %735 = vmatpush1.msra.mxu0 0.0
        %736 = vmatprep.subr.mxu0 0.0
        %737 = vmatpush1.msra.mxu0 0.0
        %738 = vmatprep.subr.mxu0 0.0
        %739 = vmatpush1.msra.mxu0 0.0
        %740 = vmatprep.subr.mxu0 0.0
        %741 = vmatpush1.msra.mxu0 0.0
        %742 = vmatprep.subr.mxu0 0.0
        %743 = vmatpush1.msra.mxu0 0.0
        %744 = vmatprep.subr.mxu0 0.0
        %745 = vmatpush1.msra.mxu0 0.0
        %746 = vmatprep.subr.mxu0 0.0
        %747 = vmatpush1.msra.mxu0 0.0
        %748 = vmatprep.subr.mxu0 0.0
        %749 = vmatpush1.msra.mxu0 0.0
        %750 = vmatprep.subr.mxu0 0.0
        %751 = vmatpush1.msra.mxu0 0.0
        %752 = vmatprep.subr.mxu0 0.0
        %753 = vmatpush1.msra.mxu0 0.0
        %754 = vmatprep.subr.mxu0 0.0
        %755 = vmatpush1.msra.mxu0 0.0
        %756 = vmatprep.subr.mxu0 0.0
        %757 = vmatpush1.msra.mxu0 0.0
        %758 = vmatprep.subr.mxu0 0.0
        %759 = vmatpush1.msra.mxu0 0.0
        %760 = vmatprep.subr.mxu0 0.0
        %761 = vmatpush1.msra.mxu0 0.0
        %762 = vmatprep.subr.mxu0 0.0
        %763 = vmatpush1.msra.mxu0 0.0
        %764 = vmatprep.subr.mxu0 0.0
        %765 = vmatpush1.msra.mxu0 0.0
        %766 = vmatprep.mubr.f32.mxu0 0.0
        %767 = vmatmul.mubr.f32.gmra.mrb[0].mxu0 %v558
        %v768 = vpop.f32.mrb[0].mxu0
        %v769 = vadd.f32 %v621, %v768
        %v770 = vpop.f32.mrb[0].mxu0
        %771 = vmatprep.mubr.f32.mxu0 0.0
        %772 = vmatmul.mubr.f32.gmra.mrb[0].mxu0 %v559
        %v773 = vpop.f32.mrb[0].mxu0
        %v774 = vadd.f32 %v621, %v773
        %v775 = vpop.f32.mrb[0].mxu0
        %776 = vdwg.mxu0
        %777 = vst [vmem:[#allocation2] sm:$0xff] %v692
        %778 = vst [vmem:[#allocation2 + $0x8] sm:$0xff] %v694
        %779 = vst [vmem:[#allocation2 + $0x10] sm:$0xff] %v769
        %780 = vst [vmem:[#allocation2 + $0x18] sm:$0xff] %v698
        %781 = vst [vmem:[#allocation2 + $0x20] sm:$0xff] %v700
        %782 = vst [vmem:[#allocation2 + $0x28] sm:$0xff] %v774
        %v783 = vld [vmem:[#allocation2] sm:$0xff]
        %v784 = vld [vmem:[#allocation2 + $0x18] sm:$0xff]
        %v785 = vld [vmem:[#allocation2 + $0x8] sm:$0xff]
        %v786 = vld [vmem:[#allocation2 + $0x20] sm:$0xff]
        %v787 = vld [vmem:[#allocation2 + $0x10] sm:$0xff]
        %v788 = vld [vmem:[#allocation2 + $0x28] sm:$0xff]
        %vm789 = vcmask 261120
        %v791 = vsel %vm789, %v783, 0
        %v794 = vsel %vm789, %v784, 0
        %v797 = vsel %vm789, %v785, 0
        %v800 = vsel %vm789, %v786, 0
        %802 = vmatprep.subr.mxu0 0.0
        %803 = vmatpush1.xpose.msra.mxu0 %v797
        %804 = vmatprep.subr.mxu0 0.0
        %805 = vmatpush1.xpose.msra.mxu0 %v800
        %806 = vmatprep.subr.mxu0 0.0
        %807 = vmatpush1.xpose.msra.mxu0 0.0
        %808 = vmatprep.subr.mxu0 0.0
        %809 = vmatpush1.xpose.msra.mxu0 0.0
        %810 = vmatprep.subr.mxu0 0.0
        %811 = vmatpush1.xpose.msra.mxu0 0.0
        %812 = vmatprep.subr.mxu0 0.0
        %813 = vmatpush1.xpose.msra.mxu0 0.0
        %814 = vmatprep.subr.mxu0 0.0
        %815 = vmatpush1.xpose.msra.mxu0 0.0
        %816 = vmatprep.subr.mxu0 0.0
        %817 = vmatpush1.xpose.msra.mxu0 0.0
        %818 = vmatprep.subr.mxu0 0.0
        %819 = vmatpush1.xpose.msra.mxu0 0.0
        %820 = vmatprep.subr.mxu0 0.0
        %821 = vmatpush1.xpose.msra.mxu0 0.0
        %822 = vmatprep.subr.mxu0 0.0
        %823 = vmatpush1.xpose.msra.mxu0 0.0
        %824 = vmatprep.subr.mxu0 0.0
        %825 = vmatpush1.xpose.msra.mxu0 0.0
        %826 = vmatprep.subr.mxu0 0.0
        %827 = vmatpush1.xpose.msra.mxu0 0.0
        %828 = vmatprep.subr.mxu0 0.0
        %829 = vmatpush1.xpose.msra.mxu0 0.0
        %830 = vmatprep.subr.mxu0 0.0
        %831 = vmatpush1.xpose.msra.mxu0 0.0
        %832 = vmatprep.subr.mxu0 0.0
        %833 = vmatpush1.xpose.msra.mxu0 0.0
        %834 = vmatprep.subr.mxu0 0.0
        %835 = vmatpush1.xpose.msra.mxu0 0.0
        %836 = vmatprep.subr.mxu0 0.0
        %837 = vmatpush1.xpose.msra.mxu0 0.0
        %838 = vmatprep.subr.mxu0 0.0
        %839 = vmatpush1.xpose.msra.mxu0 0.0
        %840 = vmatprep.subr.mxu0 0.0
        %841 = vmatpush1.xpose.msra.mxu0 0.0
        %842 = vmatprep.subr.mxu0 0.0
        %843 = vmatpush1.xpose.msra.mxu0 0.0
        %844 = vmatprep.subr.mxu0 0.0
        %845 = vmatpush1.xpose.msra.mxu0 0.0
        %846 = vmatprep.subr.mxu0 0.0
        %847 = vmatpush1.xpose.msra.mxu0 0.0
        %848 = vmatprep.subr.mxu0 0.0
        %849 = vmatpush1.xpose.msra.mxu0 0.0
        %850 = vmatprep.subr.mxu0 0.0
        %851 = vmatpush1.xpose.msra.mxu0 0.0
        %852 = vmatprep.subr.mxu0 0.0
        %853 = vmatpush1.xpose.msra.mxu0 0.0
        %854 = vmatprep.subr.mxu0 0.0
        %855 = vmatpush1.xpose.msra.mxu0 0.0
        %856 = vmatprep.subr.mxu0 0.0
        %857 = vmatpush1.xpose.msra.mxu0 0.0
        %858 = vmatprep.subr.mxu0 0.0
        %859 = vmatpush1.xpose.msra.mxu0 0.0
        %860 = vmatprep.subr.mxu0 0.0
        %861 = vmatpush1.xpose.msra.mxu0 0.0
        %862 = vmatprep.subr.mxu0 0.0
        %863 = vmatpush1.xpose.msra.mxu0 0.0
        %864 = vmatprep.subr.mxu0 0.0
        %865 = vmatpush1.xpose.msra.mxu0 0.0
        %866 = vmatprep.mubr.f32.mxu0 0.0
        %867 = vmatmul.mubr.f32.gmra.mrb[0].mxu0 %v791
        %v868 = vpop.f32.mrb[0].mxu0
        %v869 = vadd.f32 0.0, %v868
        %v870 = vpop.f32.mrb[0].mxu0
        %871 = vmatprep.mubr.f32.mxu0 0.0
        %872 = vmatmul.mubr.f32.gmra.mrb[0].mxu0 %v794
        %v873 = vpop.f32.mrb[0].mxu0
        %v874 = vadd.f32 0.0, %v873
        %v875 = vpop.f32.mrb[0].mxu0
        %876 = vdwg.mxu0
        %vm877 = vcmask 130048
        %v878 = vsel %vm877, %v869, -inf
        %879 = vmax.xlane.f32.xlu0 %v878
        %v880 = vpop.xlane.xlu0 %879
        %v881 = vsel %vm877, %v874, -inf
        %882 = vmax.xlane.f32.xlu0 %v881
        %v883 = vpop.xlane.xlu0 %882
        %v884 = vsub.f32 %v869, %v880
        %v885 = vsub.f32 %v874, %v883
        %v886 = vmul.f32 %v884, 1.442695
        %v887 = vpow.pop %v886
        %v888 = vmul.f32 %v885, 1.442695
        %v889 = vpow.pop %v888
        %v890 = vsel %vm877, %v887, 0.0
        %891 = vadd.xlane.f32.xlu0 %v890
        %v892 = vpop.xlane.xlu0 %891
        %v893 = vsel %vm877, %v889, 0.0
        %894 = vadd.xlane.f32.xlu0 %v893
        %v895 = vpop.xlane.xlu0 %894
        %v896 = vrcp.pop %v892
        %v897 = vmul.f32 %v887, %v896
        %v898 = vrcp.pop %v895
        %v899 = vmul.f32 %v889, %v898
        %v901 = vsel %vm877, %v897, 0
        %v904 = vsel %vm877, %v899, 0
        %906 = vmatprep.subr.mxu0 0.0
        %907 = vmatpush1.msra.mxu0 %v787
        %908 = vmatprep.subr.mxu0 0.0
        %909 = vmatpush1.msra.mxu0 %v788
        %910 = vmatprep.subr.mxu0 0.0
        %911 = vmatpush1.msra.mxu0 0.0
        %912 = vmatprep.subr.mxu0 0.0
        %913 = vmatpush1.msra.mxu0 0.0
        %914 = vmatprep.subr.mxu0 0.0
        %915 = vmatpush1.msra.mxu0 0.0
        %916 = vmatprep.subr.mxu0 0.0
        %917 = vmatpush1.msra.mxu0 0.0
        %918 = vmatprep.subr.mxu0 0.0
        %919 = vmatpush1.msra.mxu0 0.0
        %920 = vmatprep.subr.mxu0 0.0
        %921 = vmatpush1.msra.mxu0 0.0
        %922 = vmatprep.subr.mxu0 0.0
        %923 = vmatpush1.msra.mxu0 0.0
        %924 = vmatprep.subr.mxu0 0.0
        %925 = vmatpush1.msra.mxu0 0.0
        %926 = vmatprep.subr.mxu0 0.0
        %927 = vmatpush1.msra.mxu0 0.0
        %928 = vmatprep.subr.mxu0 0.0
        %929 = vmatpush1.msra.mxu0 0.0
        %930 = vmatprep.subr.mxu0 0.0
        %931 = vmatpush1.msra.mxu0 0.0
        %932 = vmatprep.subr.mxu0 0.0
        %933 = vmatpush1.msra.mxu0 0.0
        %934 = vmatprep.subr.mxu0 0.0
        %935 = vmatpush1.msra.mxu0 0.0
        %936 = vmatprep.subr.mxu0 0.0
        %937 = vmatpush1.msra.mxu0 0.0
        %938 = vmatprep.subr.mxu0 0.0
        %939 = vmatpush1.msra.mxu0 0.0
        %940 = vmatprep.subr.mxu0 0.0
        %941 = vmatpush1.msra.mxu0 0.0
        %942 = vmatprep.subr.mxu0 0.0
        %943 = vmatpush1.msra.mxu0 0.0
        %944 = vmatprep.subr.mxu0 0.0
        %945 = vmatpush1.msra.mxu0 0.0
        %946 = vmatprep.subr.mxu0 0.0
        %947 = vmatpush1.msra.mxu0 0.0
        %948 = vmatprep.subr.mxu0 0.0
        %949 = vmatpush1.msra.mxu0 0.0
        %950 = vmatprep.subr.mxu0 0.0
        %951 = vmatpush1.msra.mxu0 0.0
        %952 = vmatprep.subr.mxu0 0.0
        %953 = vmatpush1.msra.mxu0 0.0
        %954 = vmatprep.subr.mxu0 0.0
        %955 = vmatpush1.msra.mxu0 0.0
        %956 = vmatprep.subr.mxu0 0.0
        %957 = vmatpush1.msra.mxu0 0.0
        %958 = vmatprep.subr.mxu0 0.0
        %959 = vmatpush1.msra.mxu0 0.0
        %960 = vmatprep.subr.mxu0 0.0
        %961 = vmatpush1.msra.mxu0 0.0
        %962 = vmatprep.subr.mxu0 0.0
        %963 = vmatpush1.msra.mxu0 0.0
        %964 = vmatprep.subr.mxu0 0.0
        %965 = vmatpush1.msra.mxu0 0.0
        %966 = vmatprep.subr.mxu0 0.0
        %967 = vmatpush1.msra.mxu0 0.0
        %968 = vmatprep.subr.mxu0 0.0
        %969 = vmatpush1.msra.mxu0 0.0
        %970 = vmatprep.mubr.f32.mxu0 0.0
        %971 = vmatmul.mubr.f32.gmra.mrb[0].mxu0 %v901
        %v972 = vpop.f32.mrb[0].mxu0
        %v973 = vadd.f32 0.0, %v972
        %v974 = vpop.f32.mrb[0].mxu0
        %975 = vmatprep.mubr.f32.mxu0 0.0
        %976 = vmatmul.mubr.f32.gmra.mrb[0].mxu0 %v904
        %v977 = vpop.f32.mrb[0].mxu0
        %v978 = vadd.f32 0.0, %v977
        %v979 = vpop.f32.mrb[0].mxu0
        %980 = vdwg.mxu0
        %v981 = vld [vmem:[#allocation9] sm:$0xff]
        %v982 = vld [vmem:[#allocation9 + $0x8] sm:$0xff]
        %v983 = vld [vmem:[#allocation9 + $0x10] sm:$0xff]
        %v984 = vld [vmem:[#allocation9 + $0x18] sm:$0xff]
        %985 = vrot.lane.b32.xlu0 %v783, 96
        %v986 = vpop.permute.xlu0 %985
        %987 = vrot.lane.b32.xlu0 %v784, 96
        %v988 = vpop.permute.xlu0 %987
        %989 = vrot.lane.b32.xlu0 %v785, 96
        %v990 = vpop.permute.xlu0 %989
        %991 = vrot.lane.b32.xlu0 %v786, 96
        %v992 = vpop.permute.xlu0 %991
        %v993 = vsel %vm789, %v986, 0
        %v995 = vsel %vm789, %v988, 0
        %v997 = vsel %vm789, %v990, 0
        %v999 = vsel %vm789, %v992, 0
        %1001 = vmatprep.subr.mxu0 0.0
        %1002 = vmatpush1.xpose.msra.mxu0 %v997
        %1003 = vmatprep.subr.mxu0 0.0
        %1004 = vmatpush1.xpose.msra.mxu0 %v999
        %1005 = vmatprep.subr.mxu0 0.0
        %1006 = vmatpush1.xpose.msra.mxu0 0.0
        %1007 = vmatprep.subr.mxu0 0.0
        %1008 = vmatpush1.xpose.msra.mxu0 0.0
        %1009 = vmatprep.subr.mxu0 0.0
        %1010 = vmatpush1.xpose.msra.mxu0 0.0
        %1011 = vmatprep.subr.mxu0 0.0
        %1012 = vmatpush1.xpose.msra.mxu0 0.0
        %1013 = vmatprep.subr.mxu0 0.0
        %1014 = vmatpush1.xpose.msra.mxu0 0.0
        %1015 = vmatprep.subr.mxu0 0.0
        %1016 = vmatpush1.xpose.msra.mxu0 0.0
        %1017 = vmatprep.subr.mxu0 0.0
        %1018 = vmatpush1.xpose.msra.mxu0 0.0
        %1019 = vmatprep.subr.mxu0 0.0
        %1020 = vmatpush1.xpose.msra.mxu0 0.0
        %1021 = vmatprep.subr.mxu0 0.0
        %1022 = vmatpush1.xpose.msra.mxu0 0.0
        %1023 = vmatprep.subr.mxu0 0.0
        %1024 = vmatpush1.xpose.msra.mxu0 0.0
        %1025 = vmatprep.subr.mxu0 0.0
        %1026 = vmatpush1.xpose.msra.mxu0 0.0
        %1027 = vmatprep.subr.mxu0 0.0
        %1028 = vmatpush1.xpose.msra.mxu0 0.0
        %1029 = vmatprep.subr.mxu0 0.0
        %1030 = vmatpush1.xpose.msra.mxu0 0.0
        %1031 = vmatprep.subr.mxu0 0.0
        %1032 = vmatpush1.xpose.msra.mxu0 0.0
        %1033 = vmatprep.subr.mxu0 0.0
        %1034 = vmatpush1.xpose.msra.mxu0 0.0
        %1035 = vmatprep.subr.mxu0 0.0
        %1036 = vmatpush1.xpose.msra.mxu0 0.0
        %1037 = vmatprep.subr.mxu0 0.0
        %1038 = vmatpush1.xpose.msra.mxu0 0.0
        %1039 = vmatprep.subr.mxu0 0.0
        %1040 = vmatpush1.xpose.msra.mxu0 0.0
        %1041 = vmatprep.subr.mxu0 0.0
        %1042 = vmatpush1.xpose.msra.mxu0 0.0
        %1043 = vmatprep.subr.mxu0 0.0
        %1044 = vmatpush1.xpose.msra.mxu0 0.0
        %1045 = vmatprep.subr.mxu0 0.0
        %1046 = vmatpush1.xpose.msra.mxu0 0.0
        %1047 = vmatprep.subr.mxu0 0.0
        %1048 = vmatpush1.xpose.msra.mxu0 0.0
        %1049 = vmatprep.subr.mxu0 0.0
        %1050 = vmatpush1.xpose.msra.mxu0 0.0
        %1051 = vmatprep.subr.mxu0 0.0
        %1052 = vmatpush1.xpose.msra.mxu0 0.0
        %1053 = vmatprep.subr.mxu0 0.0
        %1054 = vmatpush1.xpose.msra.mxu0 0.0
        %1055 = vmatprep.subr.mxu0 0.0
        %1056 = vmatpush1.xpose.msra.mxu0 0.0
        %1057 = vmatprep.subr.mxu0 0.0
        %1058 = vmatpush1.xpose.msra.mxu0 0.0
        %1059 = vmatprep.subr.mxu0 0.0
        %1060 = vmatpush1.xpose.msra.mxu0 0.0
        %1061 = vmatprep.subr.mxu0 0.0
        %1062 = vmatpush1.xpose.msra.mxu0 0.0
        %1063 = vmatprep.subr.mxu0 0.0
        %1064 = vmatpush1.xpose.msra.mxu0 0.0
        %1065 = vmatprep.mubr.f32.mxu0 0.0
        %1066 = vmatmul.mubr.f32.gmra.mrb[0].mxu0 %v993
        %v1067 = vpop.f32.mrb[0].mxu0
        %v1068 = vadd.f32 0.0, %v1067
        %v1069 = vpop.f32.mrb[0].mxu0
        %1070 = vmatprep.mubr.f32.mxu0 0.0
        %1071 = vmatmul.mubr.f32.gmra.mrb[0].mxu0 %v995
        %v1072 = vpop.f32.mrb[0].mxu0
        %v1073 = vadd.f32 0.0, %v1072
        %v1074 = vpop.f32.mrb[0].mxu0
        %1075 = vdwg.mxu0
        %v1076 = vsel %vm877, %v1068, -inf
        %1077 = vmax.xlane.f32.xlu0 %v1076
        %v1078 = vpop.xlane.xlu0 %1077
        %v1079 = vsel %vm877, %v1073, -inf
        %1080 = vmax.xlane.f32.xlu0 %v1079
        %v1081 = vpop.xlane.xlu0 %1080
        %v1082 = vsub.f32 %v1068, %v1078
        %v1083 = vsub.f32 %v1073, %v1081
        %v1084 = vmul.f32 %v1082, 1.442695
        %v1085 = vpow.pop %v1084
        %v1086 = vmul.f32 %v1083, 1.442695
        %v1087 = vpow.pop %v1086
        %v1088 = vsel %vm877, %v1085, 0.0
        %1089 = vadd.xlane.f32.xlu0 %v1088
        %v1090 = vpop.xlane.xlu0 %1089
        %v1091 = vsel %vm877, %v1087, 0.0
        %1092 = vadd.xlane.f32.xlu0 %v1091
        %v1093 = vpop.xlane.xlu0 %1092
        %v1094 = vrcp.pop %v1090
        %v1095 = vmul.f32 %v1085, %v1094
        %v1096 = vrcp.pop %v1093
        %v1097 = vmul.f32 %v1087, %v1096
        %1100 = vrot.lane.b32.xlu0 %v787, 96
        %v1101 = vpop.permute.xlu0 %1100
        %1102 = vrot.lane.b32.xlu0 %v788, 96
        %v1103 = vpop.permute.xlu0 %1102
        %v1107 = vsel %vm877, %v1095, 0
        %v1110 = vsel %vm877, %v1097, 0
        %1112 = vmatprep.subr.mxu0 0.0
        %1113 = vmatpush1.msra.mxu0 %v1101
        %1114 = vmatprep.subr.mxu0 0.0
        %1115 = vmatpush1.msra.mxu0 %v1103
        %1116 = vmatprep.subr.mxu0 0.0
        %1117 = vmatpush1.msra.mxu0 0.0
        %1118 = vmatprep.subr.mxu0 0.0
        %1119 = vmatpush1.msra.mxu0 0.0
        %1120 = vmatprep.subr.mxu0 0.0
        %1121 = vmatpush1.msra.mxu0 0.0
        %1122 = vmatprep.subr.mxu0 0.0
        %1123 = vmatpush1.msra.mxu0 0.0
        %1124 = vmatprep.subr.mxu0 0.0
        %1125 = vmatpush1.msra.mxu0 0.0
        %1126 = vmatprep.subr.mxu0 0.0
        %1127 = vmatpush1.msra.mxu0 0.0
        %1128 = vmatprep.subr.mxu0 0.0
        %1129 = vmatpush1.msra.mxu0 0.0
        %1130 = vmatprep.subr.mxu0 0.0
        %1131 = vmatpush1.msra.mxu0 0.0
        %1132 = vmatprep.subr.mxu0 0.0
        %1133 = vmatpush1.msra.mxu0 0.0
        %1134 = vmatprep.subr.mxu0 0.0
        %1135 = vmatpush1.msra.mxu0 0.0
        %1136 = vmatprep.subr.mxu0 0.0
        %1137 = vmatpush1.msra.mxu0 0.0
        %1138 = vmatprep.subr.mxu0 0.0
        %1139 = vmatpush1.msra.mxu0 0.0
        %1140 = vmatprep.subr.mxu0 0.0
        %1141 = vmatpush1.msra.mxu0 0.0
        %1142 = vmatprep.subr.mxu0 0.0
        %1143 = vmatpush1.msra.mxu0 0.0
        %1144 = vmatprep.subr.mxu0 0.0
        %1145 = vmatpush1.msra.mxu0 0.0
        %1146 = vmatprep.subr.mxu0 0.0
        %1147 = vmatpush1.msra.mxu0 0.0
        %1148 = vmatprep.subr.mxu0 0.0
        %1149 = vmatpush1.msra.mxu0 0.0
        %1150 = vmatprep.subr.mxu0 0.0
        %1151 = vmatpush1.msra.mxu0 0.0
        %1152 = vmatprep.subr.mxu0 0.0
        %1153 = vmatpush1.msra.mxu0 0.0
        %1154 = vmatprep.subr.mxu0 0.0
        %1155 = vmatpush1.msra.mxu0 0.0
        %1156 = vmatprep.subr.mxu0 0.0
        %1157 = vmatpush1.msra.mxu0 0.0
        %1158 = vmatprep.subr.mxu0 0.0
        %1159 = vmatpush1.msra.mxu0 0.0
        %1160 = vmatprep.subr.mxu0 0.0
        %1161 = vmatpush1.msra.mxu0 0.0
        %1162 = vmatprep.subr.mxu0 0.0
        %1163 = vmatpush1.msra.mxu0 0.0
        %1164 = vmatprep.subr.mxu0 0.0
        %1165 = vmatpush1.msra.mxu0 0.0
        %1166 = vmatprep.subr.mxu0 0.0
        %1167 = vmatpush1.msra.mxu0 0.0
        %1168 = vmatprep.subr.mxu0 0.0
        %1169 = vmatpush1.msra.mxu0 0.0
        %1170 = vmatprep.subr.mxu0 0.0
        %1171 = vmatpush1.msra.mxu0 0.0
        %1172 = vmatprep.subr.mxu0 0.0
        %1173 = vmatpush1.msra.mxu0 0.0
        %1174 = vmatprep.subr.mxu0 0.0
        %1175 = vmatpush1.msra.mxu0 0.0
        %1176 = vmatprep.mubr.f32.mxu0 0.0
        %1177 = vmatmul.mubr.f32.gmra.mrb[0].mxu0 %v1107
        %v1178 = vpop.f32.mrb[0].mxu0
        %v1179 = vadd.f32 0.0, %v1178
        %v1180 = vpop.f32.mrb[0].mxu0
        %1181 = vmatprep.mubr.f32.mxu0 0.0
        %1182 = vmatmul.mubr.f32.gmra.mrb[0].mxu0 %v1110
        %v1183 = vpop.f32.mrb[0].mxu0
        %v1184 = vadd.f32 0.0, %v1183
        %v1185 = vpop.f32.mrb[0].mxu0
        %1186 = vdwg.mxu0
        %v1187 = vld [vmem:[#allocation9 + $0x20] sm:$0xff]
        %v1188 = vld [vmem:[#allocation9 + $0x28] sm:$0xff]
        %v1189 = vld [vmem:[#allocation9 + $0x30] sm:$0xff]
        %v1190 = vld [vmem:[#allocation9 + $0x38] sm:$0xff]
        %v1192 = vsel %vm789, %v1179, 0
        %v1195 = vsel %vm789, %v1184, 0
        %1197 = vmatprep.subr.mxu0 0.0
        %1198 = vmatpush1.msra.mxu0 %v1187
        %1199 = vmatprep.subr.mxu0 0.0
        %1200 = vmatpush1.msra.mxu0 %v1188
        %1201 = vmatprep.subr.mxu0 0.0
        %1202 = vmatpush1.msra.mxu0 %v1189
        %1203 = vmatprep.subr.mxu0 0.0
        %1204 = vmatpush1.msra.mxu0 %v1190
        %1205 = vmatprep.subr.mxu0 0.0
        %1206 = vmatpush1.msra.mxu0 0.0
        %1207 = vmatprep.subr.mxu0 0.0
        %1208 = vmatpush1.msra.mxu0 0.0
        %1209 = vmatprep.subr.mxu0 0.0
        %1210 = vmatpush1.msra.mxu0 0.0
        %1211 = vmatprep.subr.mxu0 0.0
        %1212 = vmatpush1.msra.mxu0 0.0
        %1213 = vmatprep.subr.mxu0 0.0
        %1214 = vmatpush1.msra.mxu0 0.0
        %1215 = vmatprep.subr.mxu0 0.0
        %1216 = vmatpush1.msra.mxu0 0.0
        %1217 = vmatprep.subr.mxu0 0.0
        %1218 = vmatpush1.msra.mxu0 0.0
        %1219 = vmatprep.subr.mxu0 0.0
        %1220 = vmatpush1.msra.mxu0 0.0
        %1221 = vmatprep.subr.mxu0 0.0
        %1222 = vmatpush1.msra.mxu0 0.0
        %1223 = vmatprep.subr.mxu0 0.0
        %1224 = vmatpush1.msra.mxu0 0.0
        %1225 = vmatprep.subr.mxu0 0.0
        %1226 = vmatpush1.msra.mxu0 0.0
        %1227 = vmatprep.subr.mxu0 0.0
        %1228 = vmatpush1.msra.mxu0 0.0
        %1229 = vmatprep.subr.mxu0 0.0
        %1230 = vmatpush1.msra.mxu0 0.0
        %1231 = vmatprep.subr.mxu0 0.0
        %1232 = vmatpush1.msra.mxu0 0.0
        %1233 = vmatprep.subr.mxu0 0.0
        %1234 = vmatpush1.msra.mxu0 0.0
        %1235 = vmatprep.subr.mxu0 0.0
        %1236 = vmatpush1.msra.mxu0 0.0
        %1237 = vmatprep.subr.mxu0 0.0
        %1238 = vmatpush1.msra.mxu0 0.0
        %1239 = vmatprep.subr.mxu0 0.0
        %1240 = vmatpush1.msra.mxu0 0.0
        %1241 = vmatprep.subr.mxu0 0.0
        %1242 = vmatpush1.msra.mxu0 0.0
        %1243 = vmatprep.subr.mxu0 0.0
        %1244 = vmatpush1.msra.mxu0 0.0
        %1245 = vmatprep.subr.mxu0 0.0
        %1246 = vmatpush1.msra.mxu0 0.0
        %1247 = vmatprep.subr.mxu0 0.0
        %1248 = vmatpush1.msra.mxu0 0.0
        %1249 = vmatprep.subr.mxu0 0.0
        %1250 = vmatpush1.msra.mxu0 0.0
        %1251 = vmatprep.subr.mxu0 0.0
        %1252 = vmatpush1.msra.mxu0 0.0
        %1253 = vmatprep.subr.mxu0 0.0
        %1254 = vmatpush1.msra.mxu0 0.0
        %1255 = vmatprep.subr.mxu0 0.0
        %1256 = vmatpush1.msra.mxu0 0.0
        %1257 = vmatprep.subr.mxu0 0.0
        %1258 = vmatpush1.msra.mxu0 0.0
        %1259 = vmatprep.subr.mxu0 0.0
        %1260 = vmatpush1.msra.mxu0 0.0
        %1261 = vmatprep.mubr.f32.mxu0 0.0
        %1262 = vmatmul.mubr.f32.gmra.mrb[0].mxu0 %v1192
        %v1263 = vpop.f32.mrb[0].mxu0
        %v1264 = vadd.f32 0.0, %v1263
        %v1265 = vpop.f32.mrb[0].mxu0
        %1266 = vmatprep.mubr.f32.mxu0 0.0
        %1267 = vmatmul.mubr.f32.gmra.mrb[0].mxu0 %v1195
        %v1268 = vpop.f32.mrb[0].mxu0
        %v1269 = vadd.f32 0.0, %v1268
        %v1270 = vpop.f32.mrb[0].mxu0
        %1271 = vdwg.mxu0
        %v1273 = vsel %vm789, %v973, 0
        %v1276 = vsel %vm789, %v978, 0
        %1278 = vmatprep.subr.mxu0 0.0
        %1279 = vmatpush1.msra.mxu0 %v981
        %1280 = vmatprep.subr.mxu0 0.0
        %1281 = vmatpush1.msra.mxu0 %v982
        %1282 = vmatprep.subr.mxu0 0.0
        %1283 = vmatpush1.msra.mxu0 %v983
        %1284 = vmatprep.subr.mxu0 0.0
        %1285 = vmatpush1.msra.mxu0 %v984
        %1286 = vmatprep.subr.mxu0 0.0
        %1287 = vmatpush1.msra.mxu0 0.0
        %1288 = vmatprep.subr.mxu0 0.0
        %1289 = vmatpush1.msra.mxu0 0.0
        %1290 = vmatprep.subr.mxu0 0.0
        %1291 = vmatpush1.msra.mxu0 0.0
        %1292 = vmatprep.subr.mxu0 0.0
        %1293 = vmatpush1.msra.mxu0 0.0
        %1294 = vmatprep.subr.mxu0 0.0
        %1295 = vmatpush1.msra.mxu0 0.0
        %1296 = vmatprep.subr.mxu0 0.0
        %1297 = vmatpush1.msra.mxu0 0.0
        %1298 = vmatprep.subr.mxu0 0.0
        %1299 = vmatpush1.msra.mxu0 0.0
        %1300 = vmatprep.subr.mxu0 0.0
        %1301 = vmatpush1.msra.mxu0 0.0
        %1302 = vmatprep.subr.mxu0 0.0
        %1303 = vmatpush1.msra.mxu0 0.0
        %1304 = vmatprep.subr.mxu0 0.0
        %1305 = vmatpush1.msra.mxu0 0.0
        %1306 = vmatprep.subr.mxu0 0.0
        %1307 = vmatpush1.msra.mxu0 0.0
        %1308 = vmatprep.subr.mxu0 0.0
        %1309 = vmatpush1.msra.mxu0 0.0
        %1310 = vmatprep.subr.mxu0 0.0
        %1311 = vmatpush1.msra.mxu0 0.0
        %1312 = vmatprep.subr.mxu0 0.0
        %1313 = vmatpush1.msra.mxu0 0.0
        %1314 = vmatprep.subr.mxu0 0.0
        %1315 = vmatpush1.msra.mxu0 0.0
        %1316 = vmatprep.subr.mxu0 0.0
        %1317 = vmatpush1.msra.mxu0 0.0
        %1318 = vmatprep.subr.mxu0 0.0
        %1319 = vmatpush1.msra.mxu0 0.0
        %1320 = vmatprep.subr.mxu0 0.0
        %1321 = vmatpush1.msra.mxu0 0.0
        %1322 = vmatprep.subr.mxu0 0.0
        %1323 = vmatpush1.msra.mxu0 0.0
        %1324 = vmatprep.subr.mxu0 0.0
        %1325 = vmatpush1.msra.mxu0 0.0
        %1326 = vmatprep.subr.mxu0 0.0
        %1327 = vmatpush1.msra.mxu0 0.0
        %1328 = vmatprep.subr.mxu0 0.0
        %1329 = vmatpush1.msra.mxu0 0.0
        %1330 = vmatprep.subr.mxu0 0.0
        %1331 = vmatpush1.msra.mxu0 0.0
        %1332 = vmatprep.subr.mxu0 0.0
        %1333 = vmatpush1.msra.mxu0 0.0
        %1334 = vmatprep.subr.mxu0 0.0
        %1335 = vmatpush1.msra.mxu0 0.0
        %1336 = vmatprep.subr.mxu0 0.0
        %1337 = vmatpush1.msra.mxu0 0.0
        %1338 = vmatprep.subr.mxu0 0.0
        %1339 = vmatpush1.msra.mxu0 0.0
        %1340 = vmatprep.subr.mxu0 0.0
        %1341 = vmatpush1.msra.mxu0 0.0
        %1342 = vmatprep.mubr.f32.mxu0 0.0
        %1343 = vmatmul.mubr.f32.gmra.mrb[0].mxu0 %v1273
        %v1344 = vpop.f32.mrb[0].mxu0
        %v1345 = vadd.f32 %v1264, %v1344
        %v1346 = vpop.f32.mrb[0].mxu0
        %1347 = vmatprep.mubr.f32.mxu0 0.0
        %1348 = vmatmul.mubr.f32.gmra.mrb[0].mxu0 %v1276
        %v1349 = vpop.f32.mrb[0].mxu0
        %v1350 = vadd.f32 %v1269, %v1349
        %v1351 = vpop.f32.mrb[0].mxu0
        %1352 = vdwg.mxu0
        %1353 = vrot.lane.b32.xlu0 %v783, 64
        %v1354 = vpop.permute.xlu0 %1353
        %1355 = vrot.lane.b32.xlu0 %v784, 64
        %v1356 = vpop.permute.xlu0 %1355
        %1357 = vrot.lane.b32.xlu0 %v785, 64
        %v1358 = vpop.permute.xlu0 %1357
        %1359 = vrot.lane.b32.xlu0 %v786, 64
        %v1360 = vpop.permute.xlu0 %1359
        %v1361 = vsel %vm789, %v1354, 0
        %v1363 = vsel %vm789, %v1356, 0
        %v1365 = vsel %vm789, %v1358, 0
        %v1367 = vsel %vm789, %v1360, 0
        %1369 = vmatprep.subr.mxu0 0.0
        %1370 = vmatpush1.xpose.msra.mxu0 %v1365
        %1371 = vmatprep.subr.mxu0 0.0
        %1372 = vmatpush1.xpose.msra.mxu0 %v1367
        %1373 = vmatprep.subr.mxu0 0.0
        %1374 = vmatpush1.xpose.msra.mxu0 0.0
        %1375 = vmatprep.subr.mxu0 0.0
        %1376 = vmatpush1.xpose.msra.mxu0 0.0
        %1377 = vmatprep.subr.mxu0 0.0
        %1378 = vmatpush1.xpose.msra.mxu0 0.0
        %1379 = vmatprep.subr.mxu0 0.0
        %1380 = vmatpush1.xpose.msra.mxu0 0.0
        %1381 = vmatprep.subr.mxu0 0.0
        %1382 = vmatpush1.xpose.msra.mxu0 0.0
        %1383 = vmatprep.subr.mxu0 0.0
        %1384 = vmatpush1.xpose.msra.mxu0 0.0
        %1385 = vmatprep.subr.mxu0 0.0
        %1386 = vmatpush1.xpose.msra.mxu0 0.0
        %1387 = vmatprep.subr.mxu0 0.0
        %1388 = vmatpush1.xpose.msra.mxu0 0.0
        %1389 = vmatprep.subr.mxu0 0.0
        %1390 = vmatpush1.xpose.msra.mxu0 0.0
        %1391 = vmatprep.subr.mxu0 0.0
        %1392 = vmatpush1.xpose.msra.mxu0 0.0
        %1393 = vmatprep.subr.mxu0 0.0
        %1394 = vmatpush1.xpose.msra.mxu0 0.0
        %1395 = vmatprep.subr.mxu0 0.0
        %1396 = vmatpush1.xpose.msra.mxu0 0.0
        %1397 = vmatprep.subr.mxu0 0.0
        %1398 = vmatpush1.xpose.msra.mxu0 0.0
        %1399 = vmatprep.subr.mxu0 0.0
        %1400 = vmatpush1.xpose.msra.mxu0 0.0
        %1401 = vmatprep.subr.mxu0 0.0
        %1402 = vmatpush1.xpose.msra.mxu0 0.0
        %1403 = vmatprep.subr.mxu0 0.0
        %1404 = vmatpush1.xpose.msra.mxu0 0.0
        %1405 = vmatprep.subr.mxu0 0.0
        %1406 = vmatpush1.xpose.msra.mxu0 0.0
        %1407 = vmatprep.subr.mxu0 0.0
        %1408 = vmatpush1.xpose.msra.mxu0 0.0
        %1409 = vmatprep.subr.mxu0 0.0
        %1410 = vmatpush1.xpose.msra.mxu0 0.0
        %1411 = vmatprep.subr.mxu0 0.0
        %1412 = vmatpush1.xpose.msra.mxu0 0.0
        %1413 = vmatprep.subr.mxu0 0.0
        %1414 = vmatpush1.xpose.msra.mxu0 0.0
        %1415 = vmatprep.subr.mxu0 0.0
        %1416 = vmatpush1.xpose.msra.mxu0 0.0
        %1417 = vmatprep.subr.mxu0 0.0
        %1418 = vmatpush1.xpose.msra.mxu0 0.0
        %1419 = vmatprep.subr.mxu0 0.0
        %1420 = vmatpush1.xpose.msra.mxu0 0.0
        %1421 = vmatprep.subr.mxu0 0.0
        %1422 = vmatpush1.xpose.msra.mxu0 0.0
        %1423 = vmatprep.subr.mxu0 0.0
        %1424 = vmatpush1.xpose.msra.mxu0 0.0
        %1425 = vmatprep.subr.mxu0 0.0
        %1426 = vmatpush1.xpose.msra.mxu0 0.0
        %1427 = vmatprep.subr.mxu0 0.0
        %1428 = vmatpush1.xpose.msra.mxu0 0.0
        %1429 = vmatprep.subr.mxu0 0.0
        %1430 = vmatpush1.xpose.msra.mxu0 0.0
        %1431 = vmatprep.subr.mxu0 0.0
        %1432 = vmatpush1.xpose.msra.mxu0 0.0
        %1433 = vmatprep.mubr.f32.mxu0 0.0
        %1434 = vmatmul.mubr.f32.gmra.mrb[0].mxu0 %v1361
        %v1435 = vpop.f32.mrb[0].mxu0
        %v1436 = vadd.f32 0.0, %v1435
        %v1437 = vpop.f32.mrb[0].mxu0
        %1438 = vmatprep.mubr.f32.mxu0 0.0
        %1439 = vmatmul.mubr.f32.gmra.mrb[0].mxu0 %v1363
        %v1440 = vpop.f32.mrb[0].mxu0
        %v1441 = vadd.f32 0.0, %v1440
        %v1442 = vpop.f32.mrb[0].mxu0
        %1443 = vdwg.mxu0
        %v1444 = vsel %vm877, %v1436, -inf
        %1445 = vmax.xlane.f32.xlu0 %v1444
        %v1446 = vpop.xlane.xlu0 %1445
        %v1447 = vsel %vm877, %v1441, -inf
        %1448 = vmax.xlane.f32.xlu0 %v1447
        %v1449 = vpop.xlane.xlu0 %1448
        %v1450 = vsub.f32 %v1436, %v1446
        %v1451 = vsub.f32 %v1441, %v1449
        %v1452 = vmul.f32 %v1450, 1.442695
        %v1453 = vpow.pop %v1452
        %v1454 = vmul.f32 %v1451, 1.442695
        %v1455 = vpow.pop %v1454
        %v1456 = vsel %vm877, %v1453, 0.0
        %1457 = vadd.xlane.f32.xlu0 %v1456
        %v1458 = vpop.xlane.xlu0 %1457
        %v1459 = vsel %vm877, %v1455, 0.0
        %1460 = vadd.xlane.f32.xlu0 %v1459
        %v1461 = vpop.xlane.xlu0 %1460
        %v1462 = vrcp.pop %v1458
        %v1463 = vmul.f32 %v1453, %v1462
        %v1464 = vrcp.pop %v1461
        %v1465 = vmul.f32 %v1455, %v1464
        %1466 = vrot.lane.b32.xlu0 %v787, 64
        %v1467 = vpop.permute.xlu0 %1466
        %1468 = vrot.lane.b32.xlu0 %v788, 64
        %v1469 = vpop.permute.xlu0 %1468
        %v1473 = vsel %vm877, %v1463, 0
        %v1476 = vsel %vm877, %v1465, 0
        %1478 = vmatprep.subr.mxu0 0.0
        %1479 = vmatpush1.msra.mxu0 %v1467
        %1480 = vmatprep.subr.mxu0 0.0
        %1481 = vmatpush1.msra.mxu0 %v1469
        %1482 = vmatprep.subr.mxu0 0.0
        %1483 = vmatpush1.msra.mxu0 0.0
        %1484 = vmatprep.subr.mxu0 0.0
        %1485 = vmatpush1.msra.mxu0 0.0
        %1486 = vmatprep.subr.mxu0 0.0
        %1487 = vmatpush1.msra.mxu0 0.0
        %1488 = vmatprep.subr.mxu0 0.0
        %1489 = vmatpush1.msra.mxu0 0.0
        %1490 = vmatprep.subr.mxu0 0.0
        %1491 = vmatpush1.msra.mxu0 0.0
        %1492 = vmatprep.subr.mxu0 0.0
        %1493 = vmatpush1.msra.mxu0 0.0
        %1494 = vmatprep.subr.mxu0 0.0
        %1495 = vmatpush1.msra.mxu0 0.0
        %1496 = vmatprep.subr.mxu0 0.0
        %1497 = vmatpush1.msra.mxu0 0.0
        %1498 = vmatprep.subr.mxu0 0.0
        %1499 = vmatpush1.msra.mxu0 0.0
        %1500 = vmatprep.subr.mxu0 0.0
        %1501 = vmatpush1.msra.mxu0 0.0
        %1502 = vmatprep.subr.mxu0 0.0
        %1503 = vmatpush1.msra.mxu0 0.0
        %1504 = vmatprep.subr.mxu0 0.0
        %1505 = vmatpush1.msra.mxu0 0.0
        %1506 = vmatprep.subr.mxu0 0.0
        %1507 = vmatpush1.msra.mxu0 0.0
        %1508 = vmatprep.subr.mxu0 0.0
        %1509 = vmatpush1.msra.mxu0 0.0
        %1510 = vmatprep.subr.mxu0 0.0
        %1511 = vmatpush1.msra.mxu0 0.0
        %1512 = vmatprep.subr.mxu0 0.0
        %1513 = vmatpush1.msra.mxu0 0.0
        %1514 = vmatprep.subr.mxu0 0.0
        %1515 = vmatpush1.msra.mxu0 0.0
        %1516 = vmatprep.subr.mxu0 0.0
        %1517 = vmatpush1.msra.mxu0 0.0
        %1518 = vmatprep.subr.mxu0 0.0
        %1519 = vmatpush1.msra.mxu0 0.0
        %1520 = vmatprep.subr.mxu0 0.0
        %1521 = vmatpush1.msra.mxu0 0.0
        %1522 = vmatprep.subr.mxu0 0.0
        %1523 = vmatpush1.msra.mxu0 0.0
        %1524 = vmatprep.subr.mxu0 0.0
        %1525 = vmatpush1.msra.mxu0 0.0
        %1526 = vmatprep.subr.mxu0 0.0
        %1527 = vmatpush1.msra.mxu0 0.0
        %1528 = vmatprep.subr.mxu0 0.0
        %1529 = vmatpush1.msra.mxu0 0.0
        %1530 = vmatprep.subr.mxu0 0.0
        %1531 = vmatpush1.msra.mxu0 0.0
        %1532 = vmatprep.subr.mxu0 0.0
        %1533 = vmatpush1.msra.mxu0 0.0
        %1534 = vmatprep.subr.mxu0 0.0
        %1535 = vmatpush1.msra.mxu0 0.0
        %1536 = vmatprep.subr.mxu0 0.0
        %1537 = vmatpush1.msra.mxu0 0.0
        %1538 = vmatprep.subr.mxu0 0.0
        %1539 = vmatpush1.msra.mxu0 0.0
        %1540 = vmatprep.subr.mxu0 0.0
        %1541 = vmatpush1.msra.mxu0 0.0
        %1542 = vmatprep.mubr.f32.mxu0 0.0
        %1543 = vmatmul.mubr.f32.gmra.mrb[0].mxu0 %v1473
        %v1544 = vpop.f32.mrb[0].mxu0
        %v1545 = vadd.f32 0.0, %v1544
        %v1546 = vpop.f32.mrb[0].mxu0
        %1547 = vmatprep.mubr.f32.mxu0 0.0
        %1548 = vmatmul.mubr.f32.gmra.mrb[0].mxu0 %v1476
        %v1549 = vpop.f32.mrb[0].mxu0
        %v1550 = vadd.f32 0.0, %v1549
        %v1551 = vpop.f32.mrb[0].mxu0
        %1552 = vdwg.mxu0
        %v1553 = vld [vmem:[#allocation9 + $0x40] sm:$0xff]
        %v1554 = vld [vmem:[#allocation9 + $0x48] sm:$0xff]
        %v1555 = vld [vmem:[#allocation9 + $0x50] sm:$0xff]
        %v1556 = vld [vmem:[#allocation9 + $0x58] sm:$0xff]
        %v1558 = vsel %vm789, %v1545, 0
        %v1561 = vsel %vm789, %v1550, 0
        %1563 = vmatprep.subr.mxu0 0.0
        %1564 = vmatpush1.msra.mxu0 %v1553
        %1565 = vmatprep.subr.mxu0 0.0
        %1566 = vmatpush1.msra.mxu0 %v1554
        %1567 = vmatprep.subr.mxu0 0.0
        %1568 = vmatpush1.msra.mxu0 %v1555
        %1569 = vmatprep.subr.mxu0 0.0
        %1570 = vmatpush1.msra.mxu0 %v1556
        %1571 = vmatprep.subr.mxu0 0.0
        %1572 = vmatpush1.msra.mxu0 0.0
        %1573 = vmatprep.subr.mxu0 0.0
        %1574 = vmatpush1.msra.mxu0 0.0
        %1575 = vmatprep.subr.mxu0 0.0
        %1576 = vmatpush1.msra.mxu0 0.0
        %1577 = vmatprep.subr.mxu0 0.0
        %1578 = vmatpush1.msra.mxu0 0.0
        %1579 = vmatprep.subr.mxu0 0.0
        %1580 = vmatpush1.msra.mxu0 0.0
        %1581 = vmatprep.subr.mxu0 0.0
        %1582 = vmatpush1.msra.mxu0 0.0
        %1583 = vmatprep.subr.mxu0 0.0
        %1584 = vmatpush1.msra.mxu0 0.0
        %1585 = vmatprep.subr.mxu0 0.0
        %1586 = vmatpush1.msra.mxu0 0.0
        %1587 = vmatprep.subr.mxu0 0.0
        %1588 = vmatpush1.msra.mxu0 0.0
        %1589 = vmatprep.subr.mxu0 0.0
        %1590 = vmatpush1.msra.mxu0 0.0
        %1591 = vmatprep.subr.mxu0 0.0
        %1592 = vmatpush1.msra.mxu0 0.0
        %1593 = vmatprep.subr.mxu0 0.0
        %1594 = vmatpush1.msra.mxu0 0.0
        %1595 = vmatprep.subr.mxu0 0.0
        %1596 = vmatpush1.msra.mxu0 0.0
        %1597 = vmatprep.subr.mxu0 0.0
        %1598 = vmatpush1.msra.mxu0 0.0
        %1599 = vmatprep.subr.mxu0 0.0
        %1600 = vmatpush1.msra.mxu0 0.0
        %1601 = vmatprep.subr.mxu0 0.0
        %1602 = vmatpush1.msra.mxu0 0.0
        %1603 = vmatprep.subr.mxu0 0.0
        %1604 = vmatpush1.msra.mxu0 0.0
        %1605 = vmatprep.subr.mxu0 0.0
        %1606 = vmatpush1.msra.mxu0 0.0
        %1607 = vmatprep.subr.mxu0 0.0
        %1608 = vmatpush1.msra.mxu0 0.0
        %1609 = vmatprep.subr.mxu0 0.0
        %1610 = vmatpush1.msra.mxu0 0.0
        %1611 = vmatprep.subr.mxu0 0.0
        %1612 = vmatpush1.msra.mxu0 0.0
        %1613 = vmatprep.subr.mxu0 0.0
        %1614 = vmatpush1.msra.mxu0 0.0
        %1615 = vmatprep.subr.mxu0 0.0
        %1616 = vmatpush1.msra.mxu0 0.0
        %1617 = vmatprep.subr.mxu0 0.0
        %1618 = vmatpush1.msra.mxu0 0.0
        %1619 = vmatprep.subr.mxu0 0.0
        %1620 = vmatpush1.msra.mxu0 0.0
        %1621 = vmatprep.subr.mxu0 0.0
        %1622 = vmatpush1.msra.mxu0 0.0
        %1623 = vmatprep.subr.mxu0 0.0
        %1624 = vmatpush1.msra.mxu0 0.0
        %1625 = vmatprep.subr.mxu0 0.0
        %1626 = vmatpush1.msra.mxu0 0.0
        %1627 = vmatprep.mubr.f32.mxu0 0.0
        %1628 = vmatmul.mubr.f32.gmra.mrb[0].mxu0 %v1558
        %v1629 = vpop.f32.mrb[0].mxu0
        %v1630 = vadd.f32 0.0, %v1629
        %v1631 = vpop.f32.mrb[0].mxu0
        %1632 = vmatprep.mubr.f32.mxu0 0.0
        %1633 = vmatmul.mubr.f32.gmra.mrb[0].mxu0 %v1561
        %v1634 = vpop.f32.mrb[0].mxu0
        %v1635 = vadd.f32 0.0, %v1634
        %v1636 = vpop.f32.mrb[0].mxu0
        %1637 = vdwg.mxu0
        %v1638 = vadd.f32 %v1345, %v1630
        %v1639 = vadd.f32 %v1350, %v1635
        %1640 = vrot.lane.b32.xlu0 %v783, 32
        %v1641 = vpop.permute.xlu0 %1640
        %1642 = vrot.lane.b32.xlu0 %v784, 32
        %v1643 = vpop.permute.xlu0 %1642
        %1644 = vrot.lane.b32.xlu0 %v785, 32
        %v1645 = vpop.permute.xlu0 %1644
        %1646 = vrot.lane.b32.xlu0 %v786, 32
        %v1647 = vpop.permute.xlu0 %1646
        %v1648 = vsel %vm789, %v1641, 0
        %v1650 = vsel %vm789, %v1643, 0
        %v1652 = vsel %vm789, %v1645, 0
        %v1654 = vsel %vm789, %v1647, 0
        %1656 = vmatprep.subr.mxu0 0.0
        %1657 = vmatpush1.xpose.msra.mxu0 %v1652
        %1658 = vmatprep.subr.mxu0 0.0
        %1659 = vmatpush1.xpose.msra.mxu0 %v1654
        %1660 = vmatprep.subr.mxu0 0.0
        %1661 = vmatpush1.xpose.msra.mxu0 0.0
        %1662 = vmatprep.subr.mxu0 0.0
        %1663 = vmatpush1.xpose.msra.mxu0 0.0
        %1664 = vmatprep.subr.mxu0 0.0
        %1665 = vmatpush1.xpose.msra.mxu0 0.0
        %1666 = vmatprep.subr.mxu0 0.0
        %1667 = vmatpush1.xpose.msra.mxu0 0.0
        %1668 = vmatprep.subr.mxu0 0.0
        %1669 = vmatpush1.xpose.msra.mxu0 0.0
        %1670 = vmatprep.subr.mxu0 0.0
        %1671 = vmatpush1.xpose.msra.mxu0 0.0
        %1672 = vmatprep.subr.mxu0 0.0
        %1673 = vmatpush1.xpose.msra.mxu0 0.0
        %1674 = vmatprep.subr.mxu0 0.0
        %1675 = vmatpush1.xpose.msra.mxu0 0.0
        %1676 = vmatprep.subr.mxu0 0.0
        %1677 = vmatpush1.xpose.msra.mxu0 0.0
        %1678 = vmatprep.subr.mxu0 0.0
        %1679 = vmatpush1.xpose.msra.mxu0 0.0
        %1680 = vmatprep.subr.mxu0 0.0
        %1681 = vmatpush1.xpose.msra.mxu0 0.0
        %1682 = vmatprep.subr.mxu0 0.0
        %1683 = vmatpush1.xpose.msra.mxu0 0.0
        %1684 = vmatprep.subr.mxu0 0.0
        %1685 = vmatpush1.xpose.msra.mxu0 0.0
        %1686 = vmatprep.subr.mxu0 0.0
        %1687 = vmatpush1.xpose.msra.mxu0 0.0
        %1688 = vmatprep.subr.mxu0 0.0
        %1689 = vmatpush1.xpose.msra.mxu0 0.0
        %1690 = vmatprep.subr.mxu0 0.0
        %1691 = vmatpush1.xpose.msra.mxu0 0.0
        %1692 = vmatprep.subr.mxu0 0.0
        %1693 = vmatpush1.xpose.msra.mxu0 0.0
        %1694 = vmatprep.subr.mxu0 0.0
        %1695 = vmatpush1.xpose.msra.mxu0 0.0
        %1696 = vmatprep.subr.mxu0 0.0
        %1697 = vmatpush1.xpose.msra.mxu0 0.0
        %1698 = vmatprep.subr.mxu0 0.0
        %1699 = vmatpush1.xpose.msra.mxu0 0.0
        %1700 = vmatprep.subr.mxu0 0.0
        %1701 = vmatpush1.xpose.msra.mxu0 0.0
        %1702 = vmatprep.subr.mxu0 0.0
        %1703 = vmatpush1.xpose.msra.mxu0 0.0
        %1704 = vmatprep.subr.mxu0 0.0
        %1705 = vmatpush1.xpose.msra.mxu0 0.0
        %1706 = vmatprep.subr.mxu0 0.0
        %1707 = vmatpush1.xpose.msra.mxu0 0.0
        %1708 = vmatprep.subr.mxu0 0.0
        %1709 = vmatpush1.xpose.msra.mxu0 0.0
        %1710 = vmatprep.subr.mxu0 0.0
        %1711 = vmatpush1.xpose.msra.mxu0 0.0
        %1712 = vmatprep.subr.mxu0 0.0
        %1713 = vmatpush1.xpose.msra.mxu0 0.0
        %1714 = vmatprep.subr.mxu0 0.0
        %1715 = vmatpush1.xpose.msra.mxu0 0.0
        %1716 = vmatprep.subr.mxu0 0.0
        %1717 = vmatpush1.xpose.msra.mxu0 0.0
        %1718 = vmatprep.subr.mxu0 0.0
        %1719 = vmatpush1.xpose.msra.mxu0 0.0
        %1720 = vmatprep.mubr.f32.mxu0 0.0
        %1721 = vmatmul.mubr.f32.gmra.mrb[0].mxu0 %v1648
        %v1722 = vpop.f32.mrb[0].mxu0
        %v1723 = vadd.f32 0.0, %v1722
        %v1724 = vpop.f32.mrb[0].mxu0
        %1725 = vmatprep.mubr.f32.mxu0 0.0
        %1726 = vmatmul.mubr.f32.gmra.mrb[0].mxu0 %v1650
        %v1727 = vpop.f32.mrb[0].mxu0
        %v1728 = vadd.f32 0.0, %v1727
        %v1729 = vpop.f32.mrb[0].mxu0
        %1730 = vdwg.mxu0
        %v1731 = vsel %vm877, %v1723, -inf
        %1732 = vmax.xlane.f32.xlu0 %v1731
        %v1733 = vpop.xlane.xlu0 %1732
        %v1734 = vsel %vm877, %v1728, -inf
        %1735 = vmax.xlane.f32.xlu0 %v1734
        %v1736 = vpop.xlane.xlu0 %1735
        %v1737 = vsub.f32 %v1723, %v1733
        %v1738 = vsub.f32 %v1728, %v1736
        %v1739 = vmul.f32 %v1737, 1.442695
        %v1740 = vpow.pop %v1739
        %v1741 = vmul.f32 %v1738, 1.442695
        %v1742 = vpow.pop %v1741
        %v1743 = vsel %vm877, %v1740, 0.0
        %1744 = vadd.xlane.f32.xlu0 %v1743
        %v1745 = vpop.xlane.xlu0 %1744
        %v1746 = vsel %vm877, %v1742, 0.0
        %1747 = vadd.xlane.f32.xlu0 %v1746
        %v1748 = vpop.xlane.xlu0 %1747
        %v1749 = vrcp.pop %v1745
        %v1750 = vmul.f32 %v1740, %v1749
        %v1751 = vrcp.pop %v1748
        %v1752 = vmul.f32 %v1742, %v1751
        %1753 = vrot.lane.b32.xlu0 %v787, 32
        %v1754 = vpop.permute.xlu0 %1753
        %1755 = vrot.lane.b32.xlu0 %v788, 32
        %v1756 = vpop.permute.xlu0 %1755
        %v1760 = vsel %vm877, %v1750, 0
        %v1763 = vsel %vm877, %v1752, 0
        %1765 = vmatprep.subr.mxu0 0.0
        %1766 = vmatpush1.msra.mxu0 %v1754
        %1767 = vmatprep.subr.mxu0 0.0
        %1768 = vmatpush1.msra.mxu0 %v1756
        %1769 = vmatprep.subr.mxu0 0.0
        %1770 = vmatpush1.msra.mxu0 0.0
        %1771 = vmatprep.subr.mxu0 0.0
        %1772 = vmatpush1.msra.mxu0 0.0
        %1773 = vmatprep.subr.mxu0 0.0
        %1774 = vmatpush1.msra.mxu0 0.0
        %1775 = vmatprep.subr.mxu0 0.0
        %1776 = vmatpush1.msra.mxu0 0.0
        %1777 = vmatprep.subr.mxu0 0.0
        %1778 = vmatpush1.msra.mxu0 0.0
        %1779 = vmatprep.subr.mxu0 0.0
        %1780 = vmatpush1.msra.mxu0 0.0
        %1781 = vmatprep.subr.mxu0 0.0
        %1782 = vmatpush1.msra.mxu0 0.0
        %1783 = vmatprep.subr.mxu0 0.0
        %1784 = vmatpush1.msra.mxu0 0.0
        %1785 = vmatprep.subr.mxu0 0.0
        %1786 = vmatpush1.msra.mxu0 0.0
        %1787 = vmatprep.subr.mxu0 0.0
        %1788 = vmatpush1.msra.mxu0 0.0
        %1789 = vmatprep.subr.mxu0 0.0
        %1790 = vmatpush1.msra.mxu0 0.0
        %1791 = vmatprep.subr.mxu0 0.0
        %1792 = vmatpush1.msra.mxu0 0.0
        %1793 = vmatprep.subr.mxu0 0.0
        %1794 = vmatpush1.msra.mxu0 0.0
        %1795 = vmatprep.subr.mxu0 0.0
        %1796 = vmatpush1.msra.mxu0 0.0
        %1797 = vmatprep.subr.mxu0 0.0
        %1798 = vmatpush1.msra.mxu0 0.0
        %1799 = vmatprep.subr.mxu0 0.0
        %1800 = vmatpush1.msra.mxu0 0.0
        %1801 = vmatprep.subr.mxu0 0.0
        %1802 = vmatpush1.msra.mxu0 0.0
        %1803 = vmatprep.subr.mxu0 0.0
        %1804 = vmatpush1.msra.mxu0 0.0
        %1805 = vmatprep.subr.mxu0 0.0
        %1806 = vmatpush1.msra.mxu0 0.0
        %1807 = vmatprep.subr.mxu0 0.0
        %1808 = vmatpush1.msra.mxu0 0.0
        %1809 = vmatprep.subr.mxu0 0.0
        %1810 = vmatpush1.msra.mxu0 0.0
        %1811 = vmatprep.subr.mxu0 0.0
        %1812 = vmatpush1.msra.mxu0 0.0
        %1813 = vmatprep.subr.mxu0 0.0
        %1814 = vmatpush1.msra.mxu0 0.0
        %1815 = vmatprep.subr.mxu0 0.0
        %1816 = vmatpush1.msra.mxu0 0.0
        %1817 = vmatprep.subr.mxu0 0.0
        %1818 = vmatpush1.msra.mxu0 0.0
        %1819 = vmatprep.subr.mxu0 0.0
        %1820 = vmatpush1.msra.mxu0 0.0
        %1821 = vmatprep.subr.mxu0 0.0
        %1822 = vmatpush1.msra.mxu0 0.0
        %1823 = vmatprep.subr.mxu0 0.0
        %1824 = vmatpush1.msra.mxu0 0.0
        %1825 = vmatprep.subr.mxu0 0.0
        %1826 = vmatpush1.msra.mxu0 0.0
        %1827 = vmatprep.subr.mxu0 0.0
        %1828 = vmatpush1.msra.mxu0 0.0
        %1829 = vmatprep.mubr.f32.mxu0 0.0
        %1830 = vmatmul.mubr.f32.gmra.mrb[0].mxu0 %v1760
        %v1831 = vpop.f32.mrb[0].mxu0
        %v1832 = vadd.f32 0.0, %v1831
        %v1833 = vpop.f32.mrb[0].mxu0
        %1834 = vmatprep.mubr.f32.mxu0 0.0
        %1835 = vmatmul.mubr.f32.gmra.mrb[0].mxu0 %v1763
        %v1836 = vpop.f32.mrb[0].mxu0
        %v1837 = vadd.f32 0.0, %v1836
        %v1838 = vpop.f32.mrb[0].mxu0
        %1839 = vdwg.mxu0
        %v1840 = vld [vmem:[#allocation9 + $0x60] sm:$0xff]
        %v1841 = vld [vmem:[#allocation9 + $0x68] sm:$0xff]
        %v1842 = vld [vmem:[#allocation9 + $0x70] sm:$0xff]
        %v1843 = vld [vmem:[#allocation9 + $0x78] sm:$0xff]
        %v1845 = vsel %vm789, %v1832, 0
        %v1848 = vsel %vm789, %v1837, 0
        %1850 = vmatprep.subr.mxu0 0.0
        %1851 = vmatpush1.msra.mxu0 %v1840
        %1852 = vmatprep.subr.mxu0 0.0
        %1853 = vmatpush1.msra.mxu0 %v1841
        %1854 = vmatprep.subr.mxu0 0.0
        %1855 = vmatpush1.msra.mxu0 %v1842
        %1856 = vmatprep.subr.mxu0 0.0
        %1857 = vmatpush1.msra.mxu0 %v1843
        %1858 = vmatprep.subr.mxu0 0.0
        %1859 = vmatpush1.msra.mxu0 0.0
        %1860 = vmatprep.subr.mxu0 0.0
        %1861 = vmatpush1.msra.mxu0 0.0
        %1862 = vmatprep.subr.mxu0 0.0
        %1863 = vmatpush1.msra.mxu0 0.0
        %1864 = vmatprep.subr.mxu0 0.0
        %1865 = vmatpush1.msra.mxu0 0.0
        %1866 = vmatprep.subr.mxu0 0.0
        %1867 = vmatpush1.msra.mxu0 0.0
        %1868 = vmatprep.subr.mxu0 0.0
        %1869 = vmatpush1.msra.mxu0 0.0
        %1870 = vmatprep.subr.mxu0 0.0
        %1871 = vmatpush1.msra.mxu0 0.0
        %1872 = vmatprep.subr.mxu0 0.0
        %1873 = vmatpush1.msra.mxu0 0.0
        %1874 = vmatprep.subr.mxu0 0.0
        %1875 = vmatpush1.msra.mxu0 0.0
        %1876 = vmatprep.subr.mxu0 0.0
        %1877 = vmatpush1.msra.mxu0 0.0
        %1878 = vmatprep.subr.mxu0 0.0
        %1879 = vmatpush1.msra.mxu0 0.0
        %1880 = vmatprep.subr.mxu0 0.0
        %1881 = vmatpush1.msra.mxu0 0.0
        %1882 = vmatprep.subr.mxu0 0.0
        %1883 = vmatpush1.msra.mxu0 0.0
        %1884 = vmatprep.subr.mxu0 0.0
        %1885 = vmatpush1.msra.mxu0 0.0
        %1886 = vmatprep.subr.mxu0 0.0
        %1887 = vmatpush1.msra.mxu0 0.0
        %1888 = vmatprep.subr.mxu0 0.0
        %1889 = vmatpush1.msra.mxu0 0.0
        %1890 = vmatprep.subr.mxu0 0.0
        %1891 = vmatpush1.msra.mxu0 0.0
        %1892 = vmatprep.subr.mxu0 0.0
        %1893 = vmatpush1.msra.mxu0 0.0
        %1894 = vmatprep.subr.mxu0 0.0
        %1895 = vmatpush1.msra.mxu0 0.0
        %1896 = vmatprep.subr.mxu0 0.0
        %1897 = vmatpush1.msra.mxu0 0.0
        %1898 = vmatprep.subr.mxu0 0.0
        %1899 = vmatpush1.msra.mxu0 0.0
        %1900 = vmatprep.subr.mxu0 0.0
        %1901 = vmatpush1.msra.mxu0 0.0
        %1902 = vmatprep.subr.mxu0 0.0
        %1903 = vmatpush1.msra.mxu0 0.0
        %1904 = vmatprep.subr.mxu0 0.0
        %1905 = vmatpush1.msra.mxu0 0.0
        %1906 = vmatprep.subr.mxu0 0.0
        %1907 = vmatpush1.msra.mxu0 0.0
        %1908 = vmatprep.subr.mxu0 0.0
        %1909 = vmatpush1.msra.mxu0 0.0
        %1910 = vmatprep.subr.mxu0 0.0
        %1911 = vmatpush1.msra.mxu0 0.0
        %1912 = vmatprep.subr.mxu0 0.0
        %1913 = vmatpush1.msra.mxu0 0.0
        %1914 = vmatprep.mubr.f32.mxu0 0.0
        %1915 = vmatmul.mubr.f32.gmra.mrb[0].mxu0 %v1845
        %v1916 = vpop.f32.mrb[0].mxu0
        %v1917 = vadd.f32 0.0, %v1916
        %v1918 = vpop.f32.mrb[0].mxu0
        %1919 = vmatprep.mubr.f32.mxu0 0.0
        %1920 = vmatmul.mubr.f32.gmra.mrb[0].mxu0 %v1848
        %v1921 = vpop.f32.mrb[0].mxu0
        %v1922 = vadd.f32 0.0, %v1921
        %v1923 = vpop.f32.mrb[0].mxu0
        %1924 = vdwg.mxu0
        %v1925 = vadd.f32 %v1638, %v1917
        %v1926 = vadd.f32 %v1639, %v1922
        %v1927 = vld [vmem:[%s6] sm:$0x1]
        %v1929 = vlaneseq
        %v1930 = vshrl.u32 %v1929, 7
        %v1931 = vsub.s32 0, %v1930
        %v1932 = vrot.slane %v1927, %v1931
        %v1934 = vadd.f32 %v1925, %v1932
        %v1935 = vadd.f32 %v1926, %v1932
        %v1936 = vld [vmem:[%s458] sm:$0xff]
        %v1937 = vld [vmem:[%s458 + $0x8] sm:$0xff]
        %v1938 = vadd.f32 %v1934, %v1936
        %v1939 = vadd.f32 %v1935, %v1937
        %1940 = vadd.xlane.f32.xlu0 %v1938
        %v1941 = vpop.xlane.xlu0 %1940
        %1942 = vadd.xlane.f32.xlu0 %v1939
        %v1943 = vpop.xlane.xlu0 %1942
        %v1944 = vmul.f32 %v1941, %v523
        %v1945 = vmul.f32 %v1943, %v523
        %v1946 = vsub.f32 %v1938, %v1944
        %v1947 = vsub.f32 %v1939, %v1945
        %v1948 = vmul.f32 %v1946, %v1946
        %v1949 = vmul.f32 %v1947, %v1947
        %1950 = vadd.xlane.f32.xlu0 %v1948
        %v1951 = vpop.xlane.xlu0 %1950
        %1952 = vadd.xlane.f32.xlu0 %v1949
        %v1953 = vpop.xlane.xlu0 %1952
        %v1954 = vmul.f32 %v1951, %v523
        %v1955 = vmul.f32 %v1953, %v523
        %v1956 = vadd.f32 %v1954, 1e-05
        %v1957 = vadd.f32 %v1955, 1e-05
        %v1958 = vrsqrt.pop %v1956
        %v1959 = vrsqrt.pop %v1957
        %v1960 = vmul.f32 %v1946, %v1958
        %v1961 = vmul.f32 %v1947, %v1959
        %v1962 = vld [vmem:[%s7] sm:$0x1]
        %v1964 = vlaneseq
        %v1965 = vshrl.u32 %v1964, 7
        %v1966 = vsub.s32 0, %v1965
        %v1967 = vrot.slane %v1962, %v1966
        %v1969 = vmul.f32 %v1960, %v1967
        %v1970 = vmul.f32 %v1961, %v1967
        %v1971 = vld [vmem:[%s8] sm:$0x1]
        %v1973 = vlaneseq
        %v1974 = vshrl.u32 %v1973, 7
        %v1975 = vsub.s32 0, %v1974
        %v1976 = vrot.slane %v1971, %v1975
        %v1978 = vadd.f32 %v1969, %v1976
        %v1979 = vadd.f32 %v1970, %v1976
        %1980 = vst [vmem:[#allocation3] sm:$0xff] %v1978
        %1981 = vst [vmem:[#allocation3 + $0x8] sm:$0xff] %v1979
        %v1982 = vld [vmem:[#allocation3] sm:$0xff]
        %v1983 = vld [vmem:[#allocation3 + $0x8] sm:$0xff]
        %v1984 = vld [vmem:[#allocation10] sm:$0xff]
        %v1985 = vld [vmem:[#allocation10 + $0x8] sm:$0xff]
        %v1986 = vld [vmem:[#allocation10 + $0x10] sm:$0xff]
        %v1987 = vld [vmem:[#allocation10 + $0x18] sm:$0xff]
        %v1988 = vld [vmem:[#allocation10 + $0x20] sm:$0xff]
        %v1989 = vld [vmem:[#allocation10 + $0x28] sm:$0xff]
        %v1990 = vld [vmem:[#allocation10 + $0x30] sm:$0xff]
        %v1991 = vld [vmem:[#allocation10 + $0x38] sm:$0xff]
        %v1992 = vld [vmem:[#allocation10 + $0x40] sm:$0xff]
        %v1993 = vld [vmem:[#allocation10 + $0x48] sm:$0xff]
        %v1994 = vld [vmem:[#allocation10 + $0x50] sm:$0xff]
        %v1995 = vld [vmem:[#allocation10 + $0x58] sm:$0xff]
        %v1996 = vld [vmem:[#allocation10 + $0x60] sm:$0xff]
        %v1997 = vld [vmem:[#allocation10 + $0x68] sm:$0xff]
        %v1998 = vld [vmem:[#allocation10 + $0x70] sm:$0xff]
        %v1999 = vld [vmem:[#allocation10 + $0x78] sm:$0xff]
        %v2000 = vld [vmem:[#allocation10 + $0x80] sm:$0xff]
        %v2001 = vld [vmem:[#allocation10 + $0x88] sm:$0xff]
        %v2002 = vld [vmem:[#allocation10 + $0x90] sm:$0xff]
        %v2003 = vld [vmem:[#allocation10 + $0x98] sm:$0xff]
        %v2004 = vld [vmem:[#allocation10 + $0xa0] sm:$0xff]
        %v2005 = vld [vmem:[#allocation10 + $0xa8] sm:$0xff]
        %v2006 = vld [vmem:[#allocation10 + $0xb0] sm:$0xff]
        %v2007 = vld [vmem:[#allocation10 + $0xb8] sm:$0xff]
        %v2008 = vld [vmem:[#allocation10 + $0xc0] sm:$0xff]
        %v2009 = vld [vmem:[#allocation10 + $0xc8] sm:$0xff]
        %v2010 = vld [vmem:[#allocation10 + $0xd0] sm:$0xff]
        %v2011 = vld [vmem:[#allocation10 + $0xd8] sm:$0xff]
        %v2012 = vld [vmem:[#allocation10 + $0xe0] sm:$0xff]
        %v2013 = vld [vmem:[#allocation10 + $0xe8] sm:$0xff]
        %v2014 = vld [vmem:[#allocation10 + $0xf0] sm:$0xff]
        %v2015 = vld [vmem:[#allocation10 + $0xf8] sm:$0xff]
        %v2016 = vld [vmem:[%s10] sm:$0x3]
        %v2018 = vlaneseq
        %v2019 = vshrl.u32 %v2018, 7
        %v2020 = vsub.s32 0, %v2019
        %v2021 = vrot.slane %v2016, %v2020
        %v2022 = vlaneseq
        %v2023 = vshrl.u32 %v2022, 7
        %v2024 = vsub.s32 1, %v2023
        %v2025 = vrot.slane %v2016, %v2024
        %2028 = vmatprep.subr.mxu0 %v1985
        %2029 = vmatpush1.msra.mxu0 %v1984
        %2030 = vmatprep.subr.mxu0 %v1987
        %2031 = vmatpush1.msra.mxu0 %v1986
        %2032 = vmatprep.subr.mxu0 %v1989
        %2033 = vmatpush1.msra.mxu0 %v1988
        %2034 = vmatprep.subr.mxu0 %v1991
        %2035 = vmatpush1.msra.mxu0 %v1990
        %2036 = vmatprep.subr.mxu0 %v1993
        %2037 = vmatpush1.msra.mxu0 %v1992
        %2038 = vmatprep.subr.mxu0 %v1995
        %2039 = vmatpush1.msra.mxu0 %v1994
        %2040 = vmatprep.subr.mxu0 %v1997
        %2041 = vmatpush1.msra.mxu0 %v1996
        %2042 = vmatprep.subr.mxu0 %v1999
        %2043 = vmatpush1.msra.mxu0 %v1998
        %2044 = vmatprep.subr.mxu0 %v2001
        %2045 = vmatpush1.msra.mxu0 %v2000
        %2046 = vmatprep.subr.mxu0 %v2003
        %2047 = vmatpush1.msra.mxu0 %v2002
        %2048 = vmatprep.subr.mxu0 %v2005
        %2049 = vmatpush1.msra.mxu0 %v2004
        %2050 = vmatprep.subr.mxu0 %v2007
        %2051 = vmatpush1.msra.mxu0 %v2006
        %2052 = vmatprep.subr.mxu0 %v2009
        %2053 = vmatpush1.msra.mxu0 %v2008
        %2054 = vmatprep.subr.mxu0 %v2011
        %2055 = vmatpush1.msra.mxu0 %v2010
        %2056 = vmatprep.subr.mxu0 %v2013
        %2057 = vmatpush1.msra.mxu0 %v2012
        %2058 = vmatprep.subr.mxu0 %v2015
        %2059 = vmatpush1.msra.mxu0 %v2014
        %2060 = vmatprep.subr.mxu0 0.0
        %2061 = vmatpush1.msra.mxu0 0.0
        %2062 = vmatprep.subr.mxu0 0.0
        %2063 = vmatpush1.msra.mxu0 0.0
        %2064 = vmatprep.subr.mxu0 0.0
        %2065 = vmatpush1.msra.mxu0 0.0
        %2066 = vmatprep.subr.mxu0 0.0
        %2067 = vmatpush1.msra.mxu0 0.0
        %2068 = vmatprep.subr.mxu0 0.0
        %2069 = vmatpush1.msra.mxu0 0.0
        %2070 = vmatprep.subr.mxu0 0.0
        %2071 = vmatpush1.msra.mxu0 0.0
        %2072 = vmatprep.subr.mxu0 0.0
        %2073 = vmatpush1.msra.mxu0 0.0
        %2074 = vmatprep.subr.mxu0 0.0
        %2075 = vmatpush1.msra.mxu0 0.0
        %2076 = vmatprep.subr.mxu0 0.0
        %2077 = vmatpush1.msra.mxu0 0.0
        %2078 = vmatprep.subr.mxu0 0.0
        %2079 = vmatpush1.msra.mxu0 0.0
        %2080 = vmatprep.subr.mxu0 0.0
        %2081 = vmatpush1.msra.mxu0 0.0
        %2082 = vmatprep.subr.mxu0 0.0
        %2083 = vmatpush1.msra.mxu0 0.0
        %2084 = vmatprep.subr.mxu0 0.0
        %2085 = vmatpush1.msra.mxu0 0.0
        %2086 = vmatprep.subr.mxu0 0.0
        %2087 = vmatpush1.msra.mxu0 0.0
        %2088 = vmatprep.subr.mxu0 0.0
        %2089 = vmatpush1.msra.mxu0 0.0
        %2090 = vmatprep.subr.mxu0 0.0
        %2091 = vmatpush1.msra.mxu0 0.0
        %2092 = vmatprep.mubr.f32.mxu0 0.0
        %2093 = vmatmul.mubr.f32.gmra.mrb[0].mxu0 %v1982
        %v2094 = vpop.f32.mrb[0].mxu0
        %v2095 = vadd.f32 %v2021, %v2094
        %v2096 = vpop.f32.mrb[0].mxu0
        %v2097 = vadd.f32 %v2025, %v2096
        %2098 = vmatprep.mubr.f32.mxu0 0.0
        %2099 = vmatmul.mubr.f32.gmra.mrb[0].mxu0 %v1983
        %v2100 = vpop.f32.mrb[0].mxu0
        %v2101 = vadd.f32 %v2021, %v2100
        %v2102 = vpop.f32.mrb[0].mxu0
        %v2103 = vadd.f32 %v2025, %v2102
        %2104 = vdwg.mxu0
        %v2105 = vmax.f32 %v2095, 0.0
        %v2106 = vmax.f32 %v2097, 0.0
        %v2107 = vmax.f32 %v2101, 0.0
        %v2108 = vmax.f32 %v2103, 0.0
        %v2109 = vld [vmem:[#allocation12] sm:$0xff]
        %v2110 = vld [vmem:[#allocation12 + $0x8] sm:$0xff]
        %v2111 = vld [vmem:[#allocation12 + $0x10] sm:$0xff]
        %v2112 = vld [vmem:[#allocation12 + $0x18] sm:$0xff]
        %v2113 = vld [vmem:[#allocation12 + $0x20] sm:$0xff]
        %v2114 = vld [vmem:[#allocation12 + $0x28] sm:$0xff]
        %v2115 = vld [vmem:[#allocation12 + $0x30] sm:$0xff]
        %v2116 = vld [vmem:[#allocation12 + $0x38] sm:$0xff]
        %v2117 = vld [vmem:[#allocation12 + $0x40] sm:$0xff]
        %v2118 = vld [vmem:[#allocation12 + $0x48] sm:$0xff]
        %v2119 = vld [vmem:[#allocation12 + $0x50] sm:$0xff]
        %v2120 = vld [vmem:[#allocation12 + $0x58] sm:$0xff]
        %v2121 = vld [vmem:[#allocation12 + $0x60] sm:$0xff]
        %v2122 = vld [vmem:[#allocation12 + $0x68] sm:$0xff]
        %v2123 = vld [vmem:[#allocation12 + $0x70] sm:$0xff]
        %v2124 = vld [vmem:[#allocation12 + $0x78] sm:$0xff]
        %v2125 = vld [vmem:[#allocation12 + $0x80] sm:$0xff]
        %v2126 = vld [vmem:[#allocation12 + $0x88] sm:$0xff]
        %v2127 = vld [vmem:[#allocation12 + $0x90] sm:$0xff]
        %v2128 = vld [vmem:[#allocation12 + $0x98] sm:$0xff]
        %v2129 = vld [vmem:[#allocation12 + $0xa0] sm:$0xff]
        %v2130 = vld [vmem:[#allocation12 + $0xa8] sm:$0xff]
        %v2131 = vld [vmem:[#allocation12 + $0xb0] sm:$0xff]
        %v2132 = vld [vmem:[#allocation12 + $0xb8] sm:$0xff]
        %v2133 = vld [vmem:[#allocation12 + $0xc0] sm:$0xff]
        %v2134 = vld [vmem:[#allocation12 + $0xc8] sm:$0xff]
        %v2135 = vld [vmem:[#allocation12 + $0xd0] sm:$0xff]
        %v2136 = vld [vmem:[#allocation12 + $0xd8] sm:$0xff]
        %v2137 = vld [vmem:[#allocation12 + $0xe0] sm:$0xff]
        %v2138 = vld [vmem:[#allocation12 + $0xe8] sm:$0xff]
        %v2139 = vld [vmem:[#allocation12 + $0xf0] sm:$0xff]
        %v2140 = vld [vmem:[#allocation12 + $0xf8] sm:$0xff]
        %v2141 = vld [vmem:[%s12] sm:$0x1]
        %v2143 = vlaneseq
        %v2144 = vshrl.u32 %v2143, 7
        %v2145 = vsub.s32 0, %v2144
        %v2146 = vrot.slane %v2141, %v2145
        %2148 = vmatprep.subr.mxu0 0.0
        %2149 = vmatpush1.msra.mxu0 %v2109
        %2150 = vmatprep.subr.mxu0 0.0
        %2151 = vmatpush1.msra.mxu0 %v2110
        %2152 = vmatprep.subr.mxu0 0.0
        %2153 = vmatpush1.msra.mxu0 %v2111
        %2154 = vmatprep.subr.mxu0 0.0
        %2155 = vmatpush1.msra.mxu0 %v2112
        %2156 = vmatprep.subr.mxu0 0.0
        %2157 = vmatpush1.msra.mxu0 %v2113
        %2158 = vmatprep.subr.mxu0 0.0
        %2159 = vmatpush1.msra.mxu0 %v2114
        %2160 = vmatprep.subr.mxu0 0.0
        %2161 = vmatpush1.msra.mxu0 %v2115
        %2162 = vmatprep.subr.mxu0 0.0
        %2163 = vmatpush1.msra.mxu0 %v2116
        %2164 = vmatprep.subr.mxu0 0.0
        %2165 = vmatpush1.msra.mxu0 %v2117
        %2166 = vmatprep.subr.mxu0 0.0
        %2167 = vmatpush1.msra.mxu0 %v2118
        %2168 = vmatprep.subr.mxu0 0.0
        %2169 = vmatpush1.msra.mxu0 %v2119
        %2170 = vmatprep.subr.mxu0 0.0
        %2171 = vmatpush1.msra.mxu0 %v2120
        %2172 = vmatprep.subr.mxu0 0.0
        %2173 = vmatpush1.msra.mxu0 %v2121
        %2174 = vmatprep.subr.mxu0 0.0
        %2175 = vmatpush1.msra.mxu0 %v2122
        %2176 = vmatprep.subr.mxu0 0.0
        %2177 = vmatpush1.msra.mxu0 %v2123
        %2178 = vmatprep.subr.mxu0 0.0
        %2179 = vmatpush1.msra.mxu0 %v2124
        %2180 = vmatprep.subr.mxu0 0.0
        %2181 = vmatpush1.msra.mxu0 %v2125
        %2182 = vmatprep.subr.mxu0 0.0
        %2183 = vmatpush1.msra.mxu0 %v2126
        %2184 = vmatprep.subr.mxu0 0.0
        %2185 = vmatpush1.msra.mxu0 %v2127
        %2186 = vmatprep.subr.mxu0 0.0
        %2187 = vmatpush1.msra.mxu0 %v2128
        %2188 = vmatprep.subr.mxu0 0.0
        %2189 = vmatpush1.msra.mxu0 %v2129
        %2190 = vmatprep.subr.mxu0 0.0
        %2191 = vmatpush1.msra.mxu0 %v2130
        %2192 = vmatprep.subr.mxu0 0.0
        %2193 = vmatpush1.msra.mxu0 %v2131
        %2194 = vmatprep.subr.mxu0 0.0
        %2195 = vmatpush1.msra.mxu0 %v2132
        %2196 = vmatprep.subr.mxu0 0.0
        %2197 = vmatpush1.msra.mxu0 %v2133
        %2198 = vmatprep.subr.mxu0 0.0
        %2199 = vmatpush1.msra.mxu0 %v2134
        %2200 = vmatprep.subr.mxu0 0.0
        %2201 = vmatpush1.msra.mxu0 %v2135
        %2202 = vmatprep.subr.mxu0 0.0
        %2203 = vmatpush1.msra.mxu0 %v2136
        %2204 = vmatprep.subr.mxu0 0.0
        %2205 = vmatpush1.msra.mxu0 %v2137
        %2206 = vmatprep.subr.mxu0 0.0
        %2207 = vmatpush1.msra.mxu0 %v2138
        %2208 = vmatprep.subr.mxu0 0.0
        %2209 = vmatpush1.msra.mxu0 %v2139
        %2210 = vmatprep.subr.mxu0 0.0
        %2211 = vmatpush1.msra.mxu0 %v2140
        %2212 = vmatprep.mubr.f32.mxu0 %v2106
        %2213 = vmatmul.mubr.f32.gmra.mrb[0].mxu0 %v2105
        %v2214 = vpop.f32.mrb[0].mxu0
        %v2215 = vadd.f32 %v2146, %v2214
        %v2216 = vpop.f32.mrb[0].mxu0
        %2217 = vmatprep.mubr.f32.mxu0 %v2108
        %2218 = vmatmul.mubr.f32.gmra.mrb[0].mxu0 %v2107
        %v2219 = vpop.f32.mrb[0].mxu0
        %v2220 = vadd.f32 %v2146, %v2219
        %v2221 = vpop.f32.mrb[0].mxu0
        %2222 = vdwg.mxu0
        %2223 = vst [vmem:[%s516] sm:$0xff] %v2215
        %2224 = vst [vmem:[%s516 + $0x8] sm:$0xff] %v2220
        %s2225 = sand.u32 %s318, 1
        %s2226 = scalar_lea.sflag [#allocation6], %s2225
        %s2227 = sand.u32 %s318, 1
        %s2228 = smul.addr %s2227, 16
        %s2229 = scalar_lea.vmem [#allocation13], %s2228
        // Predicated region
        $region93: #{tpu_custom_call.1} parent=71 // pred_check
          %p2230 = pneg %p328
        $region94: #{tpu_custom_call.1} parent=71 // pred_check_branch
          %2232 = sbr.rel (%p2230) target = $region96
        $region95: #{tpu_custom_call.1} parent=71 // pred_region
          %s2234 = ssub.s32 256, 256
          %2235 = vsyncadd %s2226, %s2234
          %s2236 = smul.addr %s32, 2
          %s2237 = smul.addr %s2236, 128
          %s2238 = scalar_lea.hbm %s13, %s2237
          %s2239 = sshll.u32 %s2229, 4
          %s2240 = int_to_ptr.vmem [resolvable:$true] %s2239
          %2245 = dma.vmem_to_hbm [thread:$0]  %s2240, 256, %s2238, %s2226, 128, 128, 8
        $region96: #{tpu_custom_call.1} parent=71 // pred_fallthru
          _
      $region72: #{tpu_custom_call.1} parent=5 // pred_fallthru
        _
      %p2246 = scmp.le.s32.totalorder 2, %s27
      // Predicated region
      $region97: #{tpu_custom_call.1} parent=5 // pred_check
        %p2247 = pneg %p2246
      $region98: #{tpu_custom_call.1} parent=5 // pred_check_branch
        %2249 = sbr.rel (%p2247) target = $region100
      $region99: #{tpu_custom_call.1} parent=5 // pred_region
        %s2250 = ssub.s32 %s27, 2
        // Predicated region
        $region101: #{tpu_custom_call.1} parent=99 // pred_check
          %p2251 = pneg %p334
        $region102: #{tpu_custom_call.1} parent=99 // pred_check_branch
          %2253 = sbr.rel (%p2251) target = $region104
        $region103: #{tpu_custom_call.1} parent=99 // pred_region
          %s2254 = sand.u32 %s319, 1
          %s2255 = scalar_lea.sflag [#allocation6], %s2254
          %s2256 = sand.u32 %s319, 1
          %s2257 = smul.addr %s2256, 16
          %s2258 = scalar_lea.vmem [#allocation13], %s2257
          %2259 = dma.done %s2255, 256
        $region104: #{tpu_custom_call.1} parent=99 // pred_fallthru
          _
      $region100: #{tpu_custom_call.1} parent=5 // pred_fallthru
        _
    $region6: #{tpu_custom_call.1} parent=1 // loop_footer
      %s31 = sadd.s32 1, %s27
    $region7: #{tpu_custom_call.1} parent=1 // loop_footer_branch
      %26 = sbr.rel target = $region3
    $region8: #{tpu_custom_call.1} parent=1 // loop_exit
      _
    %2260 = vsyncpa [#allocation5], 1
    %s2261 = scalar_lea.sflag [#allocation5], 1
    %2262 = vsyncpa %s2261, 1
    %2263 = vsyncpa [#allocation8], 1
    %2264 = vsyncpa [#allocation11], 1
    %2265 = vsyncpa [#allocation6], 1
    %s2266 = scalar_lea.sflag [#allocation6], 1
    %2267 = vsyncpa %s2266, 1

</llo_original>
